<compile_context>
chip_gen: v7x
topology: tpu7x:2x2x1
jax: 0.10.0
libtpu: 0.0.40
codegen_flags: <defaults>
</compile_context>

<pallas_src>
import jax
import jax.numpy as jnp
import numpy as np
from jax.experimental import pallas as pl
from jax.experimental.pallas import tpu as pltpu

KH = KW = 5
PAD = (KH - 1) // 2  # = 2


def _choose_batch_per_step(B, slab_rows, target_m=256):
    """Largest divisor of B whose stacked matmul M (= bp * slab_rows) stays <= target_m."""
    bp = 1
    for d in range(1, B + 1):
        if B % d == 0 and d * slab_rows <= target_m:
            bp = d
    # Prefer >= 2 "parallel" grid steps (v7x megacore) if each step keeps M >= 128.
    if bp == B and B % 2 == 0 and (B // 2) * slab_rows >= 128:
        bp = B // 2
    return bp


def _make_kernel(H, W, C, F, bp, compute_dtype):
    assert C == F, "CompetitiveDenseBlock requires in_channels == num_filters"
    S = H + 2 * PAD           # per-element row slab (H image rows + 4 zero pad rows)
    R = bp * S                # stacked matmul M
    WC, WF = W * C, W * F

    def kernel(x_ref, m0_ref, b0_ref, m1_ref, b1_ref, w2_ref, b2_ref,
               alpha_ref, out_ref, pad_ref):
        # x_ref:   (bp, H, W*C) f32 lane-dense feature maps for this batch group
        # mN_ref:  (KH, W*C, W*F) banded 5x5 conv weights (BN folded), compute_dtype
        # bN_ref:  (1, W*F) f32 folded bias (conv bias + BN), tiled per pixel
        # w2_ref:  (W*C, W*F) block-diagonal 1x1 conv weights (BN folded)
        # alpha:   scalar PReLU slope in SMEM
        # pad_ref: (R + 4, W*C) f32 scratch; element b's image rows live at
        #          rows [b*S+4, b*S+4+H); the 4-row bands between/around slabs are zero.
        alpha = alpha_ref[0]

        def prelu(v):
            return jnp.where(v >= 0, v, alpha * v)

        # Zero only the thin 4-row bands (full lane width, unmasked lanes).  Re-done
        # every step: scratch is per-core and the grid axis is "parallel".
        zband = jnp.zeros((2 * PAD, WC), jnp.float32)
        for b in range(bp + 1):
            pad_ref[b * S:b * S + 2 * PAD, :] = zband

        def conv5x5(act, m_ref, b_ref):
            # act: (bp, H, W*C) f32, already PReLU'd.  Write interiors only;
            # the zero bands provide the vertical padding.
            for b in range(bp):
                pad_ref[b * S + 2 * PAD:b * S + 2 * PAD + H, :] = act[b]
            # 5 banded matmuls: M = R, K = W*C = 256, N = W*F = 256.
            acc = jnp.zeros((R, WF), jnp.float32)
            for kh in range(KH):
                lhs = pad_ref[kh:kh + R, :].astype(compute_dtype)
                acc = acc + jnp.dot(lhs, m_ref[kh],
                                    preferred_element_type=jnp.float32)
            # Extract the valid H rows of each element and add the folded bias.
            rows = [acc[b * S + PAD:b * S + PAD + H, :] + b_ref[...]
                    for b in range(bp)]
            return jnp.stack(rows, axis=0)              # (bp, H, W*F)

        x = x_ref[...]                                  # (bp, H, W*C) f32

        # stage 0: PReLU -> conv0(5x5) -> BN1 (folded) -> maxout with x
        x1_bn = conv5x5(prelu(x), m0_ref, b0_ref)
        x1_max = jnp.maximum(x1_bn, x)

        # stage 1: PReLU -> conv1(5x5) -> BN2 (folded) -> maxout with x1_max
        x2_bn = conv5x5(prelu(x1_max), m1_ref, b1_ref)
        x2_max = jnp.maximum(x2_bn, x1_max)

        # stage 2: PReLU -> conv2(1x1, block-diagonal) -> BN3 (folded)
        x2 = prelu(x2_max).astype(compute_dtype).reshape(bp * H, WC)
        out = jnp.dot(x2, w2_ref[...], preferred_element_type=jnp.float32)
        out = out + b2_ref[...]
        out_ref[...] = out.reshape(bp, H, WF).astype(out_ref.dtype)

    return kernel


def competitive_dense_block_pallas(x_nhwc, kp):
    B, H, W, C = x_nhwc.shape
    F = C
    compute_dtype = kp["m0"].dtype
    WC, WF = W * C, W * F

    S = H + 2 * PAD
    bp = _choose_batch_per_step(B, S)
    G = B // bp
    R = bp * S

    x2d = x_nhwc.reshape(B, H, WC)          # lane-dense layout (free reshape in XLA)
    kernel = _make_kernel(H, W, C, F, bp, compute_dtype)

    def const_spec(arr):
        n = arr.ndim
        return pl.BlockSpec(arr.shape, lambda g, _n=n: (0,) * _n)

    in_specs = [
        pl.BlockSpec((bp, H, WC), lambda g: (g, 0, 0)),
        const_spec(kp["m0"]), const_spec(kp["b0"]),
        const_spec(kp["m1"]), const_spec(kp["b1"]),
        const_spec(kp["w2"]), const_spec(kp["b2"]),
        pl.BlockSpec(memory_space=pltpu.MemorySpace.SMEM),   # scalar PReLU alpha
    ]
    out_specs = pl.BlockSpec((bp, H, WF), lambda g: (g, 0, 0))

    # Advisory cost estimate for XLA scheduling around the custom call.
    flops = G * (2 * 2 * KH * R * WC * WF + 2 * bp * H * WC * WF)
    bytes_accessed = (x2d.size * x2d.dtype.itemsize + B * H * WF * 4
                      + sum(int(np.prod(kp[k].shape)) * kp[k].dtype.itemsize
                            for k in ("m0", "b0", "m1", "b1", "w2", "b2")))
    cost = pl.CostEstimate(flops=int(flops), transcendentals=0,
                           bytes_accessed=int(bytes_accessed))

    out2d = pl.pallas_call(
        kernel,
        grid=(G,),
        in_specs=in_specs,
        out_specs=out_specs,
        out_shape=jax.ShapeDtypeStruct((B, H, WF), jnp.float32),
        scratch_shapes=[pltpu.VMEM((R + 2 * PAD, WC), jnp.float32)],
        compiler_params=pltpu.CompilerParams(dimension_semantics=("parallel",)),
        cost_estimate=cost,
    )(x2d, kp["m0"], kp["b0"], kp["m1"], kp["b1"], kp["w2"], kp["b2"], kp["alpha"])

    return out2d.reshape(B, H, W, F)


def prepare_params(p, alpha, W, compute_dtype=jnp.bfloat16):
    """Fold BN into conv weights/biases; build lane-0-anchored banded / block-diag weights."""
    s1 = np.asarray(p["s1"], np.float32); t1 = np.asarray(p["t1"], np.float32)
    s2 = np.asarray(p["s2"], np.float32); t2 = np.asarray(p["t2"], np.float32)
    s3 = np.asarray(p["s3"], np.float32); t3 = np.asarray(p["t3"], np.float32)

    w0 = np.asarray(p["w0_oihw"], np.float32) * s1[:, None, None, None]
    w1 = np.asarray(p["w1_oihw"], np.float32) * s2[:, None, None, None]
    w2 = np.asarray(p["w2_oihw"], np.float32)[:, :, 0, 0] * s3[:, None]    # (F, C)
    b0 = np.asarray(p["b0"], np.float32) * s1 + t1
    b1 = np.asarray(p["b1"], np.float32) * s2 + t2
    b2 = np.asarray(p["b2"], np.float32) * s3 + t3

    def banded(w_oihw_folded):
        F, C, _, _ = w_oihw_folded.shape
        k = np.transpose(w_oihw_folded, (2, 3, 1, 0))      # (KH, KW, C, F)
        m = np.zeros((KH, W * C, W * F), np.float32)
        for kh in range(KH):
            for w in range(W):
                for kw in range(KW):
                    wi = w + kw - PAD                      # input pixel for this tap
                    if 0 <= wi < W:                        # out-of-image taps omitted
                        m[kh, wi * C:(wi + 1) * C, w * F:(w + 1) * F] = k[kh, kw]
        return jnp.asarray(m, compute_dtype)               # (KH, W*C, W*F), K = W*C

    w2_bd = np.kron(np.eye(W, dtype=np.float32), w2.T)     # (W*C, W*F) block diagonal

    def tile_bias(b):
        return jnp.asarray(np.tile(b, W)[None, :], jnp.float32)   # (1, W*F)

    return dict(
        m0=banded(w0), b0=tile_bias(b0),
        m1=banded(w1), b1=tile_bias(b1),
        w2=jnp.asarray(w2_bd, compute_dtype), b2=tile_bias(b2),
        alpha=jnp.full((1,), alpha, jnp.float32),
    )


# ---------------------- pure-JAX reference (NCHW, PyTorch-style) ----------------------
def ref_forward(x_nchw, p, alpha):
    def prelu(v):
        return jnp.where(v >= 0, v, alpha * v)

    def bn(v, scale, bias):
        return v * scale[None, :, None, None] + bias[None, :, None, None]

    def conv(v, w_oihw, b, pad):
        y = jax.lax.conv_general_dilated(
            v, w_oihw, window_strides=(1, 1),
            padding=[(pad, pad), (pad, pad)],
            dimension_numbers=("NCHW", "OIHW", "NCHW"),
            precision=jax.lax.Precision.HIGHEST)
        return y + b[None, :, None, None]

    x0 = prelu(x_nchw)
    x0 = conv(x0, p["w0_oihw"], p["b0"], PAD)
    x1_bn = bn(x0, p["s1"], p["t1"])
    x1_max = jnp.maximum(x1_bn, x_nchw)
    x1 = prelu(x1_max)
    x1 = conv(x1, p["w1_oihw"], p["b1"], PAD)
    x2_bn = bn(x1, p["s2"], p["t2"])
    x2_max = jnp.maximum(x2_bn, x1_max)
    x2 = prelu(x2_max)
    out = conv(x2, p["w2_oihw"], p["b2"], 0)
    out = bn(out, p["s3"], p["t3"])
    return out


if __name__ == "__main__":
    # Small shapes: batch=2, num_filters=num_channels=16, spatial=16x16, 5x5 kernels.
    B, C, H, W = 2, 16, 16, 16
    F = C
    EPS = 1e-5

    key = jax.random.PRNGKey(0)
    kx, kparam = jax.random.split(key)
    x_nchw = jax.random.normal(kx, (B, C, H, W), jnp.float32)

    keys = jax.random.split(kparam, 9)

    def bn_fold(k):
        k1, k2, k3, k4 = jax.random.split(k, 4)
        gamma = jax.random.uniform(k1, (F,), jnp.float32, 0.5, 1.5)
        beta = 0.1 * jax.random.normal(k2, (F,), jnp.float32)
        mean = 0.1 * jax.random.normal(k3, (F,), jnp.float32)
        var = jax.random.uniform(k4, (F,), jnp.float32, 0.5, 1.5)
        scale = gamma / jnp.sqrt(var + EPS)
        bias = beta - mean * scale
        return scale, bias

    w0_oihw = 0.1 * jax.random.normal(keys[0], (F, C, KH, KW), jnp.float32)
    b0 = 0.1 * jax.random.normal(keys[1], (F,), jnp.float32)
    w1_oihw = 0.1 * jax.random.normal(keys[2], (F, F, KH, KW), jnp.float32)
    b1 = 0.1 * jax.random.normal(keys[3], (F,), jnp.float32)
    w2_oihw = 0.1 * jax.random.normal(keys[4], (F, F, 1, 1), jnp.float32)
    b2 = 0.1 * jax.random.normal(keys[5], (F,), jnp.float32)
    s1, t1 = bn_fold(keys[6])
    s2, t2 = bn_fold(keys[7])
    s3, t3 = bn_fold(keys[8])
    alpha = jnp.float32(0.25)  # nn.PReLU() default init (single shared slope)

    ref_params = dict(w0_oihw=w0_oihw, b0=b0, w1_oihw=w1_oihw, b1=b1,
                      w2_oihw=w2_oihw, b2=b2, s1=s1, t1=t1, s2=s2, t2=t2,
                      s3=s3, t3=t3)

    expected = jax.block_until_ready(ref_forward(x_nchw, ref_params, alpha))
    x_nhwc = jnp.transpose(x_nchw, (0, 2, 3, 1))

    # --- main configuration: bf16 matmul operands, f32 accumulation ---
    kp_bf16 = prepare_params(ref_params, alpha, W, jnp.bfloat16)
    out_bf16 = jax.block_until_ready(competitive_dense_block_pallas(x_nhwc, kp_bf16))
    out_bf16_nchw = jnp.transpose(out_bf16, (0, 3, 1, 2))

    # --- f32 matmul operands: sanity check of the fused graph with wider operands ---
    kp_f32 = prepare_params(ref_params, alpha, W, jnp.float32)
    out_f32 = jax.block_until_ready(competitive_dense_block_pallas(x_nhwc, kp_f32))
    out_f32_nchw = jnp.transpose(out_f32, (0, 3, 1, 2))

    assert out_bf16_nchw.shape == (B, F, H, W)
    assert out_f32_nchw.shape == (B, F, H, W)
    # Conservative bounds: structural/layout bugs would produce O(1)+ discrepancies.
    # The f32-operand path is typically ~1e-5 off the HIGHEST-precision reference, but
    # the bound is kept loose to be robust to the MXU's f32-matmul pass configuration;
    # the bf16 path accumulates bf16 operand rounding over two stacked 5x5 convs.
    f32_err = float(jnp.max(jnp.abs(out_f32_nchw - expected)))
    bf16_err = float(jnp.max(jnp.abs(out_bf16_nchw - expected)))
    assert f32_err < 0.15, f32_err
    assert bf16_err < 0.15, bf16_err

    print("KERNEL_OK")
</pallas_src>

<mosaic_0001>
module attributes {stable_mosaic.version = 11 : i64} {
  func.func @kernel(%arg0: i32, %arg1: memref<2x16x256xf32, #tpu.memory_space<vmem>>, %arg2: memref<5x256x256xbf16, #tpu.memory_space<vmem>>, %arg3: memref<1x256xf32, #tpu.memory_space<vmem>>, %arg4: memref<5x256x256xbf16, #tpu.memory_space<vmem>>, %arg5: memref<1x256xf32, #tpu.memory_space<vmem>>, %arg6: memref<256x256xbf16, #tpu.memory_space<vmem>>, %arg7: memref<1x256xf32, #tpu.memory_space<vmem>>, %arg8: memref<1xf32, #tpu.memory_space<smem>>, %arg9: memref<2x16x256xf32, #tpu.memory_space<vmem>>, %arg10: memref<44x256xf32, #tpu.memory_space<vmem>>) attributes {dimension_semantics = [#tpu.dimension_semantics<parallel>], iteration_bounds = array<i64: 1>, scalar_prefetch = 0 : i64, scratch_operands = 1 : i64, tpu.core_type = #tpu.core_type<tc>, window_params = [{transform_indices = @transform_0, window_bounds = array<i64: 2, 16, 256>}, {pipeline_mode = #tpu.pipeline_mode<synchronous>, transform_indices = @transform_1, window_bounds = array<i64: 5, 256, 256>}, {pipeline_mode = #tpu.pipeline_mode<synchronous>, transform_indices = @transform_2, window_bounds = array<i64: 1, 256>}, {pipeline_mode = #tpu.pipeline_mode<synchronous>, transform_indices = @transform_3, window_bounds = array<i64: 5, 256, 256>}, {pipeline_mode = #tpu.pipeline_mode<synchronous>, transform_indices = @transform_4, window_bounds = array<i64: 1, 256>}, {pipeline_mode = #tpu.pipeline_mode<synchronous>, transform_indices = @transform_5, window_bounds = array<i64: 256, 256>}, {pipeline_mode = #tpu.pipeline_mode<synchronous>, transform_indices = @transform_6, window_bounds = array<i64: 1, 256>}, {transform_indices = @transform_7, window_bounds = array<i64: 1>}, {transform_indices = @transform_8, window_bounds = array<i64: 2, 16, 256>}]} {
    %c0 = arith.constant 0 : index
    %0 = memref.load %arg8[%c0] : memref<1xf32, #tpu.memory_space<smem>>
    %cst = arith.constant 0.000000e+00 : f32
    %1 = vector.broadcast %cst : f32 to vector<4x256xf32>
    %c0_0 = arith.constant 0 : index
    %c0_1 = arith.constant 0 : index
    %2 = vector.load %arg10[%c0_0, %c0_1] : memref<44x256xf32, #tpu.memory_space<vmem>>, vector<4x256xf32>
    tpu.vector_store %arg10[%c0_0, %c0_1], %1 {strides = array<i32>} : memref<44x256xf32, #tpu.memory_space<vmem>>, vector<4x256xf32>,
    %c20 = arith.constant 20 : index
    %c0_2 = arith.constant 0 : index
    %3 = vector.load %arg10[%c20, %c0_2] : memref<44x256xf32, #tpu.memory_space<vmem>>, vector<4x256xf32>
    tpu.vector_store %arg10[%c20, %c0_2], %1 {strides = array<i32>} : memref<44x256xf32, #tpu.memory_space<vmem>>, vector<4x256xf32>,
    %c40 = arith.constant 40 : index
    %c0_3 = arith.constant 0 : index
    %4 = vector.load %arg10[%c40, %c0_3] : memref<44x256xf32, #tpu.memory_space<vmem>>, vector<4x256xf32>
    tpu.vector_store %arg10[%c40, %c0_3], %1 {strides = array<i32>} : memref<44x256xf32, #tpu.memory_space<vmem>>, vector<4x256xf32>,
    %c0_4 = arith.constant 0 : index
    %c0_5 = arith.constant 0 : index
    %c0_6 = arith.constant 0 : index
    %5 = vector.load %arg1[%c0_4, %c0_5, %c0_6] : memref<2x16x256xf32, #tpu.memory_space<vmem>>, vector<2x16x256xf32>
    %cst_7 = arith.constant 0.000000e+00 : f32
    %6 = vector.broadcast %cst_7 : f32 to vector<2x16x256xf32>
    %7 = arith.cmpf oge, %5, %6 : vector<2x16x256xf32>
    %8 = vector.broadcast %0 : f32 to vector<2x16x256xf32>
    %9 = arith.mulf %8, %5 : vector<2x16x256xf32>
    %10 = arith.select %7, %5, %9 : vector<2x16x256xi1>, vector<2x16x256xf32>
    %11 = vector.extract_strided_slice %10 {offsets = [0, 0, 0], sizes = [1, 16, 256], strides = [1, 1, 1]} : vector<2x16x256xf32> to vector<1x16x256xf32>
    %12 = vector.shape_cast %11 : vector<1x16x256xf32> to vector<16x256xf32>
    %c4 = arith.constant 4 : index
    %c0_8 = arith.constant 0 : index
    %13 = vector.load %arg10[%c4, %c0_8] : memref<44x256xf32, #tpu.memory_space<vmem>>, vector<16x256xf32>
    tpu.vector_store %arg10[%c4, %c0_8], %12 {strides = array<i32>} : memref<44x256xf32, #tpu.memory_space<vmem>>, vector<16x256xf32>,
    %14 = vector.extract_strided_slice %10 {offsets = [1, 0, 0], sizes = [1, 16, 256], strides = [1, 1, 1]} : vector<2x16x256xf32> to vector<1x16x256xf32>
    %15 = vector.shape_cast %14 : vector<1x16x256xf32> to vector<16x256xf32>
    %c24 = arith.constant 24 : index
    %c0_9 = arith.constant 0 : index
    %16 = vector.load %arg10[%c24, %c0_9] : memref<44x256xf32, #tpu.memory_space<vmem>>, vector<16x256xf32>
    tpu.vector_store %arg10[%c24, %c0_9], %15 {strides = array<i32>} : memref<44x256xf32, #tpu.memory_space<vmem>>, vector<16x256xf32>,
    %cst_10 = arith.constant 0.000000e+00 : f32
    %17 = vector.broadcast %cst_10 : f32 to vector<40x256xf32>
    %c0_11 = arith.constant 0 : index
    %c0_12 = arith.constant 0 : index
    %18 = vector.load %arg10[%c0_11, %c0_12] : memref<44x256xf32, #tpu.memory_space<vmem>>, vector<40x256xf32>
    %19 = arith.truncf %18 : vector<40x256xf32> to vector<40x256xbf16>
    %c0_13 = arith.constant 0 : index
    %c0_14 = arith.constant 0 : index
    %c0_15 = arith.constant 0 : index
    %20 = vector.load %arg2[%c0_13, %c0_14, %c0_15] : memref<5x256x256xbf16, #tpu.memory_space<vmem>>, vector<1x256x256xbf16>
    %21 = vector.shape_cast %20 : vector<1x256x256xbf16> to vector<256x256xbf16>
    %cst_16 = arith.constant dense<0.000000e+00> : vector<40x256xf32>
    %22 = tpu.matmul %19, %21, %cst_16 {dimension_numbers = #tpu.dot_dimension_numbers<[1], [0], [0], [1], [0, 0, 1, 1], [], []>} : vector<40x256xbf16>, vector<256x256xbf16>, vector<40x256xf32> -> vector<40x256xf32>
    %23 = arith.addf %17, %22 : vector<40x256xf32>
    %c1 = arith.constant 1 : index
    %c0_17 = arith.constant 0 : index
    %24 = vector.load %arg10[%c1, %c0_17] : memref<44x256xf32, #tpu.memory_space<vmem>>, vector<40x256xf32>
    %25 = arith.truncf %24 : vector<40x256xf32> to vector<40x256xbf16>
    %c1_18 = arith.constant 1 : index
    %c0_19 = arith.constant 0 : index
    %c0_20 = arith.constant 0 : index
    %26 = vector.load %arg2[%c1_18, %c0_19, %c0_20] : memref<5x256x256xbf16, #tpu.memory_space<vmem>>, vector<1x256x256xbf16>
    %27 = vector.shape_cast %26 : vector<1x256x256xbf16> to vector<256x256xbf16>
    %cst_21 = arith.constant dense<0.000000e+00> : vector<40x256xf32>
    %28 = tpu.matmul %25, %27, %cst_21 {dimension_numbers = #tpu.dot_dimension_numbers<[1], [0], [0], [1], [0, 0, 1, 1], [], []>} : vector<40x256xbf16>, vector<256x256xbf16>, vector<40x256xf32> -> vector<40x256xf32>
    %29 = arith.addf %23, %28 : vector<40x256xf32>
    %c2 = arith.constant 2 : index
    %c0_22 = arith.constant 0 : index
    %30 = vector.load %arg10[%c2, %c0_22] : memref<44x256xf32, #tpu.memory_space<vmem>>, vector<40x256xf32>
    %31 = arith.truncf %30 : vector<40x256xf32> to vector<40x256xbf16>
    %c2_23 = arith.constant 2 : index
    %c0_24 = arith.constant 0 : index
    %c0_25 = arith.constant 0 : index
    %32 = vector.load %arg2[%c2_23, %c0_24, %c0_25] : memref<5x256x256xbf16, #tpu.memory_space<vmem>>, vector<1x256x256xbf16>
    %33 = vector.shape_cast %32 : vector<1x256x256xbf16> to vector<256x256xbf16>
    %cst_26 = arith.constant dense<0.000000e+00> : vector<40x256xf32>
    %34 = tpu.matmul %31, %33, %cst_26 {dimension_numbers = #tpu.dot_dimension_numbers<[1], [0], [0], [1], [0, 0, 1, 1], [], []>} : vector<40x256xbf16>, vector<256x256xbf16>, vector<40x256xf32> -> vector<40x256xf32>
    %35 = arith.addf %29, %34 : vector<40x256xf32>
    %c3 = arith.constant 3 : index
    %c0_27 = arith.constant 0 : index
    %36 = vector.load %arg10[%c3, %c0_27] : memref<44x256xf32, #tpu.memory_space<vmem>>, vector<40x256xf32>
    %37 = arith.truncf %36 : vector<40x256xf32> to vector<40x256xbf16>
    %c3_28 = arith.constant 3 : index
    %c0_29 = arith.constant 0 : index
    %c0_30 = arith.constant 0 : index
    %38 = vector.load %arg2[%c3_28, %c0_29, %c0_30] : memref<5x256x256xbf16, #tpu.memory_space<vmem>>, vector<1x256x256xbf16>
    %39 = vector.shape_cast %38 : vector<1x256x256xbf16> to vector<256x256xbf16>
    %cst_31 = arith.constant dense<0.000000e+00> : vector<40x256xf32>
    %40 = tpu.matmul %37, %39, %cst_31 {dimension_numbers = #tpu.dot_dimension_numbers<[1], [0], [0], [1], [0, 0, 1, 1], [], []>} : vector<40x256xbf16>, vector<256x256xbf16>, vector<40x256xf32> -> vector<40x256xf32>
    %41 = arith.addf %35, %40 : vector<40x256xf32>
    %c4_32 = arith.constant 4 : index
    %c0_33 = arith.constant 0 : index
    %42 = vector.load %arg10[%c4_32, %c0_33] : memref<44x256xf32, #tpu.memory_space<vmem>>, vector<40x256xf32>
    %43 = arith.truncf %42 : vector<40x256xf32> to vector<40x256xbf16>
    %c4_34 = arith.constant 4 : index
    %c0_35 = arith.constant 0 : index
    %c0_36 = arith.constant 0 : index
    %44 = vector.load %arg2[%c4_34, %c0_35, %c0_36] : memref<5x256x256xbf16, #tpu.memory_space<vmem>>, vector<1x256x256xbf16>
    %45 = vector.shape_cast %44 : vector<1x256x256xbf16> to vector<256x256xbf16>
    %cst_37 = arith.constant dense<0.000000e+00> : vector<40x256xf32>
    %46 = tpu.matmul %43, %45, %cst_37 {dimension_numbers = #tpu.dot_dimension_numbers<[1], [0], [0], [1], [0, 0, 1, 1], [], []>} : vector<40x256xbf16>, vector<256x256xbf16>, vector<40x256xf32> -> vector<40x256xf32>
    %47 = arith.addf %41, %46 : vector<40x256xf32>
    %48 = vector.extract_strided_slice %47 {offsets = [2, 0], sizes = [16, 256], strides = [1, 1]} : vector<40x256xf32> to vector<16x256xf32>
    %c0_38 = arith.constant 0 : index
    %c0_39 = arith.constant 0 : index
    %49 = vector.load %arg3[%c0_38, %c0_39] : memref<1x256xf32, #tpu.memory_space<vmem>>, vector<1x256xf32>
    %50 = vector.broadcast %49 : vector<1x256xf32> to vector<16x256xf32>
    %51 = arith.addf %48, %50 : vector<16x256xf32>
    %52 = vector.extract_strided_slice %47 {offsets = [22, 0], sizes = [16, 256], strides = [1, 1]} : vector<40x256xf32> to vector<16x256xf32>
    %c0_40 = arith.constant 0 : index
    %c0_41 = arith.constant 0 : index
    %53 = vector.load %arg3[%c0_40, %c0_41] : memref<1x256xf32, #tpu.memory_space<vmem>>, vector<1x256xf32>
    %54 = vector.broadcast %53 : vector<1x256xf32> to vector<16x256xf32>
    %55 = arith.addf %52, %54 : vector<16x256xf32>
    %56 = vector.shape_cast %51 : vector<16x256xf32> to vector<1x16x256xf32>
    %57 = vector.shape_cast %55 : vector<16x256xf32> to vector<1x16x256xf32>
    %58 = tpu.concatenate %56, %57 in 0 : vector<1x16x256xf32>, vector<1x16x256xf32> -> vector<2x16x256xf32>
    %59 = arith.maximumf %58, %5 : vector<2x16x256xf32>
    %cst_42 = arith.constant 0.000000e+00 : f32
    %60 = vector.broadcast %cst_42 : f32 to vector<2x16x256xf32>
    %61 = arith.cmpf oge, %59, %60 : vector<2x16x256xf32>
    %62 = vector.broadcast %0 : f32 to vector<2x16x256xf32>
    %63 = arith.mulf %62, %59 : vector<2x16x256xf32>
    %64 = arith.select %61, %59, %63 : vector<2x16x256xi1>, vector<2x16x256xf32>
    %65 = vector.extract_strided_slice %64 {offsets = [0, 0, 0], sizes = [1, 16, 256], strides = [1, 1, 1]} : vector<2x16x256xf32> to vector<1x16x256xf32>
    %66 = vector.shape_cast %65 : vector<1x16x256xf32> to vector<16x256xf32>
    %c4_43 = arith.constant 4 : index
    %c0_44 = arith.constant 0 : index
    %67 = vector.load %arg10[%c4_43, %c0_44] : memref<44x256xf32, #tpu.memory_space<vmem>>, vector<16x256xf32>
    tpu.vector_store %arg10[%c4_43, %c0_44], %66 {strides = array<i32>} : memref<44x256xf32, #tpu.memory_space<vmem>>, vector<16x256xf32>,
    %68 = vector.extract_strided_slice %64 {offsets = [1, 0, 0], sizes = [1, 16, 256], strides = [1, 1, 1]} : vector<2x16x256xf32> to vector<1x16x256xf32>
    %69 = vector.shape_cast %68 : vector<1x16x256xf32> to vector<16x256xf32>
    %c24_45 = arith.constant 24 : index
    %c0_46 = arith.constant 0 : index
    %70 = vector.load %arg10[%c24_45, %c0_46] : memref<44x256xf32, #tpu.memory_space<vmem>>, vector<16x256xf32>
    tpu.vector_store %arg10[%c24_45, %c0_46], %69 {strides = array<i32>} : memref<44x256xf32, #tpu.memory_space<vmem>>, vector<16x256xf32>,
    %cst_47 = arith.constant 0.000000e+00 : f32
    %71 = vector.broadcast %cst_47 : f32 to vector<40x256xf32>
    %c0_48 = arith.constant 0 : index
    %c0_49 = arith.constant 0 : index
    %72 = vector.load %arg10[%c0_48, %c0_49] : memref<44x256xf32, #tpu.memory_space<vmem>>, vector<40x256xf32>
    %73 = arith.truncf %72 : vector<40x256xf32> to vector<40x256xbf16>
    %c0_50 = arith.constant 0 : index
    %c0_51 = arith.constant 0 : index
    %c0_52 = arith.constant 0 : index
    %74 = vector.load %arg4[%c0_50, %c0_51, %c0_52] : memref<5x256x256xbf16, #tpu.memory_space<vmem>>, vector<1x256x256xbf16>
    %75 = vector.shape_cast %74 : vector<1x256x256xbf16> to vector<256x256xbf16>
    %cst_53 = arith.constant dense<0.000000e+00> : vector<40x256xf32>
    %76 = tpu.matmul %73, %75, %cst_53 {dimension_numbers = #tpu.dot_dimension_numbers<[1], [0], [0], [1], [0, 0, 1, 1], [], []>} : vector<40x256xbf16>, vector<256x256xbf16>, vector<40x256xf32> -> vector<40x256xf32>
    %77 = arith.addf %71, %76 : vector<40x256xf32>
    %c1_54 = arith.constant 1 : index
    %c0_55 = arith.constant 0 : index
    %78 = vector.load %arg10[%c1_54, %c0_55] : memref<44x256xf32, #tpu.memory_space<vmem>>, vector<40x256xf32>
    %79 = arith.truncf %78 : vector<40x256xf32> to vector<40x256xbf16>
    %c1_56 = arith.constant 1 : index
    %c0_57 = arith.constant 0 : index
    %c0_58 = arith.constant 0 : index
    %80 = vector.load %arg4[%c1_56, %c0_57, %c0_58] : memref<5x256x256xbf16, #tpu.memory_space<vmem>>, vector<1x256x256xbf16>
    %81 = vector.shape_cast %80 : vector<1x256x256xbf16> to vector<256x256xbf16>
    %cst_59 = arith.constant dense<0.000000e+00> : vector<40x256xf32>
    %82 = tpu.matmul %79, %81, %cst_59 {dimension_numbers = #tpu.dot_dimension_numbers<[1], [0], [0], [1], [0, 0, 1, 1], [], []>} : vector<40x256xbf16>, vector<256x256xbf16>, vector<40x256xf32> -> vector<40x256xf32>
    %83 = arith.addf %77, %82 : vector<40x256xf32>
    %c2_60 = arith.constant 2 : index
    %c0_61 = arith.constant 0 : index
    %84 = vector.load %arg10[%c2_60, %c0_61] : memref<44x256xf32, #tpu.memory_space<vmem>>, vector<40x256xf32>
    %85 = arith.truncf %84 : vector<40x256xf32> to vector<40x256xbf16>
    %c2_62 = arith.constant 2 : index
    %c0_63 = arith.constant 0 : index
    %c0_64 = arith.constant 0 : index
    %86 = vector.load %arg4[%c2_62, %c0_63, %c0_64] : memref<5x256x256xbf16, #tpu.memory_space<vmem>>, vector<1x256x256xbf16>
    %87 = vector.shape_cast %86 : vector<1x256x256xbf16> to vector<256x256xbf16>
    %cst_65 = arith.constant dense<0.000000e+00> : vector<40x256xf32>
    %88 = tpu.matmul %85, %87, %cst_65 {dimension_numbers = #tpu.dot_dimension_numbers<[1], [0], [0], [1], [0, 0, 1, 1], [], []>} : vector<40x256xbf16>, vector<256x256xbf16>, vector<40x256xf32> -> vector<40x256xf32>
    %89 = arith.addf %83, %88 : vector<40x256xf32>
    %c3_66 = arith.constant 3 : index
    %c0_67 = arith.constant 0 : index
    %90 = vector.load %arg10[%c3_66, %c0_67] : memref<44x256xf32, #tpu.memory_space<vmem>>, vector<40x256xf32>
    %91 = arith.truncf %90 : vector<40x256xf32> to vector<40x256xbf16>
    %c3_68 = arith.constant 3 : index
    %c0_69 = arith.constant 0 : index
    %c0_70 = arith.constant 0 : index
    %92 = vector.load %arg4[%c3_68, %c0_69, %c0_70] : memref<5x256x256xbf16, #tpu.memory_space<vmem>>, vector<1x256x256xbf16>
    %93 = vector.shape_cast %92 : vector<1x256x256xbf16> to vector<256x256xbf16>
    %cst_71 = arith.constant dense<0.000000e+00> : vector<40x256xf32>
    %94 = tpu.matmul %91, %93, %cst_71 {dimension_numbers = #tpu.dot_dimension_numbers<[1], [0], [0], [1], [0, 0, 1, 1], [], []>} : vector<40x256xbf16>, vector<256x256xbf16>, vector<40x256xf32> -> vector<40x256xf32>
    %95 = arith.addf %89, %94 : vector<40x256xf32>
    %c4_72 = arith.constant 4 : index
    %c0_73 = arith.constant 0 : index
    %96 = vector.load %arg10[%c4_72, %c0_73] : memref<44x256xf32, #tpu.memory_space<vmem>>, vector<40x256xf32>
    %97 = arith.truncf %96 : vector<40x256xf32> to vector<40x256xbf16>
    %c4_74 = arith.constant 4 : index
    %c0_75 = arith.constant 0 : index
    %c0_76 = arith.constant 0 : index
    %98 = vector.load %arg4[%c4_74, %c0_75, %c0_76] : memref<5x256x256xbf16, #tpu.memory_space<vmem>>, vector<1x256x256xbf16>
    %99 = vector.shape_cast %98 : vector<1x256x256xbf16> to vector<256x256xbf16>
    %cst_77 = arith.constant dense<0.000000e+00> : vector<40x256xf32>
    %100 = tpu.matmul %97, %99, %cst_77 {dimension_numbers = #tpu.dot_dimension_numbers<[1], [0], [0], [1], [0, 0, 1, 1], [], []>} : vector<40x256xbf16>, vector<256x256xbf16>, vector<40x256xf32> -> vector<40x256xf32>
    %101 = arith.addf %95, %100 : vector<40x256xf32>
    %102 = vector.extract_strided_slice %101 {offsets = [2, 0], sizes = [16, 256], strides = [1, 1]} : vector<40x256xf32> to vector<16x256xf32>
    %c0_78 = arith.constant 0 : index
    %c0_79 = arith.constant 0 : index
    %103 = vector.load %arg5[%c0_78, %c0_79] : memref<1x256xf32, #tpu.memory_space<vmem>>, vector<1x256xf32>
    %104 = vector.broadcast %103 : vector<1x256xf32> to vector<16x256xf32>
    %105 = arith.addf %102, %104 : vector<16x256xf32>
    %106 = vector.extract_strided_slice %101 {offsets = [22, 0], sizes = [16, 256], strides = [1, 1]} : vector<40x256xf32> to vector<16x256xf32>
    %c0_80 = arith.constant 0 : index
    %c0_81 = arith.constant 0 : index
    %107 = vector.load %arg5[%c0_80, %c0_81] : memref<1x256xf32, #tpu.memory_space<vmem>>, vector<1x256xf32>
    %108 = vector.broadcast %107 : vector<1x256xf32> to vector<16x256xf32>
    %109 = arith.addf %106, %108 : vector<16x256xf32>
    %110 = vector.shape_cast %105 : vector<16x256xf32> to vector<1x16x256xf32>
    %111 = vector.shape_cast %109 : vector<16x256xf32> to vector<1x16x256xf32>
    %112 = tpu.concatenate %110, %111 in 0 : vector<1x16x256xf32>, vector<1x16x256xf32> -> vector<2x16x256xf32>
    %113 = arith.maximumf %112, %59 : vector<2x16x256xf32>
    %cst_82 = arith.constant 0.000000e+00 : f32
    %114 = vector.broadcast %cst_82 : f32 to vector<2x16x256xf32>
    %115 = arith.cmpf oge, %113, %114 : vector<2x16x256xf32>
    %116 = vector.broadcast %0 : f32 to vector<2x16x256xf32>
    %117 = arith.mulf %116, %113 : vector<2x16x256xf32>
    %118 = arith.select %115, %113, %117 : vector<2x16x256xi1>, vector<2x16x256xf32>
    %119 = arith.truncf %118 : vector<2x16x256xf32> to vector<2x16x256xbf16>
    %120 = vector.shape_cast %119 : vector<2x16x256xbf16> to vector<32x256xbf16>
    %c0_83 = arith.constant 0 : index
    %c0_84 = arith.constant 0 : index
    %121 = vector.load %arg6[%c0_83, %c0_84] : memref<256x256xbf16, #tpu.memory_space<vmem>>, vector<256x256xbf16>
    %cst_85 = arith.constant dense<0.000000e+00> : vector<32x256xf32>
    %122 = tpu.matmul %120, %121, %cst_85 {dimension_numbers = #tpu.dot_dimension_numbers<[1], [0], [0], [1], [0, 0, 1, 1], [], []>} : vector<32x256xbf16>, vector<256x256xbf16>, vector<32x256xf32> -> vector<32x256xf32>
    %c0_86 = arith.constant 0 : index
    %c0_87 = arith.constant 0 : index
    %123 = vector.load %arg7[%c0_86, %c0_87] : memref<1x256xf32, #tpu.memory_space<vmem>>, vector<1x256xf32>
    %124 = vector.broadcast %123 : vector<1x256xf32> to vector<32x256xf32>
    %125 = arith.addf %122, %124 : vector<32x256xf32>
    %126 = vector.shape_cast %125 : vector<32x256xf32> to vector<2x16x256xf32>
    %c0_88 = arith.constant 0 : index
    %c0_89 = arith.constant 0 : index
    %c0_90 = arith.constant 0 : index
    %127 = vector.load %arg9[%c0_88, %c0_89, %c0_90] : memref<2x16x256xf32, #tpu.memory_space<vmem>>, vector<2x16x256xf32>
    tpu.vector_store %arg9[%c0_88, %c0_89, %c0_90], %126 {strides = array<i32>} : memref<2x16x256xf32, #tpu.memory_space<vmem>>, vector<2x16x256xf32>,
    return
  }
  func.func @transform_0(%arg0: i32) -> (i32, i32, i32) {
    %c0_i32 = arith.constant 0 : i32
    %c0_i32_0 = arith.constant 0 : i32
    %c0_i32_1 = arith.constant 0 : i32
    return %arg0, %c0_i32, %c0_i32_0 : i32, i32, i32
  }
  func.func @transform_1(%arg0: i32) -> (i32, i32, i32) {
    %c0_i32 = arith.constant 0 : i32
    %c0_i32_0 = arith.constant 0 : i32
    %c0_i32_1 = arith.constant 0 : i32
    %c0_i32_2 = arith.constant 0 : i32
    return %c0_i32, %c0_i32_0, %c0_i32_1 : i32, i32, i32
  }
  func.func @transform_2(%arg0: i32) -> (i32, i32) {
    %c0_i32 = arith.constant 0 : i32
    %c0_i32_0 = arith.constant 0 : i32
    %c0_i32_1 = arith.constant 0 : i32
    return %c0_i32, %c0_i32_0 : i32, i32
  }
  func.func @transform_3(%arg0: i32) -> (i32, i32, i32) {
    %c0_i32 = arith.constant 0 : i32
    %c0_i32_0 = arith.constant 0 : i32
    %c0_i32_1 = arith.constant 0 : i32
    %c0_i32_2 = arith.constant 0 : i32
    return %c0_i32, %c0_i32_0, %c0_i32_1 : i32, i32, i32
  }
  func.func @transform_4(%arg0: i32) -> (i32, i32) {
    %c0_i32 = arith.constant 0 : i32
    %c0_i32_0 = arith.constant 0 : i32
    %c0_i32_1 = arith.constant 0 : i32
    return %c0_i32, %c0_i32_0 : i32, i32
  }
  func.func @transform_5(%arg0: i32) -> (i32, i32) {
    %c0_i32 = arith.constant 0 : i32
    %c0_i32_0 = arith.constant 0 : i32
    %c0_i32_1 = arith.constant 0 : i32
    return %c0_i32, %c0_i32_0 : i32, i32
  }
  func.func @transform_6(%arg0: i32) -> (i32, i32) {
    %c0_i32 = arith.constant 0 : i32
    %c0_i32_0 = arith.constant 0 : i32
    %c0_i32_1 = arith.constant 0 : i32
    return %c0_i32, %c0_i32_0 : i32, i32
  }
  func.func @transform_7(%arg0: i32) -> i32 {
    %c0_i32 = arith.constant 0 : i32
    %c0_i32_0 = arith.constant 0 : i32
    return %c0_i32 : i32
  }
  func.func @transform_8(%arg0: i32) -> (i32, i32, i32) {
    %c0_i32 = arith.constant 0 : i32
    %c0_i32_0 = arith.constant 0 : i32
    %c0_i32_1 = arith.constant 0 : i32
    return %arg0, %c0_i32, %c0_i32_0 : i32, i32, i32
  }
}

</mosaic_0001>

<llo_original>
// kernel: tpu_custom_call.1
$region0: #{tpu_custom_call.1}
  #allocation0 [shape = 'u32[]', space=smem, size = 0x4, offset = 0x4, fixed_abs, tag = 'smem constant byte address 0x4 - core index']
  #allocation1 [shape = 'u32[144,128]{1,0:T(1,128)}', space=vmem, size = 0x12000, scoped, tag = 'internal scratch']
  #allocation2 [shape = 'f32[44,256]{1,0:T(8,128)}', space=vmem, size = 0xc000, scoped, tag = 'scratch operand']
  #allocation3 [shape = 'f32[1]{0:T(128)S(6)}', space=smem, size = 0x200, scoped, tag = 'scoped memory for tpu_custom_call.1']
  %s0 = inlined_call_operand.hbm [shape: f32[2,16,256], index: 0, kind: input, shape index: {}]
  %s1 = inlined_call_operand.hbm [shape: bf16[5,256,256], index: 1, kind: input, shape index: {}]
  %s2 = inlined_call_operand.vmem [shape: f32[1,256], index: 2, kind: input, shape index: {}]
  %s3 = inlined_call_operand.hbm [shape: bf16[5,256,256], index: 3, kind: input, shape index: {}]
  %s4 = inlined_call_operand.vmem [shape: f32[1,256], index: 4, kind: input, shape index: {}]
  %s5 = inlined_call_operand.hbm [shape: bf16[256,256], index: 5, kind: input, shape index: {}]
  %s6 = inlined_call_operand.vmem [shape: f32[1,256], index: 6, kind: input, shape index: {}]
  %s7 = inlined_call_operand.<no memory space> [shape: f32[1], index: 7, kind: input, shape index: {}]
  %s8 = inlined_call_operand.hbm [shape: f32[2,16,256], index: 8, kind: output, shape index: {}]
  %s9 = sld [smem:[#allocation0]]
  $region58: #{tpu_custom_call.1} parent=0
    _
  %s11 = ssub.s32 1, %s9
  %s12 = scalar_select 0, %s11, %s9
  %13 = sst [smem:[#allocation3]] %s7
  $region1: #{tpu_custom_call.1} parent=0
    #allocation4 [shape = 'u8[32768]{0}', space=vmem, size = 0x8000, scoped, tag = 'input window, operand 0, single buffered']
    #allocation5 [shape = 's32[1]{0}', space=sflag, size = 0x4, scoped, tag = 'scoped memory for tpu_custom_call.1']
    #allocation6 [shape = 's32[1]{0}', space=sflag, size = 0x4, scoped, tag = 'scoped memory for tpu_custom_call.1']
    #allocation7 [shape = 'u8[655360]{0}', space=vmem, size = 0xa0000, scoped, tag = 'input window, operand 1, single buffered']
    #allocation8 [shape = 's32[1]{0}', space=sflag, size = 0x4, scoped, tag = 'scoped memory for tpu_custom_call.1']
    #allocation9 [shape = 'u8[655360]{0}', space=vmem, size = 0xa0000, scoped, tag = 'input window, operand 3, single buffered']
    #allocation10 [shape = 'u8[131072]{0}', space=vmem, size = 0x20000, scoped, tag = 'input window, operand 5, single buffered']
    #allocation11 [shape = 's32[1]{0}', space=sflag, size = 0x4, scoped, tag = 'scoped memory for tpu_custom_call.1']
    #allocation12 [shape = 'u8[32768]{0}', space=vmem, size = 0x8000, scoped, tag = 'output window, operand 0, single buffered']
    %14 = vsyncpa [#allocation5], 0
    %15 = vsyncpa [#allocation8], 0
    %16 = vsyncpa [#allocation11], 0
    %17 = vsyncpa [#allocation6], 0
    // Predicated region
    $region2: #{tpu_custom_call.1} parent=1 // pred_check
      _
    $region3: #{tpu_custom_call.1} parent=1 // pred_check_branch
      %19 = sbr.rel (0) target = $region5
    $region4: #{tpu_custom_call.1} parent=1 // pred_region
      %s21 = ssub.s32 1024, 1024
      %22 = vsyncadd [#allocation5], %s21
      %s23 = sshll.u32 [#allocation4], 4
      %s24 = int_to_ptr.vmem [resolvable:$true] %s23
      %29 = dma.hbm_to_vmem [thread:$0]  %s0, 1024, %s24, [#allocation5], 256, 256, 16
    $region5: #{tpu_custom_call.1} parent=1 // pred_fallthru
      _
    // Predicated region
    $region6: #{tpu_custom_call.1} parent=1 // pred_check
      _
    $region7: #{tpu_custom_call.1} parent=1 // pred_check_branch
      %31 = sbr.rel (0) target = $region9
    $region8: #{tpu_custom_call.1} parent=1 // pred_region
      %s33 = ssub.s32 20480, 20480
      %34 = vsyncadd [#allocation8], %s33
      %s35 = sshll.u32 [#allocation7], 4
      %s36 = int_to_ptr.vmem [resolvable:$true] %s35
      %41 = dma.hbm_to_vmem [thread:$0]  %s1, 20480, %s36, [#allocation8], 128, 128, 8
    $region9: #{tpu_custom_call.1} parent=1 // pred_fallthru
      _
    // Predicated region
    $region10: #{tpu_custom_call.1} parent=1 // pred_check
      _
    $region11: #{tpu_custom_call.1} parent=1 // pred_check_branch
      %43 = sbr.rel (0) target = $region13
    $region12: #{tpu_custom_call.1} parent=1 // pred_region
      _
    $region13: #{tpu_custom_call.1} parent=1 // pred_fallthru
      _
    // Predicated region
    $region14: #{tpu_custom_call.1} parent=1 // pred_check
      _
    $region15: #{tpu_custom_call.1} parent=1 // pred_check_branch
      %45 = sbr.rel (0) target = $region17
    $region16: #{tpu_custom_call.1} parent=1 // pred_region
      %s47 = ssub.s32 20480, 20480
      %48 = vsyncadd [#allocation8], %s47
      %s49 = sshll.u32 [#allocation9], 4
      %s50 = int_to_ptr.vmem [resolvable:$true] %s49
      %55 = dma.hbm_to_vmem [thread:$0]  %s3, 20480, %s50, [#allocation8], 128, 128, 8
    $region17: #{tpu_custom_call.1} parent=1 // pred_fallthru
      _
    // Predicated region
    $region18: #{tpu_custom_call.1} parent=1 // pred_check
      _
    $region19: #{tpu_custom_call.1} parent=1 // pred_check_branch
      %57 = sbr.rel (0) target = $region21
    $region20: #{tpu_custom_call.1} parent=1 // pred_region
      _
    $region21: #{tpu_custom_call.1} parent=1 // pred_fallthru
      _
    // Predicated region
    $region22: #{tpu_custom_call.1} parent=1 // pred_check
      _
    $region23: #{tpu_custom_call.1} parent=1 // pred_check_branch
      %59 = sbr.rel (0) target = $region25
    $region24: #{tpu_custom_call.1} parent=1 // pred_region
      %s61 = ssub.s32 4096, 4096
      %62 = vsyncadd [#allocation11], %s61
      %s63 = sshll.u32 [#allocation10], 4
      %s64 = int_to_ptr.vmem [resolvable:$true] %s63
      %69 = dma.hbm_to_vmem [thread:$0]  %s5, 4096, %s64, [#allocation11], 128, 128, 8
    $region25: #{tpu_custom_call.1} parent=1 // pred_fallthru
      _
    // Predicated region
    $region26: #{tpu_custom_call.1} parent=1 // pred_check
      _
    $region27: #{tpu_custom_call.1} parent=1 // pred_check_branch
      %71 = sbr.rel (0) target = $region29
    $region28: #{tpu_custom_call.1} parent=1 // pred_region
      _
    $region29: #{tpu_custom_call.1} parent=1 // pred_fallthru
      _
    // Predicated region
    $region30: #{tpu_custom_call.1} parent=1 // pred_check
      _
    $region31: #{tpu_custom_call.1} parent=1 // pred_check_branch
      %73 = sbr.rel (0) target = $region33
    $region32: #{tpu_custom_call.1} parent=1 // pred_region
      _
    $region33: #{tpu_custom_call.1} parent=1 // pred_fallthru
      _
    // Predicated region
    $region34: #{tpu_custom_call.1} parent=1 // pred_check
      _
    $region35: #{tpu_custom_call.1} parent=1 // pred_check_branch
      %75 = sbr.rel (0) target = $region37
    $region36: #{tpu_custom_call.1} parent=1 // pred_region
      %76 = dma.done [#allocation5], 1024
    $region37: #{tpu_custom_call.1} parent=1 // pred_fallthru
      _
    // Predicated region
    $region38: #{tpu_custom_call.1} parent=1 // pred_check
      _
    $region39: #{tpu_custom_call.1} parent=1 // pred_check_branch
      %78 = sbr.rel (0) target = $region41
    $region40: #{tpu_custom_call.1} parent=1 // pred_region
      %79 = dma.done [#allocation8], 20480
    $region41: #{tpu_custom_call.1} parent=1 // pred_fallthru
      _
    // Predicated region
    $region42: #{tpu_custom_call.1} parent=1 // pred_check
      _
    $region43: #{tpu_custom_call.1} parent=1 // pred_check_branch
      %81 = sbr.rel (0) target = $region45
    $region44: #{tpu_custom_call.1} parent=1 // pred_region
      %82 = dma.done [#allocation8], 20480
    $region45: #{tpu_custom_call.1} parent=1 // pred_fallthru
      _
    // Predicated region
    $region46: #{tpu_custom_call.1} parent=1 // pred_check
      _
    $region47: #{tpu_custom_call.1} parent=1 // pred_check_branch
      %84 = sbr.rel (0) target = $region49
    $region48: #{tpu_custom_call.1} parent=1 // pred_region
      %85 = dma.done [#allocation11], 4096
    $region49: #{tpu_custom_call.1} parent=1 // pred_fallthru
      _
    %s86 = sld [smem:[#allocation3]]
    %87 = vst [vmem:[#allocation2] sm:$0xf] 0.0
    %88 = vst [vmem:[#allocation2 + $0x8] sm:$0xf] 0.0
    %89 = vst [vmem:[#allocation2 + $0x20] sm:$0xf0] 0.0
    %90 = vst [vmem:[#allocation2 + $0x28] sm:$0xf0] 0.0
    %91 = vst [vmem:[#allocation2 + $0x50] sm:$0xf] 0.0
    %92 = vst [vmem:[#allocation2 + $0x58] sm:$0xf] 0.0
    %v93 = vld [vmem:[#allocation4] sm:$0xff]
    %v94 = vld [vmem:[#allocation4 + $0x8] sm:$0xff]
    %v95 = vld [vmem:[#allocation4 + $0x10] sm:$0xff]
    %v96 = vld [vmem:[#allocation4 + $0x18] sm:$0xff]
    %v97 = vld [vmem:[#allocation4 + $0x20] sm:$0xff]
    %v98 = vld [vmem:[#allocation4 + $0x28] sm:$0xff]
    %v99 = vld [vmem:[#allocation4 + $0x30] sm:$0xff]
    %v100 = vld [vmem:[#allocation4 + $0x38] sm:$0xff]
    %vm101 = vcmp.ge.f32.partialorder %v93, 0.0
    %vm102 = vcmp.ge.f32.partialorder %v94, 0.0
    %vm103 = vcmp.ge.f32.partialorder %v95, 0.0
    %vm104 = vcmp.ge.f32.partialorder %v96, 0.0
    %vm105 = vcmp.ge.f32.partialorder %v97, 0.0
    %vm106 = vcmp.ge.f32.partialorder %v98, 0.0
    %vm107 = vcmp.ge.f32.partialorder %v99, 0.0
    %vm108 = vcmp.ge.f32.partialorder %v100, 0.0
    %v109 = vstv %s86
    %v110 = vmul.f32 %v109, %v93
    %v111 = vmul.f32 %v109, %v94
    %v112 = vmul.f32 %v109, %v95
    %v113 = vmul.f32 %v109, %v96
    %v114 = vmul.f32 %v109, %v97
    %v115 = vmul.f32 %v109, %v98
    %v116 = vmul.f32 %v109, %v99
    %v117 = vmul.f32 %v109, %v100
    %v118 = vsel %vm101, %v93, %v110
    %v119 = vsel %vm102, %v94, %v111
    %v120 = vsel %vm103, %v95, %v112
    %v121 = vsel %vm104, %v96, %v113
    %v122 = vsel %vm105, %v97, %v114
    %v123 = vsel %vm106, %v98, %v115
    %v124 = vsel %vm107, %v99, %v116
    %v125 = vsel %vm108, %v100, %v117
    %vm130 = vcmask 1043456
    %v131 = vrot.slane %v118, 4
    %v132 = vrot.slane %v119, 4
    %v133 = vrot.slane %v120, 4
    %v134 = vsel %vm130, %v131, %v133
    %v135 = vrot.slane %v121, 4
    %v136 = vsel %vm130, %v132, %v135
    %143 = vst [vmem:[#allocation2] sm:$0xf0] %v131
    %144 = vst [vmem:[#allocation2 + $0x8] sm:$0xf0] %v132
    %145 = vst [vmem:[#allocation2 + $0x10] sm:$0xff] %v134
    %146 = vst [vmem:[#allocation2 + $0x18] sm:$0xff] %v136
    %147 = vst [vmem:[#allocation2 + $0x20] sm:$0xf] %v133
    %148 = vst [vmem:[#allocation2 + $0x28] sm:$0xf] %v135
    %149 = vst [vmem:[#allocation2 + $0x30] sm:$0xff] %v122
    %150 = vst [vmem:[#allocation2 + $0x38] sm:$0xff] %v123
    %151 = vst [vmem:[#allocation2 + $0x40] sm:$0xff] %v124
    %152 = vst [vmem:[#allocation2 + $0x48] sm:$0xff] %v125
    %v153 = vld [vmem:[#allocation2] sm:$0xff]
    %v154 = vld [vmem:[#allocation2 + $0x8] sm:$0xff]
    %v155 = vld [vmem:[#allocation2 + $0x10] sm:$0xff]
    %v156 = vld [vmem:[#allocation2 + $0x18] sm:$0xff]
    %v157 = vld [vmem:[#allocation2 + $0x20] sm:$0xff]
    %v158 = vld [vmem:[#allocation2 + $0x28] sm:$0xff]
    %v159 = vld [vmem:[#allocation2 + $0x30] sm:$0xff]
    %v160 = vld [vmem:[#allocation2 + $0x38] sm:$0xff]
    %v161 = vld [vmem:[#allocation2 + $0x40] sm:$0xff]
    %v162 = vld [vmem:[#allocation2 + $0x48] sm:$0xff]
    %v163 = vpack.c.bf16 %v155, %v153
    %v164 = vpack.c.bf16 %v156, %v154
    %v165 = vpack.c.bf16 %v159, %v157
    %v166 = vpack.c.bf16 %v160, %v158
    %v167 = vpack.c.bf16 %v161, %v161
    %v168 = vpack.c.bf16 %v162, %v162
    %v169 = vld [vmem:[#allocation7] sm:$0xff]
    %v170 = vld [vmem:[#allocation7 + $0x8] sm:$0xff]
    %v171 = vld [vmem:[#allocation7 + $0x10] sm:$0xff]
    %v172 = vld [vmem:[#allocation7 + $0x18] sm:$0xff]
    %v173 = vld [vmem:[#allocation7 + $0x20] sm:$0xff]
    %v174 = vld [vmem:[#allocation7 + $0x28] sm:$0xff]
    %v175 = vld [vmem:[#allocation7 + $0x30] sm:$0xff]
    %v176 = vld [vmem:[#allocation7 + $0x38] sm:$0xff]
    %v177 = vld [vmem:[#allocation7 + $0x40] sm:$0xff]
    %v178 = vld [vmem:[#allocation7 + $0x48] sm:$0xff]
    %v179 = vld [vmem:[#allocation7 + $0x50] sm:$0xff]
    %v180 = vld [vmem:[#allocation7 + $0x58] sm:$0xff]
    %v181 = vld [vmem:[#allocation7 + $0x60] sm:$0xff]
    %v182 = vld [vmem:[#allocation7 + $0x68] sm:$0xff]
    %v183 = vld [vmem:[#allocation7 + $0x70] sm:$0xff]
    %v184 = vld [vmem:[#allocation7 + $0x78] sm:$0xff]
    %v185 = vld [vmem:[#allocation7 + $0x80] sm:$0xff]
    %v186 = vld [vmem:[#allocation7 + $0x88] sm:$0xff]
    %v187 = vld [vmem:[#allocation7 + $0x90] sm:$0xff]
    %v188 = vld [vmem:[#allocation7 + $0x98] sm:$0xff]
    %v189 = vld [vmem:[#allocation7 + $0xa0] sm:$0xff]
    %v190 = vld [vmem:[#allocation7 + $0xa8] sm:$0xff]
    %v191 = vld [vmem:[#allocation7 + $0xb0] sm:$0xff]
    %v192 = vld [vmem:[#allocation7 + $0xb8] sm:$0xff]
    %v193 = vld [vmem:[#allocation7 + $0xc0] sm:$0xff]
    %v194 = vld [vmem:[#allocation7 + $0xc8] sm:$0xff]
    %v195 = vld [vmem:[#allocation7 + $0xd0] sm:$0xff]
    %v196 = vld [vmem:[#allocation7 + $0xd8] sm:$0xff]
    %v197 = vld [vmem:[#allocation7 + $0xe0] sm:$0xff]
    %v198 = vld [vmem:[#allocation7 + $0xe8] sm:$0xff]
    %v199 = vld [vmem:[#allocation7 + $0xf0] sm:$0xff]
    %v200 = vld [vmem:[#allocation7 + $0xf8] sm:$0xff]
    %v201 = vld [vmem:[#allocation2] sm:$0xfe]
    %v202 = vld [vmem:[#allocation2 + $0x8] sm:$0xfe]
    %v203 = vld [vmem:[#allocation2 + $0x50] sm:$0x1]
    %v204 = vld [vmem:[#allocation2 + $0x58] sm:$0x1]
    %v205 = vpack.c.bf16 %v155, %v201
    %v206 = vpack.c.bf16 %v156, %v202
    %v207 = vpack.c.bf16 %v203, %v161
    %v208 = vpack.c.bf16 %v204, %v162
    %s209 = scalar_lea.vmem [#allocation7], 256
    %v210 = vld [vmem:[%s209] sm:$0xff]
    %v211 = vld [vmem:[%s209 + $0x8] sm:$0xff]
    %v212 = vld [vmem:[%s209 + $0x10] sm:$0xff]
    %v213 = vld [vmem:[%s209 + $0x18] sm:$0xff]
    %v214 = vld [vmem:[%s209 + $0x20] sm:$0xff]
    %v215 = vld [vmem:[%s209 + $0x28] sm:$0xff]
    %v216 = vld [vmem:[%s209 + $0x30] sm:$0xff]
    %v217 = vld [vmem:[%s209 + $0x38] sm:$0xff]
    %v218 = vld [vmem:[%s209 + $0x40] sm:$0xff]
    %v219 = vld [vmem:[%s209 + $0x48] sm:$0xff]
    %v220 = vld [vmem:[%s209 + $0x50] sm:$0xff]
    %v221 = vld [vmem:[%s209 + $0x58] sm:$0xff]
    %v222 = vld [vmem:[%s209 + $0x60] sm:$0xff]
    %v223 = vld [vmem:[%s209 + $0x68] sm:$0xff]
    %v224 = vld [vmem:[%s209 + $0x70] sm:$0xff]
    %v225 = vld [vmem:[%s209 + $0x78] sm:$0xff]
    %v226 = vld [vmem:[%s209 + $0x80] sm:$0xff]
    %v227 = vld [vmem:[%s209 + $0x88] sm:$0xff]
    %v228 = vld [vmem:[%s209 + $0x90] sm:$0xff]
    %v229 = vld [vmem:[%s209 + $0x98] sm:$0xff]
    %v230 = vld [vmem:[%s209 + $0xa0] sm:$0xff]
    %v231 = vld [vmem:[%s209 + $0xa8] sm:$0xff]
    %v232 = vld [vmem:[%s209 + $0xb0] sm:$0xff]
    %v233 = vld [vmem:[%s209 + $0xb8] sm:$0xff]
    %v234 = vld [vmem:[%s209 + $0xc0] sm:$0xff]
    %v235 = vld [vmem:[%s209 + $0xc8] sm:$0xff]
    %v236 = vld [vmem:[%s209 + $0xd0] sm:$0xff]
    %v237 = vld [vmem:[%s209 + $0xd8] sm:$0xff]
    %v238 = vld [vmem:[%s209 + $0xe0] sm:$0xff]
    %v239 = vld [vmem:[%s209 + $0xe8] sm:$0xff]
    %v240 = vld [vmem:[%s209 + $0xf0] sm:$0xff]
    %v241 = vld [vmem:[%s209 + $0xf8] sm:$0xff]
    %vm242 = vsmask.f32 7424
    %v244 = vshrl.u32 %v205, 16
    %v246 = vshll.u32 %v205, 16
    %v248 = vrot.slane %v246, 1
    %v249 = vor.u32 %v244, %v248
    %v251 = vshll.u32 %v165, 16
    %v253 = vrot.slane %v251, 1
    %v254 = vsel %vm242, %v249, %v253
    %v256 = vshrl.u32 %v206, 16
    %v258 = vshll.u32 %v206, 16
    %v260 = vrot.slane %v258, 1
    %v261 = vor.u32 %v256, %v260
    %v263 = vshll.u32 %v166, 16
    %v265 = vrot.slane %v263, 1
    %v266 = vsel %vm242, %v261, %v265
    %v267 = vshrl.u32 %v165, 16
    %v269 = vor.u32 %v267, %v253
    %v271 = vshll.u32 %v207, 16
    %v273 = vrot.slane %v271, 1
    %v274 = vsel %vm242, %v269, %v273
    %v275 = vshrl.u32 %v166, 16
    %v277 = vor.u32 %v275, %v265
    %v279 = vshll.u32 %v208, 16
    %v281 = vrot.slane %v279, 1
    %v282 = vsel %vm242, %v277, %v281
    %v283 = vshrl.u32 %v207, 16
    %v285 = vor.u32 %v283, %v273
    %v286 = vshrl.u32 %v208, 16
    %v288 = vor.u32 %v286, %v281
    %v327 = vunpack.c.l.b16 %v210
    %v328 = vunpack.c.h.b16 %v210
    %v329 = vunpack.c.l.b16 %v211
    %v330 = vunpack.c.h.b16 %v211
    %v331 = vunpack.c.l.b16 %v212
    %v332 = vunpack.c.h.b16 %v212
    %v333 = vunpack.c.l.b16 %v213
    %v334 = vunpack.c.h.b16 %v213
    %v335 = vunpack.c.l.b16 %v214
    %v336 = vunpack.c.h.b16 %v214
    %v337 = vunpack.c.l.b16 %v215
    %v338 = vunpack.c.h.b16 %v215
    %v339 = vunpack.c.l.b16 %v216
    %v340 = vunpack.c.h.b16 %v216
    %v341 = vunpack.c.l.b16 %v217
    %v342 = vunpack.c.h.b16 %v217
    %v343 = vunpack.c.l.b16 %v218
    %v344 = vunpack.c.h.b16 %v218
    %v345 = vunpack.c.l.b16 %v219
    %v346 = vunpack.c.h.b16 %v219
    %v347 = vunpack.c.l.b16 %v220
    %v348 = vunpack.c.h.b16 %v220
    %v349 = vunpack.c.l.b16 %v221
    %v350 = vunpack.c.h.b16 %v221
    %v351 = vunpack.c.l.b16 %v222
    %v352 = vunpack.c.h.b16 %v222
    %v353 = vunpack.c.l.b16 %v223
    %v354 = vunpack.c.h.b16 %v223
    %v355 = vunpack.c.l.b16 %v224
    %v356 = vunpack.c.h.b16 %v224
    %v357 = vunpack.c.l.b16 %v225
    %v358 = vunpack.c.h.b16 %v225
    %v359 = vunpack.c.l.b16 %v226
    %v360 = vunpack.c.h.b16 %v226
    %v361 = vunpack.c.l.b16 %v227
    %v362 = vunpack.c.h.b16 %v227
    %v363 = vunpack.c.l.b16 %v228
    %v364 = vunpack.c.h.b16 %v228
    %v365 = vunpack.c.l.b16 %v229
    %v366 = vunpack.c.h.b16 %v229
    %v367 = vunpack.c.l.b16 %v230
    %v368 = vunpack.c.h.b16 %v230
    %v369 = vunpack.c.l.b16 %v231
    %v370 = vunpack.c.h.b16 %v231
    %v371 = vunpack.c.l.b16 %v232
    %v372 = vunpack.c.h.b16 %v232
    %v373 = vunpack.c.l.b16 %v233
    %v374 = vunpack.c.h.b16 %v233
    %v375 = vunpack.c.l.b16 %v234
    %v376 = vunpack.c.h.b16 %v234
    %v377 = vunpack.c.l.b16 %v235
    %v378 = vunpack.c.h.b16 %v235
    %v379 = vunpack.c.l.b16 %v236
    %v380 = vunpack.c.h.b16 %v236
    %v381 = vunpack.c.l.b16 %v237
    %v382 = vunpack.c.h.b16 %v237
    %v383 = vunpack.c.l.b16 %v238
    %v384 = vunpack.c.h.b16 %v238
    %v385 = vunpack.c.l.b16 %v239
    %v386 = vunpack.c.h.b16 %v239
    %v387 = vunpack.c.l.b16 %v240
    %v388 = vunpack.c.h.b16 %v240
    %v389 = vunpack.c.l.b16 %v241
    %v390 = vunpack.c.h.b16 %v241
    %v391 = vpack.c.b16 %v329, %v327
    %v392 = vpack.c.b16 %v330, %v328
    %v393 = vpack.c.b16 %v333, %v331
    %v394 = vpack.c.b16 %v334, %v332
    %v395 = vpack.c.b16 %v337, %v335
    %v396 = vpack.c.b16 %v338, %v336
    %v397 = vpack.c.b16 %v341, %v339
    %v398 = vpack.c.b16 %v342, %v340
    %v399 = vpack.c.b16 %v345, %v343
    %v400 = vpack.c.b16 %v346, %v344
    %v401 = vpack.c.b16 %v349, %v347
    %v402 = vpack.c.b16 %v350, %v348
    %v403 = vpack.c.b16 %v353, %v351
    %v404 = vpack.c.b16 %v354, %v352
    %v405 = vpack.c.b16 %v357, %v355
    %v406 = vpack.c.b16 %v358, %v356
    %v407 = vpack.c.b16 %v361, %v359
    %v408 = vpack.c.b16 %v362, %v360
    %v409 = vpack.c.b16 %v365, %v363
    %v410 = vpack.c.b16 %v366, %v364
    %v411 = vpack.c.b16 %v369, %v367
    %v412 = vpack.c.b16 %v370, %v368
    %v413 = vpack.c.b16 %v373, %v371
    %v414 = vpack.c.b16 %v374, %v372
    %v415 = vpack.c.b16 %v377, %v375
    %v416 = vpack.c.b16 %v378, %v376
    %v417 = vpack.c.b16 %v381, %v379
    %v418 = vpack.c.b16 %v382, %v380
    %v419 = vpack.c.b16 %v385, %v383
    %v420 = vpack.c.b16 %v386, %v384
    %v421 = vpack.c.b16 %v389, %v387
    %v422 = vpack.c.b16 %v390, %v388
    %455 = vmatprep.subr.bf16.mxu0 %v392
    %456 = vmatpush1.bf16.msra.mxu0 %v391
    %457 = vmatprep.subr.bf16.mxu0 %v394
    %458 = vmatpush1.bf16.msra.mxu0 %v393
    %459 = vmatprep.subr.bf16.mxu0 %v396
    %460 = vmatpush1.bf16.msra.mxu0 %v395
    %461 = vmatprep.subr.bf16.mxu0 %v398
    %462 = vmatpush1.bf16.msra.mxu0 %v397
    %463 = vmatprep.subr.bf16.mxu0 %v400
    %464 = vmatpush1.bf16.msra.mxu0 %v399
    %465 = vmatprep.subr.bf16.mxu0 %v402
    %466 = vmatpush1.bf16.msra.mxu0 %v401
    %467 = vmatprep.subr.bf16.mxu0 %v404
    %468 = vmatpush1.bf16.msra.mxu0 %v403
    %469 = vmatprep.subr.bf16.mxu0 %v406
    %470 = vmatpush1.bf16.msra.mxu0 %v405
    %471 = vmatprep.subr.bf16.mxu0 %v408
    %472 = vmatpush1.bf16.msra.mxu0 %v407
    %473 = vmatprep.subr.bf16.mxu0 %v410
    %474 = vmatpush1.bf16.msra.mxu0 %v409
    %475 = vmatprep.subr.bf16.mxu0 %v412
    %476 = vmatpush1.bf16.msra.mxu0 %v411
    %477 = vmatprep.subr.bf16.mxu0 %v414
    %478 = vmatpush1.bf16.msra.mxu0 %v413
    %479 = vmatprep.subr.bf16.mxu0 %v416
    %480 = vmatpush1.bf16.msra.mxu0 %v415
    %481 = vmatprep.subr.bf16.mxu0 %v418
    %482 = vmatpush1.bf16.msra.mxu0 %v417
    %483 = vmatprep.subr.bf16.mxu0 %v420
    %484 = vmatpush1.bf16.msra.mxu0 %v419
    %485 = vmatprep.subr.bf16.mxu0 %v422
    %486 = vmatpush1.bf16.msra.mxu0 %v421
    %487 = vmatprep.mubr.bf16.mxu0 %v266
    %488 = vmatmul.mubr.bf16.gmra.mrb[0].mxu0 %v254
    %v489 = vpop.f32.mrb[0].mxu0
    %v490 = vadd.f32 0.0, %v489
    %v491 = vpop.f32.mrb[0].mxu0
    %v492 = vadd.f32 0.0, %v491
    %v493 = vpop.f32.mrb[0].mxu0
    %v494 = vadd.f32 0.0, %v493
    %v495 = vpop.f32.mrb[0].mxu0
    %v496 = vadd.f32 0.0, %v495
    %497 = vmatprep.mubr.bf16.mxu0 %v282
    %498 = vmatmul.mubr.bf16.gmra.mrb[0].mxu0 %v274
    %v499 = vpop.f32.mrb[0].mxu0
    %v500 = vadd.f32 0.0, %v499
    %v501 = vpop.f32.mrb[0].mxu0
    %v502 = vadd.f32 0.0, %v501
    %v503 = vpop.f32.mrb[0].mxu0
    %v504 = vadd.f32 0.0, %v503
    %v505 = vpop.f32.mrb[0].mxu0
    %v506 = vadd.f32 0.0, %v505
    %507 = vmatprep.mubr.bf16.mxu0 %v288
    %508 = vmatmul.mubr.bf16.gmra.mrb[0].mxu0 %v285
    %v509 = vpop.f32.mrb[0].mxu0
    %v510 = vadd.f32 0.0, %v509
    %v511 = vpop.f32.mrb[0].mxu0
    %v512 = vadd.f32 0.0, %v511
    %v513 = vpop.f32.mrb[0].mxu0
    %v514 = vpop.f32.mrb[0].mxu0
    %515 = vdwg.mxu0
    %v548 = vunpack.c.l.b16 %v169
    %v549 = vunpack.c.h.b16 %v169
    %v550 = vunpack.c.l.b16 %v170
    %v551 = vunpack.c.h.b16 %v170
    %v552 = vunpack.c.l.b16 %v171
    %v553 = vunpack.c.h.b16 %v171
    %v554 = vunpack.c.l.b16 %v172
    %v555 = vunpack.c.h.b16 %v172
    %v556 = vunpack.c.l.b16 %v173
    %v557 = vunpack.c.h.b16 %v173
    %v558 = vunpack.c.l.b16 %v174
    %v559 = vunpack.c.h.b16 %v174
    %v560 = vunpack.c.l.b16 %v175
    %v561 = vunpack.c.h.b16 %v175
    %v562 = vunpack.c.l.b16 %v176
    %v563 = vunpack.c.h.b16 %v176
    %v564 = vunpack.c.l.b16 %v177
    %v565 = vunpack.c.h.b16 %v177
    %v566 = vunpack.c.l.b16 %v178
    %v567 = vunpack.c.h.b16 %v178
    %v568 = vunpack.c.l.b16 %v179
    %v569 = vunpack.c.h.b16 %v179
    %v570 = vunpack.c.l.b16 %v180
    %v571 = vunpack.c.h.b16 %v180
    %v572 = vunpack.c.l.b16 %v181
    %v573 = vunpack.c.h.b16 %v181
    %v574 = vunpack.c.l.b16 %v182
    %v575 = vunpack.c.h.b16 %v182
    %v576 = vunpack.c.l.b16 %v183
    %v577 = vunpack.c.h.b16 %v183
    %v578 = vunpack.c.l.b16 %v184
    %v579 = vunpack.c.h.b16 %v184
    %v580 = vunpack.c.l.b16 %v185
    %v581 = vunpack.c.h.b16 %v185
    %v582 = vunpack.c.l.b16 %v186
    %v583 = vunpack.c.h.b16 %v186
    %v584 = vunpack.c.l.b16 %v187
    %v585 = vunpack.c.h.b16 %v187
    %v586 = vunpack.c.l.b16 %v188
    %v587 = vunpack.c.h.b16 %v188
    %v588 = vunpack.c.l.b16 %v189
    %v589 = vunpack.c.h.b16 %v189
    %v590 = vunpack.c.l.b16 %v190
    %v591 = vunpack.c.h.b16 %v190
    %v592 = vunpack.c.l.b16 %v191
    %v593 = vunpack.c.h.b16 %v191
    %v594 = vunpack.c.l.b16 %v192
    %v595 = vunpack.c.h.b16 %v192
    %v596 = vunpack.c.l.b16 %v193
    %v597 = vunpack.c.h.b16 %v193
    %v598 = vunpack.c.l.b16 %v194
    %v599 = vunpack.c.h.b16 %v194
    %v600 = vunpack.c.l.b16 %v195
    %v601 = vunpack.c.h.b16 %v195
    %v602 = vunpack.c.l.b16 %v196
    %v603 = vunpack.c.h.b16 %v196
    %v604 = vunpack.c.l.b16 %v197
    %v605 = vunpack.c.h.b16 %v197
    %v606 = vunpack.c.l.b16 %v198
    %v607 = vunpack.c.h.b16 %v198
    %v608 = vunpack.c.l.b16 %v199
    %v609 = vunpack.c.h.b16 %v199
    %v610 = vunpack.c.l.b16 %v200
    %v611 = vunpack.c.h.b16 %v200
    %v612 = vpack.c.b16 %v550, %v548
    %v613 = vpack.c.b16 %v551, %v549
    %v614 = vpack.c.b16 %v554, %v552
    %v615 = vpack.c.b16 %v555, %v553
    %v616 = vpack.c.b16 %v558, %v556
    %v617 = vpack.c.b16 %v559, %v557
    %v618 = vpack.c.b16 %v562, %v560
    %v619 = vpack.c.b16 %v563, %v561
    %v620 = vpack.c.b16 %v566, %v564
    %v621 = vpack.c.b16 %v567, %v565
    %v622 = vpack.c.b16 %v570, %v568
    %v623 = vpack.c.b16 %v571, %v569
    %v624 = vpack.c.b16 %v574, %v572
    %v625 = vpack.c.b16 %v575, %v573
    %v626 = vpack.c.b16 %v578, %v576
    %v627 = vpack.c.b16 %v579, %v577
    %v628 = vpack.c.b16 %v582, %v580
    %v629 = vpack.c.b16 %v583, %v581
    %v630 = vpack.c.b16 %v586, %v584
    %v631 = vpack.c.b16 %v587, %v585
    %v632 = vpack.c.b16 %v590, %v588
    %v633 = vpack.c.b16 %v591, %v589
    %v634 = vpack.c.b16 %v594, %v592
    %v635 = vpack.c.b16 %v595, %v593
    %v636 = vpack.c.b16 %v598, %v596
    %v637 = vpack.c.b16 %v599, %v597
    %v638 = vpack.c.b16 %v602, %v600
    %v639 = vpack.c.b16 %v603, %v601
    %v640 = vpack.c.b16 %v606, %v604
    %v641 = vpack.c.b16 %v607, %v605
    %v642 = vpack.c.b16 %v610, %v608
    %v643 = vpack.c.b16 %v611, %v609
    %676 = vmatprep.subr.bf16.mxu0 %v613
    %677 = vmatpush1.bf16.msra.mxu0 %v612
    %678 = vmatprep.subr.bf16.mxu0 %v615
    %679 = vmatpush1.bf16.msra.mxu0 %v614
    %680 = vmatprep.subr.bf16.mxu0 %v617
    %681 = vmatpush1.bf16.msra.mxu0 %v616
    %682 = vmatprep.subr.bf16.mxu0 %v619
    %683 = vmatpush1.bf16.msra.mxu0 %v618
    %684 = vmatprep.subr.bf16.mxu0 %v621
    %685 = vmatpush1.bf16.msra.mxu0 %v620
    %686 = vmatprep.subr.bf16.mxu0 %v623
    %687 = vmatpush1.bf16.msra.mxu0 %v622
    %688 = vmatprep.subr.bf16.mxu0 %v625
    %689 = vmatpush1.bf16.msra.mxu0 %v624
    %690 = vmatprep.subr.bf16.mxu0 %v627
    %691 = vmatpush1.bf16.msra.mxu0 %v626
    %692 = vmatprep.subr.bf16.mxu0 %v629
    %693 = vmatpush1.bf16.msra.mxu0 %v628
    %694 = vmatprep.subr.bf16.mxu0 %v631
    %695 = vmatpush1.bf16.msra.mxu0 %v630
    %696 = vmatprep.subr.bf16.mxu0 %v633
    %697 = vmatpush1.bf16.msra.mxu0 %v632
    %698 = vmatprep.subr.bf16.mxu0 %v635
    %699 = vmatpush1.bf16.msra.mxu0 %v634
    %700 = vmatprep.subr.bf16.mxu0 %v637
    %701 = vmatpush1.bf16.msra.mxu0 %v636
    %702 = vmatprep.subr.bf16.mxu0 %v639
    %703 = vmatpush1.bf16.msra.mxu0 %v638
    %704 = vmatprep.subr.bf16.mxu0 %v641
    %705 = vmatpush1.bf16.msra.mxu0 %v640
    %706 = vmatprep.subr.bf16.mxu0 %v643
    %707 = vmatpush1.bf16.msra.mxu0 %v642
    %708 = vmatprep.mubr.bf16.mxu0 %v164
    %709 = vmatmul.mubr.bf16.gmra.mrb[0].mxu0 %v163
    %v710 = vpop.f32.mrb[0].mxu0
    %v711 = vadd.f32 %v490, %v710
    %v712 = vpop.f32.mrb[0].mxu0
    %v713 = vadd.f32 %v492, %v712
    %v714 = vpop.f32.mrb[0].mxu0
    %v715 = vadd.f32 %v494, %v714
    %v716 = vpop.f32.mrb[0].mxu0
    %v717 = vadd.f32 %v496, %v716
    %718 = vmatprep.mubr.bf16.mxu0 %v166
    %719 = vmatmul.mubr.bf16.gmra.mrb[0].mxu0 %v165
    %v720 = vpop.f32.mrb[0].mxu0
    %v721 = vadd.f32 %v500, %v720
    %v722 = vpop.f32.mrb[0].mxu0
    %v723 = vadd.f32 %v502, %v722
    %v724 = vpop.f32.mrb[0].mxu0
    %v725 = vadd.f32 %v504, %v724
    %v726 = vpop.f32.mrb[0].mxu0
    %v727 = vadd.f32 %v506, %v726
    %728 = vmatprep.mubr.bf16.mxu0 %v168
    %729 = vmatmul.mubr.bf16.gmra.mrb[0].mxu0 %v167
    %v730 = vpop.f32.mrb[0].mxu0
    %v731 = vadd.f32 %v510, %v730
    %v732 = vpop.f32.mrb[0].mxu0
    %v733 = vadd.f32 %v512, %v732
    %v734 = vpop.f32.mrb[0].mxu0
    %v735 = vpop.f32.mrb[0].mxu0
    %736 = vdwg.mxu0
    %v737 = vld [vmem:[#allocation2] sm:$0xfc]
    %v738 = vld [vmem:[#allocation2 + $0x8] sm:$0xfc]
    %v739 = vld [vmem:[#allocation2 + $0x50] sm:$0x3]
    %v740 = vld [vmem:[#allocation2 + $0x58] sm:$0x3]
    %v741 = vpack.c.bf16 %v155, %v737
    %v742 = vpack.c.bf16 %v156, %v738
    %v743 = vpack.c.bf16 %v739, %v161
    %v744 = vpack.c.bf16 %v740, %v162
    %s745 = scalar_lea.vmem [#allocation7], 512
    %v746 = vld [vmem:[%s745] sm:$0xff]
    %v747 = vld [vmem:[%s745 + $0x8] sm:$0xff]
    %v748 = vld [vmem:[%s745 + $0x10] sm:$0xff]
    %v749 = vld [vmem:[%s745 + $0x18] sm:$0xff]
    %v750 = vld [vmem:[%s745 + $0x20] sm:$0xff]
    %v751 = vld [vmem:[%s745 + $0x28] sm:$0xff]
    %v752 = vld [vmem:[%s745 + $0x30] sm:$0xff]
    %v753 = vld [vmem:[%s745 + $0x38] sm:$0xff]
    %v754 = vld [vmem:[%s745 + $0x40] sm:$0xff]
    %v755 = vld [vmem:[%s745 + $0x48] sm:$0xff]
    %v756 = vld [vmem:[%s745 + $0x50] sm:$0xff]
    %v757 = vld [vmem:[%s745 + $0x58] sm:$0xff]
    %v758 = vld [vmem:[%s745 + $0x60] sm:$0xff]
    %v759 = vld [vmem:[%s745 + $0x68] sm:$0xff]
    %v760 = vld [vmem:[%s745 + $0x70] sm:$0xff]
    %v761 = vld [vmem:[%s745 + $0x78] sm:$0xff]
    %v762 = vld [vmem:[%s745 + $0x80] sm:$0xff]
    %v763 = vld [vmem:[%s745 + $0x88] sm:$0xff]
    %v764 = vld [vmem:[%s745 + $0x90] sm:$0xff]
    %v765 = vld [vmem:[%s745 + $0x98] sm:$0xff]
    %v766 = vld [vmem:[%s745 + $0xa0] sm:$0xff]
    %v767 = vld [vmem:[%s745 + $0xa8] sm:$0xff]
    %v768 = vld [vmem:[%s745 + $0xb0] sm:$0xff]
    %v769 = vld [vmem:[%s745 + $0xb8] sm:$0xff]
    %v770 = vld [vmem:[%s745 + $0xc0] sm:$0xff]
    %v771 = vld [vmem:[%s745 + $0xc8] sm:$0xff]
    %v772 = vld [vmem:[%s745 + $0xd0] sm:$0xff]
    %v773 = vld [vmem:[%s745 + $0xd8] sm:$0xff]
    %v774 = vld [vmem:[%s745 + $0xe0] sm:$0xff]
    %v775 = vld [vmem:[%s745 + $0xe8] sm:$0xff]
    %v776 = vld [vmem:[%s745 + $0xf0] sm:$0xff]
    %v777 = vld [vmem:[%s745 + $0xf8] sm:$0xff]
    %vm784 = vcmask 1046528
    %v785 = vrot.slane %v741, 1
    %v786 = vrot.slane %v165, 1
    %v787 = vsel %vm784, %v785, %v786
    %v788 = vrot.slane %v742, 1
    %v789 = vrot.slane %v166, 1
    %v790 = vsel %vm784, %v788, %v789
    %v791 = vrot.slane %v743, 1
    %v792 = vsel %vm784, %v786, %v791
    %v793 = vrot.slane %v744, 1
    %v794 = vsel %vm784, %v789, %v793
    %v833 = vunpack.c.l.b16 %v746
    %v834 = vunpack.c.h.b16 %v746
    %v835 = vunpack.c.l.b16 %v747
    %v836 = vunpack.c.h.b16 %v747
    %v837 = vunpack.c.l.b16 %v748
    %v838 = vunpack.c.h.b16 %v748
    %v839 = vunpack.c.l.b16 %v749
    %v840 = vunpack.c.h.b16 %v749
    %v841 = vunpack.c.l.b16 %v750
    %v842 = vunpack.c.h.b16 %v750
    %v843 = vunpack.c.l.b16 %v751
    %v844 = vunpack.c.h.b16 %v751
    %v845 = vunpack.c.l.b16 %v752
    %v846 = vunpack.c.h.b16 %v752
    %v847 = vunpack.c.l.b16 %v753
    %v848 = vunpack.c.h.b16 %v753
    %v849 = vunpack.c.l.b16 %v754
    %v850 = vunpack.c.h.b16 %v754
    %v851 = vunpack.c.l.b16 %v755
    %v852 = vunpack.c.h.b16 %v755
    %v853 = vunpack.c.l.b16 %v756
    %v854 = vunpack.c.h.b16 %v756
    %v855 = vunpack.c.l.b16 %v757
    %v856 = vunpack.c.h.b16 %v757
    %v857 = vunpack.c.l.b16 %v758
    %v858 = vunpack.c.h.b16 %v758
    %v859 = vunpack.c.l.b16 %v759
    %v860 = vunpack.c.h.b16 %v759
    %v861 = vunpack.c.l.b16 %v760
    %v862 = vunpack.c.h.b16 %v760
    %v863 = vunpack.c.l.b16 %v761
    %v864 = vunpack.c.h.b16 %v761
    %v865 = vunpack.c.l.b16 %v762
    %v866 = vunpack.c.h.b16 %v762
    %v867 = vunpack.c.l.b16 %v763
    %v868 = vunpack.c.h.b16 %v763
    %v869 = vunpack.c.l.b16 %v764
    %v870 = vunpack.c.h.b16 %v764
    %v871 = vunpack.c.l.b16 %v765
    %v872 = vunpack.c.h.b16 %v765
    %v873 = vunpack.c.l.b16 %v766
    %v874 = vunpack.c.h.b16 %v766
    %v875 = vunpack.c.l.b16 %v767
    %v876 = vunpack.c.h.b16 %v767
    %v877 = vunpack.c.l.b16 %v768
    %v878 = vunpack.c.h.b16 %v768
    %v879 = vunpack.c.l.b16 %v769
    %v880 = vunpack.c.h.b16 %v769
    %v881 = vunpack.c.l.b16 %v770
    %v882 = vunpack.c.h.b16 %v770
    %v883 = vunpack.c.l.b16 %v771
    %v884 = vunpack.c.h.b16 %v771
    %v885 = vunpack.c.l.b16 %v772
    %v886 = vunpack.c.h.b16 %v772
    %v887 = vunpack.c.l.b16 %v773
    %v888 = vunpack.c.h.b16 %v773
    %v889 = vunpack.c.l.b16 %v774
    %v890 = vunpack.c.h.b16 %v774
    %v891 = vunpack.c.l.b16 %v775
    %v892 = vunpack.c.h.b16 %v775
    %v893 = vunpack.c.l.b16 %v776
    %v894 = vunpack.c.h.b16 %v776
    %v895 = vunpack.c.l.b16 %v777
    %v896 = vunpack.c.h.b16 %v777
    %v897 = vpack.c.b16 %v835, %v833
    %v898 = vpack.c.b16 %v836, %v834
    %v899 = vpack.c.b16 %v839, %v837
    %v900 = vpack.c.b16 %v840, %v838
    %v901 = vpack.c.b16 %v843, %v841
    %v902 = vpack.c.b16 %v844, %v842
    %v903 = vpack.c.b16 %v847, %v845
    %v904 = vpack.c.b16 %v848, %v846
    %v905 = vpack.c.b16 %v851, %v849
    %v906 = vpack.c.b16 %v852, %v850
    %v907 = vpack.c.b16 %v855, %v853
    %v908 = vpack.c.b16 %v856, %v854
    %v909 = vpack.c.b16 %v859, %v857
    %v910 = vpack.c.b16 %v860, %v858
    %v911 = vpack.c.b16 %v863, %v861
    %v912 = vpack.c.b16 %v864, %v862
    %v913 = vpack.c.b16 %v867, %v865
    %v914 = vpack.c.b16 %v868, %v866
    %v915 = vpack.c.b16 %v871, %v869
    %v916 = vpack.c.b16 %v872, %v870
    %v917 = vpack.c.b16 %v875, %v873
    %v918 = vpack.c.b16 %v876, %v874
    %v919 = vpack.c.b16 %v879, %v877
    %v920 = vpack.c.b16 %v880, %v878
    %v921 = vpack.c.b16 %v883, %v881
    %v922 = vpack.c.b16 %v884, %v882
    %v923 = vpack.c.b16 %v887, %v885
    %v924 = vpack.c.b16 %v888, %v886
    %v925 = vpack.c.b16 %v891, %v889
    %v926 = vpack.c.b16 %v892, %v890
    %v927 = vpack.c.b16 %v895, %v893
    %v928 = vpack.c.b16 %v896, %v894
    %961 = vmatprep.subr.bf16.mxu0 %v898
    %962 = vmatpush1.bf16.msra.mxu0 %v897
    %963 = vmatprep.subr.bf16.mxu0 %v900
    %964 = vmatpush1.bf16.msra.mxu0 %v899
    %965 = vmatprep.subr.bf16.mxu0 %v902
    %966 = vmatpush1.bf16.msra.mxu0 %v901
    %967 = vmatprep.subr.bf16.mxu0 %v904
    %968 = vmatpush1.bf16.msra.mxu0 %v903
    %969 = vmatprep.subr.bf16.mxu0 %v906
    %970 = vmatpush1.bf16.msra.mxu0 %v905
    %971 = vmatprep.subr.bf16.mxu0 %v908
    %972 = vmatpush1.bf16.msra.mxu0 %v907
    %973 = vmatprep.subr.bf16.mxu0 %v910
    %974 = vmatpush1.bf16.msra.mxu0 %v909
    %975 = vmatprep.subr.bf16.mxu0 %v912
    %976 = vmatpush1.bf16.msra.mxu0 %v911
    %977 = vmatprep.subr.bf16.mxu0 %v914
    %978 = vmatpush1.bf16.msra.mxu0 %v913
    %979 = vmatprep.subr.bf16.mxu0 %v916
    %980 = vmatpush1.bf16.msra.mxu0 %v915
    %981 = vmatprep.subr.bf16.mxu0 %v918
    %982 = vmatpush1.bf16.msra.mxu0 %v917
    %983 = vmatprep.subr.bf16.mxu0 %v920
    %984 = vmatpush1.bf16.msra.mxu0 %v919
    %985 = vmatprep.subr.bf16.mxu0 %v922
    %986 = vmatpush1.bf16.msra.mxu0 %v921
    %987 = vmatprep.subr.bf16.mxu0 %v924
    %988 = vmatpush1.bf16.msra.mxu0 %v923
    %989 = vmatprep.subr.bf16.mxu0 %v926
    %990 = vmatpush1.bf16.msra.mxu0 %v925
    %991 = vmatprep.subr.bf16.mxu0 %v928
    %992 = vmatpush1.bf16.msra.mxu0 %v927
    %993 = vmatprep.mubr.bf16.mxu0 %v790
    %994 = vmatmul.mubr.bf16.gmra.mrb[0].mxu0 %v787
    %v995 = vpop.f32.mrb[0].mxu0
    %v996 = vadd.f32 0.0, %v995
    %v997 = vpop.f32.mrb[0].mxu0
    %v998 = vadd.f32 0.0, %v997
    %v999 = vpop.f32.mrb[0].mxu0
    %v1000 = vadd.f32 0.0, %v999
    %v1001 = vpop.f32.mrb[0].mxu0
    %v1002 = vadd.f32 0.0, %v1001
    %1003 = vmatprep.mubr.bf16.mxu0 %v794
    %1004 = vmatmul.mubr.bf16.gmra.mrb[0].mxu0 %v792
    %v1005 = vpop.f32.mrb[0].mxu0
    %v1006 = vadd.f32 0.0, %v1005
    %v1007 = vpop.f32.mrb[0].mxu0
    %v1008 = vadd.f32 0.0, %v1007
    %v1009 = vpop.f32.mrb[0].mxu0
    %v1010 = vadd.f32 0.0, %v1009
    %v1011 = vpop.f32.mrb[0].mxu0
    %v1012 = vadd.f32 0.0, %v1011
    %1013 = vmatprep.mubr.bf16.mxu0 %v793
    %1014 = vmatmul.mubr.bf16.gmra.mrb[0].mxu0 %v791
    %v1015 = vpop.f32.mrb[0].mxu0
    %v1016 = vadd.f32 0.0, %v1015
    %v1017 = vpop.f32.mrb[0].mxu0
    %v1018 = vadd.f32 0.0, %v1017
    %v1019 = vpop.f32.mrb[0].mxu0
    %v1020 = vpop.f32.mrb[0].mxu0
    %1021 = vdwg.mxu0
    %v1022 = vadd.f32 %v711, %v996
    %v1023 = vadd.f32 %v713, %v998
    %v1024 = vadd.f32 %v715, %v1000
    %v1025 = vadd.f32 %v717, %v1002
    %v1026 = vadd.f32 %v721, %v1006
    %v1027 = vadd.f32 %v723, %v1008
    %v1028 = vadd.f32 %v725, %v1010
    %v1029 = vadd.f32 %v727, %v1012
    %v1030 = vadd.f32 %v731, %v1016
    %v1031 = vadd.f32 %v733, %v1018
    %v1032 = vld [vmem:[#allocation2] sm:$0xf8]
    %v1033 = vld [vmem:[#allocation2 + $0x8] sm:$0xf8]
    %v1034 = vld [vmem:[#allocation2 + $0x50] sm:$0x7]
    %v1035 = vld [vmem:[#allocation2 + $0x58] sm:$0x7]
    %v1036 = vpack.c.bf16 %v155, %v1032
    %v1037 = vpack.c.bf16 %v156, %v1033
    %v1038 = vpack.c.bf16 %v1034, %v161
    %v1039 = vpack.c.bf16 %v1035, %v162
    %s1040 = scalar_lea.vmem [#allocation7], 768
    %v1041 = vld [vmem:[%s1040] sm:$0xff]
    %v1042 = vld [vmem:[%s1040 + $0x8] sm:$0xff]
    %v1043 = vld [vmem:[%s1040 + $0x10] sm:$0xff]
    %v1044 = vld [vmem:[%s1040 + $0x18] sm:$0xff]
    %v1045 = vld [vmem:[%s1040 + $0x20] sm:$0xff]
    %v1046 = vld [vmem:[%s1040 + $0x28] sm:$0xff]
    %v1047 = vld [vmem:[%s1040 + $0x30] sm:$0xff]
    %v1048 = vld [vmem:[%s1040 + $0x38] sm:$0xff]
    %v1049 = vld [vmem:[%s1040 + $0x40] sm:$0xff]
    %v1050 = vld [vmem:[%s1040 + $0x48] sm:$0xff]
    %v1051 = vld [vmem:[%s1040 + $0x50] sm:$0xff]
    %v1052 = vld [vmem:[%s1040 + $0x58] sm:$0xff]
    %v1053 = vld [vmem:[%s1040 + $0x60] sm:$0xff]
    %v1054 = vld [vmem:[%s1040 + $0x68] sm:$0xff]
    %v1055 = vld [vmem:[%s1040 + $0x70] sm:$0xff]
    %v1056 = vld [vmem:[%s1040 + $0x78] sm:$0xff]
    %v1057 = vld [vmem:[%s1040 + $0x80] sm:$0xff]
    %v1058 = vld [vmem:[%s1040 + $0x88] sm:$0xff]
    %v1059 = vld [vmem:[%s1040 + $0x90] sm:$0xff]
    %v1060 = vld [vmem:[%s1040 + $0x98] sm:$0xff]
    %v1061 = vld [vmem:[%s1040 + $0xa0] sm:$0xff]
    %v1062 = vld [vmem:[%s1040 + $0xa8] sm:$0xff]
    %v1063 = vld [vmem:[%s1040 + $0xb0] sm:$0xff]
    %v1064 = vld [vmem:[%s1040 + $0xb8] sm:$0xff]
    %v1065 = vld [vmem:[%s1040 + $0xc0] sm:$0xff]
    %v1066 = vld [vmem:[%s1040 + $0xc8] sm:$0xff]
    %v1067 = vld [vmem:[%s1040 + $0xd0] sm:$0xff]
    %v1068 = vld [vmem:[%s1040 + $0xd8] sm:$0xff]
    %v1069 = vld [vmem:[%s1040 + $0xe0] sm:$0xff]
    %v1070 = vld [vmem:[%s1040 + $0xe8] sm:$0xff]
    %v1071 = vld [vmem:[%s1040 + $0xf0] sm:$0xff]
    %v1072 = vld [vmem:[%s1040 + $0xf8] sm:$0xff]
    %vm1073 = vsmask.f32 6400
    %v1075 = vshrl.u32 %v1036, 16
    %v1077 = vrot.slane %v1075, 1
    %v1078 = vshll.u32 %v1036, 16
    %v1080 = vrot.slane %v1078, 2
    %v1081 = vor.u32 %v1077, %v1080
    %v1082 = vrot.slane %v267, 1
    %v1083 = vrot.slane %v251, 2
    %v1084 = vor.u32 %v1082, %v1083
    %v1085 = vsel %vm1073, %v1081, %v1084
    %v1087 = vshrl.u32 %v1037, 16
    %v1089 = vrot.slane %v1087, 1
    %v1090 = vshll.u32 %v1037, 16
    %v1092 = vrot.slane %v1090, 2
    %v1093 = vor.u32 %v1089, %v1092
    %v1094 = vrot.slane %v275, 1
    %v1095 = vrot.slane %v263, 2
    %v1096 = vor.u32 %v1094, %v1095
    %v1097 = vsel %vm1073, %v1093, %v1096
    %v1099 = vshrl.u32 %v1038, 16
    %v1101 = vrot.slane %v1099, 1
    %v1102 = vshll.u32 %v1038, 16
    %v1104 = vrot.slane %v1102, 2
    %v1105 = vor.u32 %v1101, %v1104
    %v1106 = vsel %vm1073, %v1084, %v1105
    %v1108 = vshrl.u32 %v1039, 16
    %v1110 = vrot.slane %v1108, 1
    %v1111 = vshll.u32 %v1039, 16
    %v1113 = vrot.slane %v1111, 2
    %v1114 = vor.u32 %v1110, %v1113
    %v1115 = vsel %vm1073, %v1096, %v1114
    %v1154 = vunpack.c.l.b16 %v1041
    %v1155 = vunpack.c.h.b16 %v1041
    %v1156 = vunpack.c.l.b16 %v1042
    %v1157 = vunpack.c.h.b16 %v1042
    %v1158 = vunpack.c.l.b16 %v1043
    %v1159 = vunpack.c.h.b16 %v1043
    %v1160 = vunpack.c.l.b16 %v1044
    %v1161 = vunpack.c.h.b16 %v1044
    %v1162 = vunpack.c.l.b16 %v1045
    %v1163 = vunpack.c.h.b16 %v1045
    %v1164 = vunpack.c.l.b16 %v1046
    %v1165 = vunpack.c.h.b16 %v1046
    %v1166 = vunpack.c.l.b16 %v1047
    %v1167 = vunpack.c.h.b16 %v1047
    %v1168 = vunpack.c.l.b16 %v1048
    %v1169 = vunpack.c.h.b16 %v1048
    %v1170 = vunpack.c.l.b16 %v1049
    %v1171 = vunpack.c.h.b16 %v1049
    %v1172 = vunpack.c.l.b16 %v1050
    %v1173 = vunpack.c.h.b16 %v1050
    %v1174 = vunpack.c.l.b16 %v1051
    %v1175 = vunpack.c.h.b16 %v1051
    %v1176 = vunpack.c.l.b16 %v1052
    %v1177 = vunpack.c.h.b16 %v1052
    %v1178 = vunpack.c.l.b16 %v1053
    %v1179 = vunpack.c.h.b16 %v1053
    %v1180 = vunpack.c.l.b16 %v1054
    %v1181 = vunpack.c.h.b16 %v1054
    %v1182 = vunpack.c.l.b16 %v1055
    %v1183 = vunpack.c.h.b16 %v1055
    %v1184 = vunpack.c.l.b16 %v1056
    %v1185 = vunpack.c.h.b16 %v1056
    %v1186 = vunpack.c.l.b16 %v1057
    %v1187 = vunpack.c.h.b16 %v1057
    %v1188 = vunpack.c.l.b16 %v1058
    %v1189 = vunpack.c.h.b16 %v1058
    %v1190 = vunpack.c.l.b16 %v1059
    %v1191 = vunpack.c.h.b16 %v1059
    %v1192 = vunpack.c.l.b16 %v1060
    %v1193 = vunpack.c.h.b16 %v1060
    %v1194 = vunpack.c.l.b16 %v1061
    %v1195 = vunpack.c.h.b16 %v1061
    %v1196 = vunpack.c.l.b16 %v1062
    %v1197 = vunpack.c.h.b16 %v1062
    %v1198 = vunpack.c.l.b16 %v1063
    %v1199 = vunpack.c.h.b16 %v1063
    %v1200 = vunpack.c.l.b16 %v1064
    %v1201 = vunpack.c.h.b16 %v1064
    %v1202 = vunpack.c.l.b16 %v1065
    %v1203 = vunpack.c.h.b16 %v1065
    %v1204 = vunpack.c.l.b16 %v1066
    %v1205 = vunpack.c.h.b16 %v1066
    %v1206 = vunpack.c.l.b16 %v1067
    %v1207 = vunpack.c.h.b16 %v1067
    %v1208 = vunpack.c.l.b16 %v1068
    %v1209 = vunpack.c.h.b16 %v1068
    %v1210 = vunpack.c.l.b16 %v1069
    %v1211 = vunpack.c.h.b16 %v1069
    %v1212 = vunpack.c.l.b16 %v1070
    %v1213 = vunpack.c.h.b16 %v1070
    %v1214 = vunpack.c.l.b16 %v1071
    %v1215 = vunpack.c.h.b16 %v1071
    %v1216 = vunpack.c.l.b16 %v1072
    %v1217 = vunpack.c.h.b16 %v1072
    %v1218 = vpack.c.b16 %v1156, %v1154
    %v1219 = vpack.c.b16 %v1157, %v1155
    %v1220 = vpack.c.b16 %v1160, %v1158
    %v1221 = vpack.c.b16 %v1161, %v1159
    %v1222 = vpack.c.b16 %v1164, %v1162
    %v1223 = vpack.c.b16 %v1165, %v1163
    %v1224 = vpack.c.b16 %v1168, %v1166
    %v1225 = vpack.c.b16 %v1169, %v1167
    %v1226 = vpack.c.b16 %v1172, %v1170
    %v1227 = vpack.c.b16 %v1173, %v1171
    %v1228 = vpack.c.b16 %v1176, %v1174
    %v1229 = vpack.c.b16 %v1177, %v1175
    %v1230 = vpack.c.b16 %v1180, %v1178
    %v1231 = vpack.c.b16 %v1181, %v1179
    %v1232 = vpack.c.b16 %v1184, %v1182
    %v1233 = vpack.c.b16 %v1185, %v1183
    %v1234 = vpack.c.b16 %v1188, %v1186
    %v1235 = vpack.c.b16 %v1189, %v1187
    %v1236 = vpack.c.b16 %v1192, %v1190
    %v1237 = vpack.c.b16 %v1193, %v1191
    %v1238 = vpack.c.b16 %v1196, %v1194
    %v1239 = vpack.c.b16 %v1197, %v1195
    %v1240 = vpack.c.b16 %v1200, %v1198
    %v1241 = vpack.c.b16 %v1201, %v1199
    %v1242 = vpack.c.b16 %v1204, %v1202
    %v1243 = vpack.c.b16 %v1205, %v1203
    %v1244 = vpack.c.b16 %v1208, %v1206
    %v1245 = vpack.c.b16 %v1209, %v1207
    %v1246 = vpack.c.b16 %v1212, %v1210
    %v1247 = vpack.c.b16 %v1213, %v1211
    %v1248 = vpack.c.b16 %v1216, %v1214
    %v1249 = vpack.c.b16 %v1217, %v1215
    %1282 = vmatprep.subr.bf16.mxu0 %v1219
    %1283 = vmatpush1.bf16.msra.mxu0 %v1218
    %1284 = vmatprep.subr.bf16.mxu0 %v1221
    %1285 = vmatpush1.bf16.msra.mxu0 %v1220
    %1286 = vmatprep.subr.bf16.mxu0 %v1223
    %1287 = vmatpush1.bf16.msra.mxu0 %v1222
    %1288 = vmatprep.subr.bf16.mxu0 %v1225
    %1289 = vmatpush1.bf16.msra.mxu0 %v1224
    %1290 = vmatprep.subr.bf16.mxu0 %v1227
    %1291 = vmatpush1.bf16.msra.mxu0 %v1226
    %1292 = vmatprep.subr.bf16.mxu0 %v1229
    %1293 = vmatpush1.bf16.msra.mxu0 %v1228
    %1294 = vmatprep.subr.bf16.mxu0 %v1231
    %1295 = vmatpush1.bf16.msra.mxu0 %v1230
    %1296 = vmatprep.subr.bf16.mxu0 %v1233
    %1297 = vmatpush1.bf16.msra.mxu0 %v1232
    %1298 = vmatprep.subr.bf16.mxu0 %v1235
    %1299 = vmatpush1.bf16.msra.mxu0 %v1234
    %1300 = vmatprep.subr.bf16.mxu0 %v1237
    %1301 = vmatpush1.bf16.msra.mxu0 %v1236
    %1302 = vmatprep.subr.bf16.mxu0 %v1239
    %1303 = vmatpush1.bf16.msra.mxu0 %v1238
    %1304 = vmatprep.subr.bf16.mxu0 %v1241
    %1305 = vmatpush1.bf16.msra.mxu0 %v1240
    %1306 = vmatprep.subr.bf16.mxu0 %v1243
    %1307 = vmatpush1.bf16.msra.mxu0 %v1242
    %1308 = vmatprep.subr.bf16.mxu0 %v1245
    %1309 = vmatpush1.bf16.msra.mxu0 %v1244
    %1310 = vmatprep.subr.bf16.mxu0 %v1247
    %1311 = vmatpush1.bf16.msra.mxu0 %v1246
    %1312 = vmatprep.subr.bf16.mxu0 %v1249
    %1313 = vmatpush1.bf16.msra.mxu0 %v1248
    %1314 = vmatprep.mubr.bf16.mxu0 %v1097
    %1315 = vmatmul.mubr.bf16.gmra.mrb[0].mxu0 %v1085
    %v1316 = vpop.f32.mrb[0].mxu0
    %v1317 = vadd.f32 0.0, %v1316
    %v1318 = vpop.f32.mrb[0].mxu0
    %v1319 = vadd.f32 0.0, %v1318
    %v1320 = vpop.f32.mrb[0].mxu0
    %v1321 = vadd.f32 0.0, %v1320
    %v1322 = vpop.f32.mrb[0].mxu0
    %v1323 = vadd.f32 0.0, %v1322
    %1324 = vmatprep.mubr.bf16.mxu0 %v1115
    %1325 = vmatmul.mubr.bf16.gmra.mrb[0].mxu0 %v1106
    %v1326 = vpop.f32.mrb[0].mxu0
    %v1327 = vadd.f32 0.0, %v1326
    %v1328 = vpop.f32.mrb[0].mxu0
    %v1329 = vadd.f32 0.0, %v1328
    %v1330 = vpop.f32.mrb[0].mxu0
    %v1331 = vadd.f32 0.0, %v1330
    %v1332 = vpop.f32.mrb[0].mxu0
    %v1333 = vadd.f32 0.0, %v1332
    %1334 = vmatprep.mubr.bf16.mxu0 %v1114
    %1335 = vmatmul.mubr.bf16.gmra.mrb[0].mxu0 %v1105
    %v1336 = vpop.f32.mrb[0].mxu0
    %v1337 = vadd.f32 0.0, %v1336
    %v1338 = vpop.f32.mrb[0].mxu0
    %v1339 = vadd.f32 0.0, %v1338
    %v1340 = vpop.f32.mrb[0].mxu0
    %v1341 = vpop.f32.mrb[0].mxu0
    %1342 = vdwg.mxu0
    %v1343 = vadd.f32 %v1022, %v1317
    %v1344 = vadd.f32 %v1023, %v1319
    %v1345 = vadd.f32 %v1024, %v1321
    %v1346 = vadd.f32 %v1025, %v1323
    %v1347 = vadd.f32 %v1026, %v1327
    %v1348 = vadd.f32 %v1027, %v1329
    %v1349 = vadd.f32 %v1028, %v1331
    %v1350 = vadd.f32 %v1029, %v1333
    %v1351 = vadd.f32 %v1030, %v1337
    %v1352 = vadd.f32 %v1031, %v1339
    %v1353 = vld [vmem:[#allocation2] sm:$0xf0]
    %v1354 = vld [vmem:[#allocation2 + $0x8] sm:$0xf0]
    %v1355 = vld [vmem:[#allocation2 + $0x50] sm:$0xf]
    %v1356 = vld [vmem:[#allocation2 + $0x58] sm:$0xf]
    %v1357 = vpack.c.bf16 %v155, %v1353
    %v1358 = vpack.c.bf16 %v156, %v1354
    %v1359 = vpack.c.bf16 %v1355, %v161
    %v1360 = vpack.c.bf16 %v1356, %v162
    %s1361 = scalar_lea.vmem [#allocation7], 1024
    %v1362 = vld [vmem:[%s1361] sm:$0xff]
    %v1363 = vld [vmem:[%s1361 + $0x8] sm:$0xff]
    %v1364 = vld [vmem:[%s1361 + $0x10] sm:$0xff]
    %v1365 = vld [vmem:[%s1361 + $0x18] sm:$0xff]
    %v1366 = vld [vmem:[%s1361 + $0x20] sm:$0xff]
    %v1367 = vld [vmem:[%s1361 + $0x28] sm:$0xff]
    %v1368 = vld [vmem:[%s1361 + $0x30] sm:$0xff]
    %v1369 = vld [vmem:[%s1361 + $0x38] sm:$0xff]
    %v1370 = vld [vmem:[%s1361 + $0x40] sm:$0xff]
    %v1371 = vld [vmem:[%s1361 + $0x48] sm:$0xff]
    %v1372 = vld [vmem:[%s1361 + $0x50] sm:$0xff]
    %v1373 = vld [vmem:[%s1361 + $0x58] sm:$0xff]
    %v1374 = vld [vmem:[%s1361 + $0x60] sm:$0xff]
    %v1375 = vld [vmem:[%s1361 + $0x68] sm:$0xff]
    %v1376 = vld [vmem:[%s1361 + $0x70] sm:$0xff]
    %v1377 = vld [vmem:[%s1361 + $0x78] sm:$0xff]
    %v1378 = vld [vmem:[%s1361 + $0x80] sm:$0xff]
    %v1379 = vld [vmem:[%s1361 + $0x88] sm:$0xff]
    %v1380 = vld [vmem:[%s1361 + $0x90] sm:$0xff]
    %v1381 = vld [vmem:[%s1361 + $0x98] sm:$0xff]
    %v1382 = vld [vmem:[%s1361 + $0xa0] sm:$0xff]
    %v1383 = vld [vmem:[%s1361 + $0xa8] sm:$0xff]
    %v1384 = vld [vmem:[%s1361 + $0xb0] sm:$0xff]
    %v1385 = vld [vmem:[%s1361 + $0xb8] sm:$0xff]
    %v1386 = vld [vmem:[%s1361 + $0xc0] sm:$0xff]
    %v1387 = vld [vmem:[%s1361 + $0xc8] sm:$0xff]
    %v1388 = vld [vmem:[%s1361 + $0xd0] sm:$0xff]
    %v1389 = vld [vmem:[%s1361 + $0xd8] sm:$0xff]
    %v1390 = vld [vmem:[%s1361 + $0xe0] sm:$0xff]
    %v1391 = vld [vmem:[%s1361 + $0xe8] sm:$0xff]
    %v1392 = vld [vmem:[%s1361 + $0xf0] sm:$0xff]
    %v1393 = vld [vmem:[%s1361 + $0xf8] sm:$0xff]
    %vm1398 = vcmask 1045504
    %v1399 = vrot.slane %v1357, 2
    %v1400 = vrot.slane %v165, 2
    %v1401 = vsel %vm1398, %v1399, %v1400
    %v1402 = vrot.slane %v1358, 2
    %v1403 = vrot.slane %v166, 2
    %v1404 = vsel %vm1398, %v1402, %v1403
    %v1405 = vrot.slane %v1359, 2
    %v1406 = vsel %vm1398, %v1400, %v1405
    %v1407 = vrot.slane %v1360, 2
    %v1408 = vsel %vm1398, %v1403, %v1407
    %v1447 = vunpack.c.l.b16 %v1362
    %v1448 = vunpack.c.h.b16 %v1362
    %v1449 = vunpack.c.l.b16 %v1363
    %v1450 = vunpack.c.h.b16 %v1363
    %v1451 = vunpack.c.l.b16 %v1364
    %v1452 = vunpack.c.h.b16 %v1364
    %v1453 = vunpack.c.l.b16 %v1365
    %v1454 = vunpack.c.h.b16 %v1365
    %v1455 = vunpack.c.l.b16 %v1366
    %v1456 = vunpack.c.h.b16 %v1366
    %v1457 = vunpack.c.l.b16 %v1367
    %v1458 = vunpack.c.h.b16 %v1367
    %v1459 = vunpack.c.l.b16 %v1368
    %v1460 = vunpack.c.h.b16 %v1368
    %v1461 = vunpack.c.l.b16 %v1369
    %v1462 = vunpack.c.h.b16 %v1369
    %v1463 = vunpack.c.l.b16 %v1370
    %v1464 = vunpack.c.h.b16 %v1370
    %v1465 = vunpack.c.l.b16 %v1371
    %v1466 = vunpack.c.h.b16 %v1371
    %v1467 = vunpack.c.l.b16 %v1372
    %v1468 = vunpack.c.h.b16 %v1372
    %v1469 = vunpack.c.l.b16 %v1373
    %v1470 = vunpack.c.h.b16 %v1373
    %v1471 = vunpack.c.l.b16 %v1374
    %v1472 = vunpack.c.h.b16 %v1374
    %v1473 = vunpack.c.l.b16 %v1375
    %v1474 = vunpack.c.h.b16 %v1375
    %v1475 = vunpack.c.l.b16 %v1376
    %v1476 = vunpack.c.h.b16 %v1376
    %v1477 = vunpack.c.l.b16 %v1377
    %v1478 = vunpack.c.h.b16 %v1377
    %v1479 = vunpack.c.l.b16 %v1378
    %v1480 = vunpack.c.h.b16 %v1378
    %v1481 = vunpack.c.l.b16 %v1379
    %v1482 = vunpack.c.h.b16 %v1379
    %v1483 = vunpack.c.l.b16 %v1380
    %v1484 = vunpack.c.h.b16 %v1380
    %v1485 = vunpack.c.l.b16 %v1381
    %v1486 = vunpack.c.h.b16 %v1381
    %v1487 = vunpack.c.l.b16 %v1382
    %v1488 = vunpack.c.h.b16 %v1382
    %v1489 = vunpack.c.l.b16 %v1383
    %v1490 = vunpack.c.h.b16 %v1383
    %v1491 = vunpack.c.l.b16 %v1384
    %v1492 = vunpack.c.h.b16 %v1384
    %v1493 = vunpack.c.l.b16 %v1385
    %v1494 = vunpack.c.h.b16 %v1385
    %v1495 = vunpack.c.l.b16 %v1386
    %v1496 = vunpack.c.h.b16 %v1386
    %v1497 = vunpack.c.l.b16 %v1387
    %v1498 = vunpack.c.h.b16 %v1387
    %v1499 = vunpack.c.l.b16 %v1388
    %v1500 = vunpack.c.h.b16 %v1388
    %v1501 = vunpack.c.l.b16 %v1389
    %v1502 = vunpack.c.h.b16 %v1389
    %v1503 = vunpack.c.l.b16 %v1390
    %v1504 = vunpack.c.h.b16 %v1390
    %v1505 = vunpack.c.l.b16 %v1391
    %v1506 = vunpack.c.h.b16 %v1391
    %v1507 = vunpack.c.l.b16 %v1392
    %v1508 = vunpack.c.h.b16 %v1392
    %v1509 = vunpack.c.l.b16 %v1393
    %v1510 = vunpack.c.h.b16 %v1393
    %v1511 = vpack.c.b16 %v1449, %v1447
    %v1512 = vpack.c.b16 %v1450, %v1448
    %v1513 = vpack.c.b16 %v1453, %v1451
    %v1514 = vpack.c.b16 %v1454, %v1452
    %v1515 = vpack.c.b16 %v1457, %v1455
    %v1516 = vpack.c.b16 %v1458, %v1456
    %v1517 = vpack.c.b16 %v1461, %v1459
    %v1518 = vpack.c.b16 %v1462, %v1460
    %v1519 = vpack.c.b16 %v1465, %v1463
    %v1520 = vpack.c.b16 %v1466, %v1464
    %v1521 = vpack.c.b16 %v1469, %v1467
    %v1522 = vpack.c.b16 %v1470, %v1468
    %v1523 = vpack.c.b16 %v1473, %v1471
    %v1524 = vpack.c.b16 %v1474, %v1472
    %v1525 = vpack.c.b16 %v1477, %v1475
    %v1526 = vpack.c.b16 %v1478, %v1476
    %v1527 = vpack.c.b16 %v1481, %v1479
    %v1528 = vpack.c.b16 %v1482, %v1480
    %v1529 = vpack.c.b16 %v1485, %v1483
    %v1530 = vpack.c.b16 %v1486, %v1484
    %v1531 = vpack.c.b16 %v1489, %v1487
    %v1532 = vpack.c.b16 %v1490, %v1488
    %v1533 = vpack.c.b16 %v1493, %v1491
    %v1534 = vpack.c.b16 %v1494, %v1492
    %v1535 = vpack.c.b16 %v1497, %v1495
    %v1536 = vpack.c.b16 %v1498, %v1496
    %v1537 = vpack.c.b16 %v1501, %v1499
    %v1538 = vpack.c.b16 %v1502, %v1500
    %v1539 = vpack.c.b16 %v1505, %v1503
    %v1540 = vpack.c.b16 %v1506, %v1504
    %v1541 = vpack.c.b16 %v1509, %v1507
    %v1542 = vpack.c.b16 %v1510, %v1508
    %1575 = vmatprep.subr.bf16.mxu0 %v1512
    %1576 = vmatpush1.bf16.msra.mxu0 %v1511
    %1577 = vmatprep.subr.bf16.mxu0 %v1514
    %1578 = vmatpush1.bf16.msra.mxu0 %v1513
    %1579 = vmatprep.subr.bf16.mxu0 %v1516
    %1580 = vmatpush1.bf16.msra.mxu0 %v1515
    %1581 = vmatprep.subr.bf16.mxu0 %v1518
    %1582 = vmatpush1.bf16.msra.mxu0 %v1517
    %1583 = vmatprep.subr.bf16.mxu0 %v1520
    %1584 = vmatpush1.bf16.msra.mxu0 %v1519
    %1585 = vmatprep.subr.bf16.mxu0 %v1522
    %1586 = vmatpush1.bf16.msra.mxu0 %v1521
    %1587 = vmatprep.subr.bf16.mxu0 %v1524
    %1588 = vmatpush1.bf16.msra.mxu0 %v1523
    %1589 = vmatprep.subr.bf16.mxu0 %v1526
    %1590 = vmatpush1.bf16.msra.mxu0 %v1525
    %1591 = vmatprep.subr.bf16.mxu0 %v1528
    %1592 = vmatpush1.bf16.msra.mxu0 %v1527
    %1593 = vmatprep.subr.bf16.mxu0 %v1530
    %1594 = vmatpush1.bf16.msra.mxu0 %v1529
    %1595 = vmatprep.subr.bf16.mxu0 %v1532
    %1596 = vmatpush1.bf16.msra.mxu0 %v1531
    %1597 = vmatprep.subr.bf16.mxu0 %v1534
    %1598 = vmatpush1.bf16.msra.mxu0 %v1533
    %1599 = vmatprep.subr.bf16.mxu0 %v1536
    %1600 = vmatpush1.bf16.msra.mxu0 %v1535
    %1601 = vmatprep.subr.bf16.mxu0 %v1538
    %1602 = vmatpush1.bf16.msra.mxu0 %v1537
    %1603 = vmatprep.subr.bf16.mxu0 %v1540
    %1604 = vmatpush1.bf16.msra.mxu0 %v1539
    %1605 = vmatprep.subr.bf16.mxu0 %v1542
    %1606 = vmatpush1.bf16.msra.mxu0 %v1541
    %1607 = vmatprep.mubr.bf16.mxu0 %v1404
    %1608 = vmatmul.mubr.bf16.gmra.mrb[0].mxu0 %v1401
    %v1609 = vpop.f32.mrb[0].mxu0
    %v1610 = vadd.f32 0.0, %v1609
    %v1611 = vpop.f32.mrb[0].mxu0
    %v1612 = vadd.f32 0.0, %v1611
    %v1613 = vpop.f32.mrb[0].mxu0
    %v1614 = vadd.f32 0.0, %v1613
    %v1615 = vpop.f32.mrb[0].mxu0
    %v1616 = vadd.f32 0.0, %v1615
    %1617 = vmatprep.mubr.bf16.mxu0 %v1408
    %1618 = vmatmul.mubr.bf16.gmra.mrb[0].mxu0 %v1406
    %v1619 = vpop.f32.mrb[0].mxu0
    %v1620 = vadd.f32 0.0, %v1619
    %v1621 = vpop.f32.mrb[0].mxu0
    %v1622 = vadd.f32 0.0, %v1621
    %v1623 = vpop.f32.mrb[0].mxu0
    %v1624 = vadd.f32 0.0, %v1623
    %v1625 = vpop.f32.mrb[0].mxu0
    %v1626 = vadd.f32 0.0, %v1625
    %1627 = vmatprep.mubr.bf16.mxu0 %v1407
    %1628 = vmatmul.mubr.bf16.gmra.mrb[0].mxu0 %v1405
    %v1629 = vpop.f32.mrb[0].mxu0
    %v1630 = vadd.f32 0.0, %v1629
    %v1631 = vpop.f32.mrb[0].mxu0
    %v1632 = vadd.f32 0.0, %v1631
    %v1633 = vpop.f32.mrb[0].mxu0
    %v1634 = vpop.f32.mrb[0].mxu0
    %1635 = vdwg.mxu0
    %v1636 = vadd.f32 %v1343, %v1610
    %v1637 = vadd.f32 %v1344, %v1612
    %v1638 = vadd.f32 %v1345, %v1614
    %v1639 = vadd.f32 %v1346, %v1616
    %v1640 = vadd.f32 %v1347, %v1620
    %v1641 = vadd.f32 %v1348, %v1622
    %v1642 = vadd.f32 %v1349, %v1624
    %v1643 = vadd.f32 %v1350, %v1626
    %v1644 = vadd.f32 %v1351, %v1630
    %v1645 = vadd.f32 %v1352, %v1632
    %v1646 = vld [vmem:[%s2] sm:$0x3]
    %v1648 = vlaneseq
    %v1649 = vshrl.u32 %v1648, 7
    %v1650 = vsub.s32 0, %v1649
    %v1651 = vrot.slane %v1646, %v1650
    %v1652 = vlaneseq
    %v1653 = vshrl.u32 %v1652, 7
    %v1654 = vsub.s32 1, %v1653
    %v1655 = vrot.slane %v1646, %v1654
    %v1658 = vadd.f32 %v1636, %v1651
    %v1659 = vadd.f32 %v1637, %v1655
    %v1660 = vadd.f32 %v1638, %v1651
    %v1661 = vadd.f32 %v1639, %v1655
    %v1662 = vadd.f32 %v1640, %v1651
    %v1663 = vadd.f32 %v1641, %v1655
    %v1664 = vadd.f32 %v1642, %v1651
    %v1665 = vadd.f32 %v1643, %v1655
    %v1666 = vadd.f32 %v1644, %v1651
    %v1667 = vadd.f32 %v1645, %v1655
    %v1674 = vrot.slane %v1662, 4
    %v1675 = vrot.slane %v1664, 4
    %v1676 = vsel %vm130, %v1674, %v1675
    %v1677 = vrot.slane %v1663, 4
    %v1678 = vrot.slane %v1665, 4
    %v1679 = vsel %vm130, %v1677, %v1678
    %v1680 = vrot.slane %v1666, 4
    %v1681 = vsel %vm130, %v1675, %v1680
    %v1682 = vrot.slane %v1667, 4
    %v1683 = vsel %vm130, %v1678, %v1682
    %vm1698 = vcmask 1041408
    %v1699 = vrot.slane %v93, 6
    %v1700 = vrot.slane %v94, 6
    %v1701 = vrot.slane %v95, 6
    %v1702 = vsel %vm1698, %v1699, %v1701
    %v1703 = vrot.slane %v96, 6
    %v1704 = vsel %vm1698, %v1700, %v1703
    %v1705 = vrot.slane %v97, 6
    %v1706 = vrot.slane %v98, 6
    %v1707 = vrot.slane %v99, 6
    %v1708 = vsel %vm1698, %v1705, %v1707
    %v1709 = vrot.slane %v100, 6
    %v1710 = vsel %vm1698, %v1706, %v1709
    %v1723 = vmax.f32 %v1658, %v1699
    %v1724 = vmax.f32 %v1659, %v1700
    %v1725 = vmax.f32 %v1660, %v1702
    %v1726 = vmax.f32 %v1661, %v1704
    %v1727 = vmax.f32 %v1662, %v1701
    %v1728 = vmax.f32 %v1663, %v1703
    %v1729 = vmax.f32 %v1676, %v1705
    %v1730 = vmax.f32 %v1679, %v1706
    %v1731 = vmax.f32 %v1681, %v1708
    %v1732 = vmax.f32 %v1683, %v1710
    %v1733 = vmax.f32 %v1680, %v1707
    %v1734 = vmax.f32 %v1682, %v1709
    %vm1735 = vcmp.ge.f32.partialorder %v1723, 0.0
    %vm1736 = vcmp.ge.f32.partialorder %v1724, 0.0
    %vm1737 = vcmp.ge.f32.partialorder %v1725, 0.0
    %vm1738 = vcmp.ge.f32.partialorder %v1726, 0.0
    %vm1739 = vcmp.ge.f32.partialorder %v1727, 0.0
    %vm1740 = vcmp.ge.f32.partialorder %v1728, 0.0
    %vm1741 = vcmp.ge.f32.partialorder %v1729, 0.0
    %vm1742 = vcmp.ge.f32.partialorder %v1730, 0.0
    %vm1743 = vcmp.ge.f32.partialorder %v1731, 0.0
    %vm1744 = vcmp.ge.f32.partialorder %v1732, 0.0
    %vm1745 = vcmp.ge.f32.partialorder %v1733, 0.0
    %vm1746 = vcmp.ge.f32.partialorder %v1734, 0.0
    %v1747 = vmul.f32 %v109, %v1723
    %v1748 = vmul.f32 %v109, %v1724
    %v1749 = vmul.f32 %v109, %v1725
    %v1750 = vmul.f32 %v109, %v1726
    %v1751 = vmul.f32 %v109, %v1727
    %v1752 = vmul.f32 %v109, %v1728
    %v1753 = vmul.f32 %v109, %v1729
    %v1754 = vmul.f32 %v109, %v1730
    %v1755 = vmul.f32 %v109, %v1731
    %v1756 = vmul.f32 %v109, %v1732
    %v1757 = vmul.f32 %v109, %v1733
    %v1758 = vmul.f32 %v109, %v1734
    %v1759 = vsel %vm1735, %v1723, %v1747
    %v1760 = vsel %vm1736, %v1724, %v1748
    %v1761 = vsel %vm1737, %v1725, %v1749
    %v1762 = vsel %vm1738, %v1726, %v1750
    %v1763 = vsel %vm1739, %v1727, %v1751
    %v1764 = vsel %vm1740, %v1728, %v1752
    %v1765 = vsel %vm1741, %v1729, %v1753
    %v1766 = vsel %vm1742, %v1730, %v1754
    %v1767 = vsel %vm1743, %v1731, %v1755
    %v1768 = vsel %vm1744, %v1732, %v1756
    %v1769 = vsel %vm1745, %v1733, %v1757
    %v1770 = vsel %vm1746, %v1734, %v1758
    %v1777 = vrot.slane %v1759, 6
    %v1778 = vrot.slane %v1760, 6
    %v1779 = vrot.slane %v1761, 6
    %v1780 = vsel %vm1698, %v1777, %v1779
    %v1781 = vrot.slane %v1762, 6
    %v1782 = vsel %vm1698, %v1778, %v1781
    %v1783 = vrot.slane %v1763, 6
    %v1784 = vsel %vm1698, %v1779, %v1783
    %v1785 = vrot.slane %v1764, 6
    %v1786 = vsel %vm1698, %v1781, %v1785
    %1793 = vst [vmem:[#allocation2] sm:$0xf0] %v1777
    %1794 = vst [vmem:[#allocation2 + $0x8] sm:$0xf0] %v1778
    %1795 = vst [vmem:[#allocation2 + $0x10] sm:$0xff] %v1780
    %1796 = vst [vmem:[#allocation2 + $0x18] sm:$0xff] %v1782
    %1797 = vst [vmem:[#allocation2 + $0x20] sm:$0xf] %v1784
    %1798 = vst [vmem:[#allocation2 + $0x28] sm:$0xf] %v1786
    %vm1805 = vcmask 1045504
    %v1806 = vrot.slane %v1765, 2
    %v1807 = vrot.slane %v1767, 2
    %v1808 = vsel %vm1805, %v1806, %v1807
    %v1809 = vrot.slane %v1766, 2
    %v1810 = vrot.slane %v1768, 2
    %v1811 = vsel %vm1805, %v1809, %v1810
    %v1812 = vrot.slane %v1769, 2
    %v1813 = vsel %vm1805, %v1807, %v1812
    %v1814 = vrot.slane %v1770, 2
    %v1815 = vsel %vm1805, %v1810, %v1814
    %1820 = vst [vmem:[#allocation2 + $0x30] sm:$0xff] %v1808
    %1821 = vst [vmem:[#allocation2 + $0x38] sm:$0xff] %v1811
    %1822 = vst [vmem:[#allocation2 + $0x40] sm:$0xff] %v1813
    %1823 = vst [vmem:[#allocation2 + $0x48] sm:$0xff] %v1815
    %v1824 = vld [vmem:[#allocation2] sm:$0xff]
    %v1825 = vld [vmem:[#allocation2 + $0x8] sm:$0xff]
    %v1826 = vld [vmem:[#allocation2 + $0x10] sm:$0xff]
    %v1827 = vld [vmem:[#allocation2 + $0x18] sm:$0xff]
    %v1828 = vld [vmem:[#allocation2 + $0x20] sm:$0xff]
    %v1829 = vld [vmem:[#allocation2 + $0x28] sm:$0xff]
    %v1830 = vld [vmem:[#allocation2 + $0x30] sm:$0xff]
    %v1831 = vld [vmem:[#allocation2 + $0x38] sm:$0xff]
    %v1832 = vld [vmem:[#allocation2 + $0x40] sm:$0xff]
    %v1833 = vld [vmem:[#allocation2 + $0x48] sm:$0xff]
    %v1834 = vpack.c.bf16 %v1826, %v1824
    %v1835 = vpack.c.bf16 %v1827, %v1825
    %v1836 = vpack.c.bf16 %v1830, %v1828
    %v1837 = vpack.c.bf16 %v1831, %v1829
    %v1838 = vpack.c.bf16 %v1832, %v1832
    %v1839 = vpack.c.bf16 %v1833, %v1833
    %v1840 = vld [vmem:[#allocation9] sm:$0xff]
    %v1841 = vld [vmem:[#allocation9 + $0x8] sm:$0xff]
    %v1842 = vld [vmem:[#allocation9 + $0x10] sm:$0xff]
    %v1843 = vld [vmem:[#allocation9 + $0x18] sm:$0xff]
    %v1844 = vld [vmem:[#allocation9 + $0x20] sm:$0xff]
    %v1845 = vld [vmem:[#allocation9 + $0x28] sm:$0xff]
    %v1846 = vld [vmem:[#allocation9 + $0x30] sm:$0xff]
    %v1847 = vld [vmem:[#allocation9 + $0x38] sm:$0xff]
    %v1848 = vld [vmem:[#allocation9 + $0x40] sm:$0xff]
    %v1849 = vld [vmem:[#allocation9 + $0x48] sm:$0xff]
    %v1850 = vld [vmem:[#allocation9 + $0x50] sm:$0xff]
    %v1851 = vld [vmem:[#allocation9 + $0x58] sm:$0xff]
    %v1852 = vld [vmem:[#allocation9 + $0x60] sm:$0xff]
    %v1853 = vld [vmem:[#allocation9 + $0x68] sm:$0xff]
    %v1854 = vld [vmem:[#allocation9 + $0x70] sm:$0xff]
    %v1855 = vld [vmem:[#allocation9 + $0x78] sm:$0xff]
    %v1856 = vld [vmem:[#allocation9 + $0x80] sm:$0xff]
    %v1857 = vld [vmem:[#allocation9 + $0x88] sm:$0xff]
    %v1858 = vld [vmem:[#allocation9 + $0x90] sm:$0xff]
    %v1859 = vld [vmem:[#allocation9 + $0x98] sm:$0xff]
    %v1860 = vld [vmem:[#allocation9 + $0xa0] sm:$0xff]
    %v1861 = vld [vmem:[#allocation9 + $0xa8] sm:$0xff]
    %v1862 = vld [vmem:[#allocation9 + $0xb0] sm:$0xff]
    %v1863 = vld [vmem:[#allocation9 + $0xb8] sm:$0xff]
    %v1864 = vld [vmem:[#allocation9 + $0xc0] sm:$0xff]
    %v1865 = vld [vmem:[#allocation9 + $0xc8] sm:$0xff]
    %v1866 = vld [vmem:[#allocation9 + $0xd0] sm:$0xff]
    %v1867 = vld [vmem:[#allocation9 + $0xd8] sm:$0xff]
    %v1868 = vld [vmem:[#allocation9 + $0xe0] sm:$0xff]
    %v1869 = vld [vmem:[#allocation9 + $0xe8] sm:$0xff]
    %v1870 = vld [vmem:[#allocation9 + $0xf0] sm:$0xff]
    %v1871 = vld [vmem:[#allocation9 + $0xf8] sm:$0xff]
    %v1872 = vld [vmem:[#allocation2] sm:$0xfe]
    %v1873 = vld [vmem:[#allocation2 + $0x8] sm:$0xfe]
    %v1874 = vld [vmem:[#allocation2 + $0x50] sm:$0x1]
    %v1875 = vld [vmem:[#allocation2 + $0x58] sm:$0x1]
    %v1876 = vpack.c.bf16 %v1826, %v1872
    %v1877 = vpack.c.bf16 %v1827, %v1873
    %v1878 = vpack.c.bf16 %v1874, %v1832
    %v1879 = vpack.c.bf16 %v1875, %v1833
    %s1880 = scalar_lea.vmem [#allocation9], 256
    %v1881 = vld [vmem:[%s1880] sm:$0xff]
    %v1882 = vld [vmem:[%s1880 + $0x8] sm:$0xff]
    %v1883 = vld [vmem:[%s1880 + $0x10] sm:$0xff]
    %v1884 = vld [vmem:[%s1880 + $0x18] sm:$0xff]
    %v1885 = vld [vmem:[%s1880 + $0x20] sm:$0xff]
    %v1886 = vld [vmem:[%s1880 + $0x28] sm:$0xff]
    %v1887 = vld [vmem:[%s1880 + $0x30] sm:$0xff]
    %v1888 = vld [vmem:[%s1880 + $0x38] sm:$0xff]
    %v1889 = vld [vmem:[%s1880 + $0x40] sm:$0xff]
    %v1890 = vld [vmem:[%s1880 + $0x48] sm:$0xff]
    %v1891 = vld [vmem:[%s1880 + $0x50] sm:$0xff]
    %v1892 = vld [vmem:[%s1880 + $0x58] sm:$0xff]
    %v1893 = vld [vmem:[%s1880 + $0x60] sm:$0xff]
    %v1894 = vld [vmem:[%s1880 + $0x68] sm:$0xff]
    %v1895 = vld [vmem:[%s1880 + $0x70] sm:$0xff]
    %v1896 = vld [vmem:[%s1880 + $0x78] sm:$0xff]
    %v1897 = vld [vmem:[%s1880 + $0x80] sm:$0xff]
    %v1898 = vld [vmem:[%s1880 + $0x88] sm:$0xff]
    %v1899 = vld [vmem:[%s1880 + $0x90] sm:$0xff]
    %v1900 = vld [vmem:[%s1880 + $0x98] sm:$0xff]
    %v1901 = vld [vmem:[%s1880 + $0xa0] sm:$0xff]
    %v1902 = vld [vmem:[%s1880 + $0xa8] sm:$0xff]
    %v1903 = vld [vmem:[%s1880 + $0xb0] sm:$0xff]
    %v1904 = vld [vmem:[%s1880 + $0xb8] sm:$0xff]
    %v1905 = vld [vmem:[%s1880 + $0xc0] sm:$0xff]
    %v1906 = vld [vmem:[%s1880 + $0xc8] sm:$0xff]
    %v1907 = vld [vmem:[%s1880 + $0xd0] sm:$0xff]
    %v1908 = vld [vmem:[%s1880 + $0xd8] sm:$0xff]
    %v1909 = vld [vmem:[%s1880 + $0xe0] sm:$0xff]
    %v1910 = vld [vmem:[%s1880 + $0xe8] sm:$0xff]
    %v1911 = vld [vmem:[%s1880 + $0xf0] sm:$0xff]
    %v1912 = vld [vmem:[%s1880 + $0xf8] sm:$0xff]
    %v1914 = vshrl.u32 %v1876, 16
    %v1916 = vshll.u32 %v1876, 16
    %v1918 = vrot.slane %v1916, 1
    %v1919 = vor.u32 %v1914, %v1918
    %v1921 = vshll.u32 %v1836, 16
    %v1923 = vrot.slane %v1921, 1
    %v1924 = vsel %vm242, %v1919, %v1923
    %v1926 = vshrl.u32 %v1877, 16
    %v1928 = vshll.u32 %v1877, 16
    %v1930 = vrot.slane %v1928, 1
    %v1931 = vor.u32 %v1926, %v1930
    %v1933 = vshll.u32 %v1837, 16
    %v1935 = vrot.slane %v1933, 1
    %v1936 = vsel %vm242, %v1931, %v1935
    %v1937 = vshrl.u32 %v1836, 16
    %v1939 = vor.u32 %v1937, %v1923
    %v1941 = vshll.u32 %v1878, 16
    %v1943 = vrot.slane %v1941, 1
    %v1944 = vsel %vm242, %v1939, %v1943
    %v1945 = vshrl.u32 %v1837, 16
    %v1947 = vor.u32 %v1945, %v1935
    %v1949 = vshll.u32 %v1879, 16
    %v1951 = vrot.slane %v1949, 1
    %v1952 = vsel %vm242, %v1947, %v1951
    %v1953 = vshrl.u32 %v1878, 16
    %v1955 = vor.u32 %v1953, %v1943
    %v1956 = vshrl.u32 %v1879, 16
    %v1958 = vor.u32 %v1956, %v1951
    %v1997 = vunpack.c.l.b16 %v1881
    %v1998 = vunpack.c.h.b16 %v1881
    %v1999 = vunpack.c.l.b16 %v1882
    %v2000 = vunpack.c.h.b16 %v1882
    %v2001 = vunpack.c.l.b16 %v1883
    %v2002 = vunpack.c.h.b16 %v1883
    %v2003 = vunpack.c.l.b16 %v1884
    %v2004 = vunpack.c.h.b16 %v1884
    %v2005 = vunpack.c.l.b16 %v1885
    %v2006 = vunpack.c.h.b16 %v1885
    %v2007 = vunpack.c.l.b16 %v1886
    %v2008 = vunpack.c.h.b16 %v1886
    %v2009 = vunpack.c.l.b16 %v1887
    %v2010 = vunpack.c.h.b16 %v1887
    %v2011 = vunpack.c.l.b16 %v1888
    %v2012 = vunpack.c.h.b16 %v1888
    %v2013 = vunpack.c.l.b16 %v1889
    %v2014 = vunpack.c.h.b16 %v1889
    %v2015 = vunpack.c.l.b16 %v1890
    %v2016 = vunpack.c.h.b16 %v1890
    %v2017 = vunpack.c.l.b16 %v1891
    %v2018 = vunpack.c.h.b16 %v1891
    %v2019 = vunpack.c.l.b16 %v1892
    %v2020 = vunpack.c.h.b16 %v1892
    %v2021 = vunpack.c.l.b16 %v1893
    %v2022 = vunpack.c.h.b16 %v1893
    %v2023 = vunpack.c.l.b16 %v1894
    %v2024 = vunpack.c.h.b16 %v1894
    %v2025 = vunpack.c.l.b16 %v1895
    %v2026 = vunpack.c.h.b16 %v1895
    %v2027 = vunpack.c.l.b16 %v1896
    %v2028 = vunpack.c.h.b16 %v1896
    %v2029 = vunpack.c.l.b16 %v1897
    %v2030 = vunpack.c.h.b16 %v1897
    %v2031 = vunpack.c.l.b16 %v1898
    %v2032 = vunpack.c.h.b16 %v1898
    %v2033 = vunpack.c.l.b16 %v1899
    %v2034 = vunpack.c.h.b16 %v1899
    %v2035 = vunpack.c.l.b16 %v1900
    %v2036 = vunpack.c.h.b16 %v1900
    %v2037 = vunpack.c.l.b16 %v1901
    %v2038 = vunpack.c.h.b16 %v1901
    %v2039 = vunpack.c.l.b16 %v1902
    %v2040 = vunpack.c.h.b16 %v1902
    %v2041 = vunpack.c.l.b16 %v1903
    %v2042 = vunpack.c.h.b16 %v1903
    %v2043 = vunpack.c.l.b16 %v1904
    %v2044 = vunpack.c.h.b16 %v1904
    %v2045 = vunpack.c.l.b16 %v1905
    %v2046 = vunpack.c.h.b16 %v1905
    %v2047 = vunpack.c.l.b16 %v1906
    %v2048 = vunpack.c.h.b16 %v1906
    %v2049 = vunpack.c.l.b16 %v1907
    %v2050 = vunpack.c.h.b16 %v1907
    %v2051 = vunpack.c.l.b16 %v1908
    %v2052 = vunpack.c.h.b16 %v1908
    %v2053 = vunpack.c.l.b16 %v1909
    %v2054 = vunpack.c.h.b16 %v1909
    %v2055 = vunpack.c.l.b16 %v1910
    %v2056 = vunpack.c.h.b16 %v1910
    %v2057 = vunpack.c.l.b16 %v1911
    %v2058 = vunpack.c.h.b16 %v1911
    %v2059 = vunpack.c.l.b16 %v1912
    %v2060 = vunpack.c.h.b16 %v1912
    %v2061 = vpack.c.b16 %v1999, %v1997
    %v2062 = vpack.c.b16 %v2000, %v1998
    %v2063 = vpack.c.b16 %v2003, %v2001
    %v2064 = vpack.c.b16 %v2004, %v2002
    %v2065 = vpack.c.b16 %v2007, %v2005
    %v2066 = vpack.c.b16 %v2008, %v2006
    %v2067 = vpack.c.b16 %v2011, %v2009
    %v2068 = vpack.c.b16 %v2012, %v2010
    %v2069 = vpack.c.b16 %v2015, %v2013
    %v2070 = vpack.c.b16 %v2016, %v2014
    %v2071 = vpack.c.b16 %v2019, %v2017
    %v2072 = vpack.c.b16 %v2020, %v2018
    %v2073 = vpack.c.b16 %v2023, %v2021
    %v2074 = vpack.c.b16 %v2024, %v2022
    %v2075 = vpack.c.b16 %v2027, %v2025
    %v2076 = vpack.c.b16 %v2028, %v2026
    %v2077 = vpack.c.b16 %v2031, %v2029
    %v2078 = vpack.c.b16 %v2032, %v2030
    %v2079 = vpack.c.b16 %v2035, %v2033
    %v2080 = vpack.c.b16 %v2036, %v2034
    %v2081 = vpack.c.b16 %v2039, %v2037
    %v2082 = vpack.c.b16 %v2040, %v2038
    %v2083 = vpack.c.b16 %v2043, %v2041
    %v2084 = vpack.c.b16 %v2044, %v2042
    %v2085 = vpack.c.b16 %v2047, %v2045
    %v2086 = vpack.c.b16 %v2048, %v2046
    %v2087 = vpack.c.b16 %v2051, %v2049
    %v2088 = vpack.c.b16 %v2052, %v2050
    %v2089 = vpack.c.b16 %v2055, %v2053
    %v2090 = vpack.c.b16 %v2056, %v2054
    %v2091 = vpack.c.b16 %v2059, %v2057
    %v2092 = vpack.c.b16 %v2060, %v2058
    %2125 = vmatprep.subr.bf16.mxu0 %v2062
    %2126 = vmatpush1.bf16.msra.mxu0 %v2061
    %2127 = vmatprep.subr.bf16.mxu0 %v2064
    %2128 = vmatpush1.bf16.msra.mxu0 %v2063
    %2129 = vmatprep.subr.bf16.mxu0 %v2066
    %2130 = vmatpush1.bf16.msra.mxu0 %v2065
    %2131 = vmatprep.subr.bf16.mxu0 %v2068
    %2132 = vmatpush1.bf16.msra.mxu0 %v2067
    %2133 = vmatprep.subr.bf16.mxu0 %v2070
    %2134 = vmatpush1.bf16.msra.mxu0 %v2069
    %2135 = vmatprep.subr.bf16.mxu0 %v2072
    %2136 = vmatpush1.bf16.msra.mxu0 %v2071
    %2137 = vmatprep.subr.bf16.mxu0 %v2074
    %2138 = vmatpush1.bf16.msra.mxu0 %v2073
    %2139 = vmatprep.subr.bf16.mxu0 %v2076
    %2140 = vmatpush1.bf16.msra.mxu0 %v2075
    %2141 = vmatprep.subr.bf16.mxu0 %v2078
    %2142 = vmatpush1.bf16.msra.mxu0 %v2077
    %2143 = vmatprep.subr.bf16.mxu0 %v2080
    %2144 = vmatpush1.bf16.msra.mxu0 %v2079
    %2145 = vmatprep.subr.bf16.mxu0 %v2082
    %2146 = vmatpush1.bf16.msra.mxu0 %v2081
    %2147 = vmatprep.subr.bf16.mxu0 %v2084
    %2148 = vmatpush1.bf16.msra.mxu0 %v2083
    %2149 = vmatprep.subr.bf16.mxu0 %v2086
    %2150 = vmatpush1.bf16.msra.mxu0 %v2085
    %2151 = vmatprep.subr.bf16.mxu0 %v2088
    %2152 = vmatpush1.bf16.msra.mxu0 %v2087
    %2153 = vmatprep.subr.bf16.mxu0 %v2090
    %2154 = vmatpush1.bf16.msra.mxu0 %v2089
    %2155 = vmatprep.subr.bf16.mxu0 %v2092
    %2156 = vmatpush1.bf16.msra.mxu0 %v2091
    %2157 = vmatprep.mubr.bf16.mxu0 %v1936
    %2158 = vmatmul.mubr.bf16.gmra.mrb[0].mxu0 %v1924
    %v2159 = vpop.f32.mrb[0].mxu0
    %v2160 = vadd.f32 0.0, %v2159
    %v2161 = vpop.f32.mrb[0].mxu0
    %v2162 = vadd.f32 0.0, %v2161
    %v2163 = vpop.f32.mrb[0].mxu0
    %v2164 = vadd.f32 0.0, %v2163
    %v2165 = vpop.f32.mrb[0].mxu0
    %v2166 = vadd.f32 0.0, %v2165
    %2167 = vmatprep.mubr.bf16.mxu0 %v1952
    %2168 = vmatmul.mubr.bf16.gmra.mrb[0].mxu0 %v1944
    %v2169 = vpop.f32.mrb[0].mxu0
    %v2170 = vadd.f32 0.0, %v2169
    %v2171 = vpop.f32.mrb[0].mxu0
    %v2172 = vadd.f32 0.0, %v2171
    %v2173 = vpop.f32.mrb[0].mxu0
    %v2174 = vadd.f32 0.0, %v2173
    %v2175 = vpop.f32.mrb[0].mxu0
    %v2176 = vadd.f32 0.0, %v2175
    %2177 = vmatprep.mubr.bf16.mxu0 %v1958
    %2178 = vmatmul.mubr.bf16.gmra.mrb[0].mxu0 %v1955
    %v2179 = vpop.f32.mrb[0].mxu0
    %v2180 = vadd.f32 0.0, %v2179
    %v2181 = vpop.f32.mrb[0].mxu0
    %v2182 = vadd.f32 0.0, %v2181
    %v2183 = vpop.f32.mrb[0].mxu0
    %v2184 = vpop.f32.mrb[0].mxu0
    %2185 = vdwg.mxu0
    %v2218 = vunpack.c.l.b16 %v1840
    %v2219 = vunpack.c.h.b16 %v1840
    %v2220 = vunpack.c.l.b16 %v1841
    %v2221 = vunpack.c.h.b16 %v1841
    %v2222 = vunpack.c.l.b16 %v1842
    %v2223 = vunpack.c.h.b16 %v1842
    %v2224 = vunpack.c.l.b16 %v1843
    %v2225 = vunpack.c.h.b16 %v1843
    %v2226 = vunpack.c.l.b16 %v1844
    %v2227 = vunpack.c.h.b16 %v1844
    %v2228 = vunpack.c.l.b16 %v1845
    %v2229 = vunpack.c.h.b16 %v1845
    %v2230 = vunpack.c.l.b16 %v1846
    %v2231 = vunpack.c.h.b16 %v1846
    %v2232 = vunpack.c.l.b16 %v1847
    %v2233 = vunpack.c.h.b16 %v1847
    %v2234 = vunpack.c.l.b16 %v1848
    %v2235 = vunpack.c.h.b16 %v1848
    %v2236 = vunpack.c.l.b16 %v1849
    %v2237 = vunpack.c.h.b16 %v1849
    %v2238 = vunpack.c.l.b16 %v1850
    %v2239 = vunpack.c.h.b16 %v1850
    %v2240 = vunpack.c.l.b16 %v1851
    %v2241 = vunpack.c.h.b16 %v1851
    %v2242 = vunpack.c.l.b16 %v1852
    %v2243 = vunpack.c.h.b16 %v1852
    %v2244 = vunpack.c.l.b16 %v1853
    %v2245 = vunpack.c.h.b16 %v1853
    %v2246 = vunpack.c.l.b16 %v1854
    %v2247 = vunpack.c.h.b16 %v1854
    %v2248 = vunpack.c.l.b16 %v1855
    %v2249 = vunpack.c.h.b16 %v1855
    %v2250 = vunpack.c.l.b16 %v1856
    %v2251 = vunpack.c.h.b16 %v1856
    %v2252 = vunpack.c.l.b16 %v1857
    %v2253 = vunpack.c.h.b16 %v1857
    %v2254 = vunpack.c.l.b16 %v1858
    %v2255 = vunpack.c.h.b16 %v1858
    %v2256 = vunpack.c.l.b16 %v1859
    %v2257 = vunpack.c.h.b16 %v1859
    %v2258 = vunpack.c.l.b16 %v1860
    %v2259 = vunpack.c.h.b16 %v1860
    %v2260 = vunpack.c.l.b16 %v1861
    %v2261 = vunpack.c.h.b16 %v1861
    %v2262 = vunpack.c.l.b16 %v1862
    %v2263 = vunpack.c.h.b16 %v1862
    %v2264 = vunpack.c.l.b16 %v1863
    %v2265 = vunpack.c.h.b16 %v1863
    %v2266 = vunpack.c.l.b16 %v1864
    %v2267 = vunpack.c.h.b16 %v1864
    %v2268 = vunpack.c.l.b16 %v1865
    %v2269 = vunpack.c.h.b16 %v1865
    %v2270 = vunpack.c.l.b16 %v1866
    %v2271 = vunpack.c.h.b16 %v1866
    %v2272 = vunpack.c.l.b16 %v1867
    %v2273 = vunpack.c.h.b16 %v1867
    %v2274 = vunpack.c.l.b16 %v1868
    %v2275 = vunpack.c.h.b16 %v1868
    %v2276 = vunpack.c.l.b16 %v1869
    %v2277 = vunpack.c.h.b16 %v1869
    %v2278 = vunpack.c.l.b16 %v1870
    %v2279 = vunpack.c.h.b16 %v1870
    %v2280 = vunpack.c.l.b16 %v1871
    %v2281 = vunpack.c.h.b16 %v1871
    %v2282 = vpack.c.b16 %v2220, %v2218
    %v2283 = vpack.c.b16 %v2221, %v2219
    %v2284 = vpack.c.b16 %v2224, %v2222
    %v2285 = vpack.c.b16 %v2225, %v2223
    %v2286 = vpack.c.b16 %v2228, %v2226
    %v2287 = vpack.c.b16 %v2229, %v2227
    %v2288 = vpack.c.b16 %v2232, %v2230
    %v2289 = vpack.c.b16 %v2233, %v2231
    %v2290 = vpack.c.b16 %v2236, %v2234
    %v2291 = vpack.c.b16 %v2237, %v2235
    %v2292 = vpack.c.b16 %v2240, %v2238
    %v2293 = vpack.c.b16 %v2241, %v2239
    %v2294 = vpack.c.b16 %v2244, %v2242
    %v2295 = vpack.c.b16 %v2245, %v2243
    %v2296 = vpack.c.b16 %v2248, %v2246
    %v2297 = vpack.c.b16 %v2249, %v2247
    %v2298 = vpack.c.b16 %v2252, %v2250
    %v2299 = vpack.c.b16 %v2253, %v2251
    %v2300 = vpack.c.b16 %v2256, %v2254
    %v2301 = vpack.c.b16 %v2257, %v2255
    %v2302 = vpack.c.b16 %v2260, %v2258
    %v2303 = vpack.c.b16 %v2261, %v2259
    %v2304 = vpack.c.b16 %v2264, %v2262
    %v2305 = vpack.c.b16 %v2265, %v2263
    %v2306 = vpack.c.b16 %v2268, %v2266
    %v2307 = vpack.c.b16 %v2269, %v2267
    %v2308 = vpack.c.b16 %v2272, %v2270
    %v2309 = vpack.c.b16 %v2273, %v2271
    %v2310 = vpack.c.b16 %v2276, %v2274
    %v2311 = vpack.c.b16 %v2277, %v2275
    %v2312 = vpack.c.b16 %v2280, %v2278
    %v2313 = vpack.c.b16 %v2281, %v2279
    %2346 = vmatprep.subr.bf16.mxu0 %v2283
    %2347 = vmatpush1.bf16.msra.mxu0 %v2282
    %2348 = vmatprep.subr.bf16.mxu0 %v2285
    %2349 = vmatpush1.bf16.msra.mxu0 %v2284
    %2350 = vmatprep.subr.bf16.mxu0 %v2287
    %2351 = vmatpush1.bf16.msra.mxu0 %v2286
    %2352 = vmatprep.subr.bf16.mxu0 %v2289
    %2353 = vmatpush1.bf16.msra.mxu0 %v2288
    %2354 = vmatprep.subr.bf16.mxu0 %v2291
    %2355 = vmatpush1.bf16.msra.mxu0 %v2290
    %2356 = vmatprep.subr.bf16.mxu0 %v2293
    %2357 = vmatpush1.bf16.msra.mxu0 %v2292
    %2358 = vmatprep.subr.bf16.mxu0 %v2295
    %2359 = vmatpush1.bf16.msra.mxu0 %v2294
    %2360 = vmatprep.subr.bf16.mxu0 %v2297
    %2361 = vmatpush1.bf16.msra.mxu0 %v2296
    %2362 = vmatprep.subr.bf16.mxu0 %v2299
    %2363 = vmatpush1.bf16.msra.mxu0 %v2298
    %2364 = vmatprep.subr.bf16.mxu0 %v2301
    %2365 = vmatpush1.bf16.msra.mxu0 %v2300
    %2366 = vmatprep.subr.bf16.mxu0 %v2303
    %2367 = vmatpush1.bf16.msra.mxu0 %v2302
    %2368 = vmatprep.subr.bf16.mxu0 %v2305
    %2369 = vmatpush1.bf16.msra.mxu0 %v2304
    %2370 = vmatprep.subr.bf16.mxu0 %v2307
    %2371 = vmatpush1.bf16.msra.mxu0 %v2306
    %2372 = vmatprep.subr.bf16.mxu0 %v2309
    %2373 = vmatpush1.bf16.msra.mxu0 %v2308
    %2374 = vmatprep.subr.bf16.mxu0 %v2311
    %2375 = vmatpush1.bf16.msra.mxu0 %v2310
    %2376 = vmatprep.subr.bf16.mxu0 %v2313
    %2377 = vmatpush1.bf16.msra.mxu0 %v2312
    %2378 = vmatprep.mubr.bf16.mxu0 %v1835
    %2379 = vmatmul.mubr.bf16.gmra.mrb[0].mxu0 %v1834
    %v2380 = vpop.f32.mrb[0].mxu0
    %v2381 = vadd.f32 %v2160, %v2380
    %v2382 = vpop.f32.mrb[0].mxu0
    %v2383 = vadd.f32 %v2162, %v2382
    %v2384 = vpop.f32.mrb[0].mxu0
    %v2385 = vadd.f32 %v2164, %v2384
    %v2386 = vpop.f32.mrb[0].mxu0
    %v2387 = vadd.f32 %v2166, %v2386
    %2388 = vmatprep.mubr.bf16.mxu0 %v1837
    %2389 = vmatmul.mubr.bf16.gmra.mrb[0].mxu0 %v1836
    %v2390 = vpop.f32.mrb[0].mxu0
    %v2391 = vadd.f32 %v2170, %v2390
    %v2392 = vpop.f32.mrb[0].mxu0
    %v2393 = vadd.f32 %v2172, %v2392
    %v2394 = vpop.f32.mrb[0].mxu0
    %v2395 = vadd.f32 %v2174, %v2394
    %v2396 = vpop.f32.mrb[0].mxu0
    %v2397 = vadd.f32 %v2176, %v2396
    %2398 = vmatprep.mubr.bf16.mxu0 %v1839
    %2399 = vmatmul.mubr.bf16.gmra.mrb[0].mxu0 %v1838
    %v2400 = vpop.f32.mrb[0].mxu0
    %v2401 = vadd.f32 %v2180, %v2400
    %v2402 = vpop.f32.mrb[0].mxu0
    %v2403 = vadd.f32 %v2182, %v2402
    %v2404 = vpop.f32.mrb[0].mxu0
    %v2405 = vpop.f32.mrb[0].mxu0
    %2406 = vdwg.mxu0
    %v2407 = vld [vmem:[#allocation2] sm:$0xfc]
    %v2408 = vld [vmem:[#allocation2 + $0x8] sm:$0xfc]
    %v2409 = vld [vmem:[#allocation2 + $0x50] sm:$0x3]
    %v2410 = vld [vmem:[#allocation2 + $0x58] sm:$0x3]
    %v2411 = vpack.c.bf16 %v1826, %v2407
    %v2412 = vpack.c.bf16 %v1827, %v2408
    %v2413 = vpack.c.bf16 %v2409, %v1832
    %v2414 = vpack.c.bf16 %v2410, %v1833
    %s2415 = scalar_lea.vmem [#allocation9], 512
    %v2416 = vld [vmem:[%s2415] sm:$0xff]
    %v2417 = vld [vmem:[%s2415 + $0x8] sm:$0xff]
    %v2418 = vld [vmem:[%s2415 + $0x10] sm:$0xff]
    %v2419 = vld [vmem:[%s2415 + $0x18] sm:$0xff]
    %v2420 = vld [vmem:[%s2415 + $0x20] sm:$0xff]
    %v2421 = vld [vmem:[%s2415 + $0x28] sm:$0xff]
    %v2422 = vld [vmem:[%s2415 + $0x30] sm:$0xff]
    %v2423 = vld [vmem:[%s2415 + $0x38] sm:$0xff]
    %v2424 = vld [vmem:[%s2415 + $0x40] sm:$0xff]
    %v2425 = vld [vmem:[%s2415 + $0x48] sm:$0xff]
    %v2426 = vld [vmem:[%s2415 + $0x50] sm:$0xff]
    %v2427 = vld [vmem:[%s2415 + $0x58] sm:$0xff]
    %v2428 = vld [vmem:[%s2415 + $0x60] sm:$0xff]
    %v2429 = vld [vmem:[%s2415 + $0x68] sm:$0xff]
    %v2430 = vld [vmem:[%s2415 + $0x70] sm:$0xff]
    %v2431 = vld [vmem:[%s2415 + $0x78] sm:$0xff]
    %v2432 = vld [vmem:[%s2415 + $0x80] sm:$0xff]
    %v2433 = vld [vmem:[%s2415 + $0x88] sm:$0xff]
    %v2434 = vld [vmem:[%s2415 + $0x90] sm:$0xff]
    %v2435 = vld [vmem:[%s2415 + $0x98] sm:$0xff]
    %v2436 = vld [vmem:[%s2415 + $0xa0] sm:$0xff]
    %v2437 = vld [vmem:[%s2415 + $0xa8] sm:$0xff]
    %v2438 = vld [vmem:[%s2415 + $0xb0] sm:$0xff]
    %v2439 = vld [vmem:[%s2415 + $0xb8] sm:$0xff]
    %v2440 = vld [vmem:[%s2415 + $0xc0] sm:$0xff]
    %v2441 = vld [vmem:[%s2415 + $0xc8] sm:$0xff]
    %v2442 = vld [vmem:[%s2415 + $0xd0] sm:$0xff]
    %v2443 = vld [vmem:[%s2415 + $0xd8] sm:$0xff]
    %v2444 = vld [vmem:[%s2415 + $0xe0] sm:$0xff]
    %v2445 = vld [vmem:[%s2415 + $0xe8] sm:$0xff]
    %v2446 = vld [vmem:[%s2415 + $0xf0] sm:$0xff]
    %v2447 = vld [vmem:[%s2415 + $0xf8] sm:$0xff]
    %v2454 = vrot.slane %v2411, 1
    %v2455 = vrot.slane %v1836, 1
    %v2456 = vsel %vm784, %v2454, %v2455
    %v2457 = vrot.slane %v2412, 1
    %v2458 = vrot.slane %v1837, 1
    %v2459 = vsel %vm784, %v2457, %v2458
    %v2460 = vrot.slane %v2413, 1
    %v2461 = vsel %vm784, %v2455, %v2460
    %v2462 = vrot.slane %v2414, 1
    %v2463 = vsel %vm784, %v2458, %v2462
    %v2502 = vunpack.c.l.b16 %v2416
    %v2503 = vunpack.c.h.b16 %v2416
    %v2504 = vunpack.c.l.b16 %v2417
    %v2505 = vunpack.c.h.b16 %v2417
    %v2506 = vunpack.c.l.b16 %v2418
    %v2507 = vunpack.c.h.b16 %v2418
    %v2508 = vunpack.c.l.b16 %v2419
    %v2509 = vunpack.c.h.b16 %v2419
    %v2510 = vunpack.c.l.b16 %v2420
    %v2511 = vunpack.c.h.b16 %v2420
    %v2512 = vunpack.c.l.b16 %v2421
    %v2513 = vunpack.c.h.b16 %v2421
    %v2514 = vunpack.c.l.b16 %v2422
    %v2515 = vunpack.c.h.b16 %v2422
    %v2516 = vunpack.c.l.b16 %v2423
    %v2517 = vunpack.c.h.b16 %v2423
    %v2518 = vunpack.c.l.b16 %v2424
    %v2519 = vunpack.c.h.b16 %v2424
    %v2520 = vunpack.c.l.b16 %v2425
    %v2521 = vunpack.c.h.b16 %v2425
    %v2522 = vunpack.c.l.b16 %v2426
    %v2523 = vunpack.c.h.b16 %v2426
    %v2524 = vunpack.c.l.b16 %v2427
    %v2525 = vunpack.c.h.b16 %v2427
    %v2526 = vunpack.c.l.b16 %v2428
    %v2527 = vunpack.c.h.b16 %v2428
    %v2528 = vunpack.c.l.b16 %v2429
    %v2529 = vunpack.c.h.b16 %v2429
    %v2530 = vunpack.c.l.b16 %v2430
    %v2531 = vunpack.c.h.b16 %v2430
    %v2532 = vunpack.c.l.b16 %v2431
    %v2533 = vunpack.c.h.b16 %v2431
    %v2534 = vunpack.c.l.b16 %v2432
    %v2535 = vunpack.c.h.b16 %v2432
    %v2536 = vunpack.c.l.b16 %v2433
    %v2537 = vunpack.c.h.b16 %v2433
    %v2538 = vunpack.c.l.b16 %v2434
    %v2539 = vunpack.c.h.b16 %v2434
    %v2540 = vunpack.c.l.b16 %v2435
    %v2541 = vunpack.c.h.b16 %v2435
    %v2542 = vunpack.c.l.b16 %v2436
    %v2543 = vunpack.c.h.b16 %v2436
    %v2544 = vunpack.c.l.b16 %v2437
    %v2545 = vunpack.c.h.b16 %v2437
    %v2546 = vunpack.c.l.b16 %v2438
    %v2547 = vunpack.c.h.b16 %v2438
    %v2548 = vunpack.c.l.b16 %v2439
    %v2549 = vunpack.c.h.b16 %v2439
    %v2550 = vunpack.c.l.b16 %v2440
    %v2551 = vunpack.c.h.b16 %v2440
    %v2552 = vunpack.c.l.b16 %v2441
    %v2553 = vunpack.c.h.b16 %v2441
    %v2554 = vunpack.c.l.b16 %v2442
    %v2555 = vunpack.c.h.b16 %v2442
    %v2556 = vunpack.c.l.b16 %v2443
    %v2557 = vunpack.c.h.b16 %v2443
    %v2558 = vunpack.c.l.b16 %v2444
    %v2559 = vunpack.c.h.b16 %v2444
    %v2560 = vunpack.c.l.b16 %v2445
    %v2561 = vunpack.c.h.b16 %v2445
    %v2562 = vunpack.c.l.b16 %v2446
    %v2563 = vunpack.c.h.b16 %v2446
    %v2564 = vunpack.c.l.b16 %v2447
    %v2565 = vunpack.c.h.b16 %v2447
    %v2566 = vpack.c.b16 %v2504, %v2502
    %v2567 = vpack.c.b16 %v2505, %v2503
    %v2568 = vpack.c.b16 %v2508, %v2506
    %v2569 = vpack.c.b16 %v2509, %v2507
    %v2570 = vpack.c.b16 %v2512, %v2510
    %v2571 = vpack.c.b16 %v2513, %v2511
    %v2572 = vpack.c.b16 %v2516, %v2514
    %v2573 = vpack.c.b16 %v2517, %v2515
    %v2574 = vpack.c.b16 %v2520, %v2518
    %v2575 = vpack.c.b16 %v2521, %v2519
    %v2576 = vpack.c.b16 %v2524, %v2522
    %v2577 = vpack.c.b16 %v2525, %v2523
    %v2578 = vpack.c.b16 %v2528, %v2526
    %v2579 = vpack.c.b16 %v2529, %v2527
    %v2580 = vpack.c.b16 %v2532, %v2530
    %v2581 = vpack.c.b16 %v2533, %v2531
    %v2582 = vpack.c.b16 %v2536, %v2534
    %v2583 = vpack.c.b16 %v2537, %v2535
    %v2584 = vpack.c.b16 %v2540, %v2538
    %v2585 = vpack.c.b16 %v2541, %v2539
    %v2586 = vpack.c.b16 %v2544, %v2542
    %v2587 = vpack.c.b16 %v2545, %v2543
    %v2588 = vpack.c.b16 %v2548, %v2546
    %v2589 = vpack.c.b16 %v2549, %v2547
    %v2590 = vpack.c.b16 %v2552, %v2550
    %v2591 = vpack.c.b16 %v2553, %v2551
    %v2592 = vpack.c.b16 %v2556, %v2554
    %v2593 = vpack.c.b16 %v2557, %v2555
    %v2594 = vpack.c.b16 %v2560, %v2558
    %v2595 = vpack.c.b16 %v2561, %v2559
    %v2596 = vpack.c.b16 %v2564, %v2562
    %v2597 = vpack.c.b16 %v2565, %v2563
    %2630 = vmatprep.subr.bf16.mxu0 %v2567
    %2631 = vmatpush1.bf16.msra.mxu0 %v2566
    %2632 = vmatprep.subr.bf16.mxu0 %v2569
    %2633 = vmatpush1.bf16.msra.mxu0 %v2568
    %2634 = vmatprep.subr.bf16.mxu0 %v2571
    %2635 = vmatpush1.bf16.msra.mxu0 %v2570
    %2636 = vmatprep.subr.bf16.mxu0 %v2573
    %2637 = vmatpush1.bf16.msra.mxu0 %v2572
    %2638 = vmatprep.subr.bf16.mxu0 %v2575
    %2639 = vmatpush1.bf16.msra.mxu0 %v2574
    %2640 = vmatprep.subr.bf16.mxu0 %v2577
    %2641 = vmatpush1.bf16.msra.mxu0 %v2576
    %2642 = vmatprep.subr.bf16.mxu0 %v2579
    %2643 = vmatpush1.bf16.msra.mxu0 %v2578
    %2644 = vmatprep.subr.bf16.mxu0 %v2581
    %2645 = vmatpush1.bf16.msra.mxu0 %v2580
    %2646 = vmatprep.subr.bf16.mxu0 %v2583
    %2647 = vmatpush1.bf16.msra.mxu0 %v2582
    %2648 = vmatprep.subr.bf16.mxu0 %v2585
    %2649 = vmatpush1.bf16.msra.mxu0 %v2584
    %2650 = vmatprep.subr.bf16.mxu0 %v2587
    %2651 = vmatpush1.bf16.msra.mxu0 %v2586
    %2652 = vmatprep.subr.bf16.mxu0 %v2589
    %2653 = vmatpush1.bf16.msra.mxu0 %v2588
    %2654 = vmatprep.subr.bf16.mxu0 %v2591
    %2655 = vmatpush1.bf16.msra.mxu0 %v2590
    %2656 = vmatprep.subr.bf16.mxu0 %v2593
    %2657 = vmatpush1.bf16.msra.mxu0 %v2592
    %2658 = vmatprep.subr.bf16.mxu0 %v2595
    %2659 = vmatpush1.bf16.msra.mxu0 %v2594
    %2660 = vmatprep.subr.bf16.mxu0 %v2597
    %2661 = vmatpush1.bf16.msra.mxu0 %v2596
    %2662 = vmatprep.mubr.bf16.mxu0 %v2459
    %2663 = vmatmul.mubr.bf16.gmra.mrb[0].mxu0 %v2456
    %v2664 = vpop.f32.mrb[0].mxu0
    %v2665 = vadd.f32 0.0, %v2664
    %v2666 = vpop.f32.mrb[0].mxu0
    %v2667 = vadd.f32 0.0, %v2666
    %v2668 = vpop.f32.mrb[0].mxu0
    %v2669 = vadd.f32 0.0, %v2668
    %v2670 = vpop.f32.mrb[0].mxu0
    %v2671 = vadd.f32 0.0, %v2670
    %2672 = vmatprep.mubr.bf16.mxu0 %v2463
    %2673 = vmatmul.mubr.bf16.gmra.mrb[0].mxu0 %v2461
    %v2674 = vpop.f32.mrb[0].mxu0
    %v2675 = vadd.f32 0.0, %v2674
    %v2676 = vpop.f32.mrb[0].mxu0
    %v2677 = vadd.f32 0.0, %v2676
    %v2678 = vpop.f32.mrb[0].mxu0
    %v2679 = vadd.f32 0.0, %v2678
    %v2680 = vpop.f32.mrb[0].mxu0
    %v2681 = vadd.f32 0.0, %v2680
    %2682 = vmatprep.mubr.bf16.mxu0 %v2462
    %2683 = vmatmul.mubr.bf16.gmra.mrb[0].mxu0 %v2460
    %v2684 = vpop.f32.mrb[0].mxu0
    %v2685 = vadd.f32 0.0, %v2684
    %v2686 = vpop.f32.mrb[0].mxu0
    %v2687 = vadd.f32 0.0, %v2686
    %v2688 = vpop.f32.mrb[0].mxu0
    %v2689 = vpop.f32.mrb[0].mxu0
    %2690 = vdwg.mxu0
    %v2691 = vadd.f32 %v2381, %v2665
    %v2692 = vadd.f32 %v2383, %v2667
    %v2693 = vadd.f32 %v2385, %v2669
    %v2694 = vadd.f32 %v2387, %v2671
    %v2695 = vadd.f32 %v2391, %v2675
    %v2696 = vadd.f32 %v2393, %v2677
    %v2697 = vadd.f32 %v2395, %v2679
    %v2698 = vadd.f32 %v2397, %v2681
    %v2699 = vadd.f32 %v2401, %v2685
    %v2700 = vadd.f32 %v2403, %v2687
    %v2701 = vld [vmem:[#allocation2] sm:$0xf8]
    %v2702 = vld [vmem:[#allocation2 + $0x8] sm:$0xf8]
    %v2703 = vld [vmem:[#allocation2 + $0x50] sm:$0x7]
    %v2704 = vld [vmem:[#allocation2 + $0x58] sm:$0x7]
    %v2705 = vpack.c.bf16 %v1826, %v2701
    %v2706 = vpack.c.bf16 %v1827, %v2702
    %v2707 = vpack.c.bf16 %v2703, %v1832
    %v2708 = vpack.c.bf16 %v2704, %v1833
    %s2709 = scalar_lea.vmem [#allocation9], 768
    %v2710 = vld [vmem:[%s2709] sm:$0xff]
    %v2711 = vld [vmem:[%s2709 + $0x8] sm:$0xff]
    %v2712 = vld [vmem:[%s2709 + $0x10] sm:$0xff]
    %v2713 = vld [vmem:[%s2709 + $0x18] sm:$0xff]
    %v2714 = vld [vmem:[%s2709 + $0x20] sm:$0xff]
    %v2715 = vld [vmem:[%s2709 + $0x28] sm:$0xff]
    %v2716 = vld [vmem:[%s2709 + $0x30] sm:$0xff]
    %v2717 = vld [vmem:[%s2709 + $0x38] sm:$0xff]
    %v2718 = vld [vmem:[%s2709 + $0x40] sm:$0xff]
    %v2719 = vld [vmem:[%s2709 + $0x48] sm:$0xff]
    %v2720 = vld [vmem:[%s2709 + $0x50] sm:$0xff]
    %v2721 = vld [vmem:[%s2709 + $0x58] sm:$0xff]
    %v2722 = vld [vmem:[%s2709 + $0x60] sm:$0xff]
    %v2723 = vld [vmem:[%s2709 + $0x68] sm:$0xff]
    %v2724 = vld [vmem:[%s2709 + $0x70] sm:$0xff]
    %v2725 = vld [vmem:[%s2709 + $0x78] sm:$0xff]
    %v2726 = vld [vmem:[%s2709 + $0x80] sm:$0xff]
    %v2727 = vld [vmem:[%s2709 + $0x88] sm:$0xff]
    %v2728 = vld [vmem:[%s2709 + $0x90] sm:$0xff]
    %v2729 = vld [vmem:[%s2709 + $0x98] sm:$0xff]
    %v2730 = vld [vmem:[%s2709 + $0xa0] sm:$0xff]
    %v2731 = vld [vmem:[%s2709 + $0xa8] sm:$0xff]
    %v2732 = vld [vmem:[%s2709 + $0xb0] sm:$0xff]
    %v2733 = vld [vmem:[%s2709 + $0xb8] sm:$0xff]
    %v2734 = vld [vmem:[%s2709 + $0xc0] sm:$0xff]
    %v2735 = vld [vmem:[%s2709 + $0xc8] sm:$0xff]
    %v2736 = vld [vmem:[%s2709 + $0xd0] sm:$0xff]
    %v2737 = vld [vmem:[%s2709 + $0xd8] sm:$0xff]
    %v2738 = vld [vmem:[%s2709 + $0xe0] sm:$0xff]
    %v2739 = vld [vmem:[%s2709 + $0xe8] sm:$0xff]
    %v2740 = vld [vmem:[%s2709 + $0xf0] sm:$0xff]
    %v2741 = vld [vmem:[%s2709 + $0xf8] sm:$0xff]
    %v2743 = vshrl.u32 %v2705, 16
    %v2745 = vrot.slane %v2743, 1
    %v2746 = vshll.u32 %v2705, 16
    %v2748 = vrot.slane %v2746, 2
    %v2749 = vor.u32 %v2745, %v2748
    %v2750 = vrot.slane %v1937, 1
    %v2751 = vrot.slane %v1921, 2
    %v2752 = vor.u32 %v2750, %v2751
    %v2753 = vsel %vm1073, %v2749, %v2752
    %v2755 = vshrl.u32 %v2706, 16
    %v2757 = vrot.slane %v2755, 1
    %v2758 = vshll.u32 %v2706, 16
    %v2760 = vrot.slane %v2758, 2
    %v2761 = vor.u32 %v2757, %v2760
    %v2762 = vrot.slane %v1945, 1
    %v2763 = vrot.slane %v1933, 2
    %v2764 = vor.u32 %v2762, %v2763
    %v2765 = vsel %vm1073, %v2761, %v2764
    %v2767 = vshrl.u32 %v2707, 16
    %v2769 = vrot.slane %v2767, 1
    %v2770 = vshll.u32 %v2707, 16
    %v2772 = vrot.slane %v2770, 2
    %v2773 = vor.u32 %v2769, %v2772
    %v2774 = vsel %vm1073, %v2752, %v2773
    %v2776 = vshrl.u32 %v2708, 16
    %v2778 = vrot.slane %v2776, 1
    %v2779 = vshll.u32 %v2708, 16
    %v2781 = vrot.slane %v2779, 2
    %v2782 = vor.u32 %v2778, %v2781
    %v2783 = vsel %vm1073, %v2764, %v2782
    %v2822 = vunpack.c.l.b16 %v2710
    %v2823 = vunpack.c.h.b16 %v2710
    %v2824 = vunpack.c.l.b16 %v2711
    %v2825 = vunpack.c.h.b16 %v2711
    %v2826 = vunpack.c.l.b16 %v2712
    %v2827 = vunpack.c.h.b16 %v2712
    %v2828 = vunpack.c.l.b16 %v2713
    %v2829 = vunpack.c.h.b16 %v2713
    %v2830 = vunpack.c.l.b16 %v2714
    %v2831 = vunpack.c.h.b16 %v2714
    %v2832 = vunpack.c.l.b16 %v2715
    %v2833 = vunpack.c.h.b16 %v2715
    %v2834 = vunpack.c.l.b16 %v2716
    %v2835 = vunpack.c.h.b16 %v2716
    %v2836 = vunpack.c.l.b16 %v2717
    %v2837 = vunpack.c.h.b16 %v2717
    %v2838 = vunpack.c.l.b16 %v2718
    %v2839 = vunpack.c.h.b16 %v2718
    %v2840 = vunpack.c.l.b16 %v2719
    %v2841 = vunpack.c.h.b16 %v2719
    %v2842 = vunpack.c.l.b16 %v2720
    %v2843 = vunpack.c.h.b16 %v2720
    %v2844 = vunpack.c.l.b16 %v2721
    %v2845 = vunpack.c.h.b16 %v2721
    %v2846 = vunpack.c.l.b16 %v2722
    %v2847 = vunpack.c.h.b16 %v2722
    %v2848 = vunpack.c.l.b16 %v2723
    %v2849 = vunpack.c.h.b16 %v2723
    %v2850 = vunpack.c.l.b16 %v2724
    %v2851 = vunpack.c.h.b16 %v2724
    %v2852 = vunpack.c.l.b16 %v2725
    %v2853 = vunpack.c.h.b16 %v2725
    %v2854 = vunpack.c.l.b16 %v2726
    %v2855 = vunpack.c.h.b16 %v2726
    %v2856 = vunpack.c.l.b16 %v2727
    %v2857 = vunpack.c.h.b16 %v2727
    %v2858 = vunpack.c.l.b16 %v2728
    %v2859 = vunpack.c.h.b16 %v2728
    %v2860 = vunpack.c.l.b16 %v2729
    %v2861 = vunpack.c.h.b16 %v2729
    %v2862 = vunpack.c.l.b16 %v2730
    %v2863 = vunpack.c.h.b16 %v2730
    %v2864 = vunpack.c.l.b16 %v2731
    %v2865 = vunpack.c.h.b16 %v2731
    %v2866 = vunpack.c.l.b16 %v2732
    %v2867 = vunpack.c.h.b16 %v2732
    %v2868 = vunpack.c.l.b16 %v2733
    %v2869 = vunpack.c.h.b16 %v2733
    %v2870 = vunpack.c.l.b16 %v2734
    %v2871 = vunpack.c.h.b16 %v2734
    %v2872 = vunpack.c.l.b16 %v2735
    %v2873 = vunpack.c.h.b16 %v2735
    %v2874 = vunpack.c.l.b16 %v2736
    %v2875 = vunpack.c.h.b16 %v2736
    %v2876 = vunpack.c.l.b16 %v2737
    %v2877 = vunpack.c.h.b16 %v2737
    %v2878 = vunpack.c.l.b16 %v2738
    %v2879 = vunpack.c.h.b16 %v2738
    %v2880 = vunpack.c.l.b16 %v2739
    %v2881 = vunpack.c.h.b16 %v2739
    %v2882 = vunpack.c.l.b16 %v2740
    %v2883 = vunpack.c.h.b16 %v2740
    %v2884 = vunpack.c.l.b16 %v2741
    %v2885 = vunpack.c.h.b16 %v2741
    %v2886 = vpack.c.b16 %v2824, %v2822
    %v2887 = vpack.c.b16 %v2825, %v2823
    %v2888 = vpack.c.b16 %v2828, %v2826
    %v2889 = vpack.c.b16 %v2829, %v2827
    %v2890 = vpack.c.b16 %v2832, %v2830
    %v2891 = vpack.c.b16 %v2833, %v2831
    %v2892 = vpack.c.b16 %v2836, %v2834
    %v2893 = vpack.c.b16 %v2837, %v2835
    %v2894 = vpack.c.b16 %v2840, %v2838
    %v2895 = vpack.c.b16 %v2841, %v2839
    %v2896 = vpack.c.b16 %v2844, %v2842
    %v2897 = vpack.c.b16 %v2845, %v2843
    %v2898 = vpack.c.b16 %v2848, %v2846
    %v2899 = vpack.c.b16 %v2849, %v2847
    %v2900 = vpack.c.b16 %v2852, %v2850
    %v2901 = vpack.c.b16 %v2853, %v2851
    %v2902 = vpack.c.b16 %v2856, %v2854
    %v2903 = vpack.c.b16 %v2857, %v2855
    %v2904 = vpack.c.b16 %v2860, %v2858
    %v2905 = vpack.c.b16 %v2861, %v2859
    %v2906 = vpack.c.b16 %v2864, %v2862
    %v2907 = vpack.c.b16 %v2865, %v2863
    %v2908 = vpack.c.b16 %v2868, %v2866
    %v2909 = vpack.c.b16 %v2869, %v2867
    %v2910 = vpack.c.b16 %v2872, %v2870
    %v2911 = vpack.c.b16 %v2873, %v2871
    %v2912 = vpack.c.b16 %v2876, %v2874
    %v2913 = vpack.c.b16 %v2877, %v2875
    %v2914 = vpack.c.b16 %v2880, %v2878
    %v2915 = vpack.c.b16 %v2881, %v2879
    %v2916 = vpack.c.b16 %v2884, %v2882
    %v2917 = vpack.c.b16 %v2885, %v2883
    %2950 = vmatprep.subr.bf16.mxu0 %v2887
    %2951 = vmatpush1.bf16.msra.mxu0 %v2886
    %2952 = vmatprep.subr.bf16.mxu0 %v2889
    %2953 = vmatpush1.bf16.msra.mxu0 %v2888
    %2954 = vmatprep.subr.bf16.mxu0 %v2891
    %2955 = vmatpush1.bf16.msra.mxu0 %v2890
    %2956 = vmatprep.subr.bf16.mxu0 %v2893
    %2957 = vmatpush1.bf16.msra.mxu0 %v2892
    %2958 = vmatprep.subr.bf16.mxu0 %v2895
    %2959 = vmatpush1.bf16.msra.mxu0 %v2894
    %2960 = vmatprep.subr.bf16.mxu0 %v2897
    %2961 = vmatpush1.bf16.msra.mxu0 %v2896
    %2962 = vmatprep.subr.bf16.mxu0 %v2899
    %2963 = vmatpush1.bf16.msra.mxu0 %v2898
    %2964 = vmatprep.subr.bf16.mxu0 %v2901
    %2965 = vmatpush1.bf16.msra.mxu0 %v2900
    %2966 = vmatprep.subr.bf16.mxu0 %v2903
    %2967 = vmatpush1.bf16.msra.mxu0 %v2902
    %2968 = vmatprep.subr.bf16.mxu0 %v2905
    %2969 = vmatpush1.bf16.msra.mxu0 %v2904
    %2970 = vmatprep.subr.bf16.mxu0 %v2907
    %2971 = vmatpush1.bf16.msra.mxu0 %v2906
    %2972 = vmatprep.subr.bf16.mxu0 %v2909
    %2973 = vmatpush1.bf16.msra.mxu0 %v2908
    %2974 = vmatprep.subr.bf16.mxu0 %v2911
    %2975 = vmatpush1.bf16.msra.mxu0 %v2910
    %2976 = vmatprep.subr.bf16.mxu0 %v2913
    %2977 = vmatpush1.bf16.msra.mxu0 %v2912
    %2978 = vmatprep.subr.bf16.mxu0 %v2915
    %2979 = vmatpush1.bf16.msra.mxu0 %v2914
    %2980 = vmatprep.subr.bf16.mxu0 %v2917
    %2981 = vmatpush1.bf16.msra.mxu0 %v2916
    %2982 = vmatprep.mubr.bf16.mxu0 %v2765
    %2983 = vmatmul.mubr.bf16.gmra.mrb[0].mxu0 %v2753
    %v2984 = vpop.f32.mrb[0].mxu0
    %v2985 = vadd.f32 0.0, %v2984
    %v2986 = vpop.f32.mrb[0].mxu0
    %v2987 = vadd.f32 0.0, %v2986
    %v2988 = vpop.f32.mrb[0].mxu0
    %v2989 = vadd.f32 0.0, %v2988
    %v2990 = vpop.f32.mrb[0].mxu0
    %v2991 = vadd.f32 0.0, %v2990
    %2992 = vmatprep.mubr.bf16.mxu0 %v2783
    %2993 = vmatmul.mubr.bf16.gmra.mrb[0].mxu0 %v2774
    %v2994 = vpop.f32.mrb[0].mxu0
    %v2995 = vadd.f32 0.0, %v2994
    %v2996 = vpop.f32.mrb[0].mxu0
    %v2997 = vadd.f32 0.0, %v2996
    %v2998 = vpop.f32.mrb[0].mxu0
    %v2999 = vadd.f32 0.0, %v2998
    %v3000 = vpop.f32.mrb[0].mxu0
    %v3001 = vadd.f32 0.0, %v3000
    %3002 = vmatprep.mubr.bf16.mxu0 %v2782
    %3003 = vmatmul.mubr.bf16.gmra.mrb[0].mxu0 %v2773
    %v3004 = vpop.f32.mrb[0].mxu0
    %v3005 = vadd.f32 0.0, %v3004
    %v3006 = vpop.f32.mrb[0].mxu0
    %v3007 = vadd.f32 0.0, %v3006
    %v3008 = vpop.f32.mrb[0].mxu0
    %v3009 = vpop.f32.mrb[0].mxu0
    %3010 = vdwg.mxu0
    %v3011 = vadd.f32 %v2691, %v2985
    %v3012 = vadd.f32 %v2692, %v2987
    %v3013 = vadd.f32 %v2693, %v2989
    %v3014 = vadd.f32 %v2694, %v2991
    %v3015 = vadd.f32 %v2695, %v2995
    %v3016 = vadd.f32 %v2696, %v2997
    %v3017 = vadd.f32 %v2697, %v2999
    %v3018 = vadd.f32 %v2698, %v3001
    %v3019 = vadd.f32 %v2699, %v3005
    %v3020 = vadd.f32 %v2700, %v3007
    %v3021 = vld [vmem:[#allocation2] sm:$0xf0]
    %v3022 = vld [vmem:[#allocation2 + $0x8] sm:$0xf0]
    %v3023 = vld [vmem:[#allocation2 + $0x50] sm:$0xf]
    %v3024 = vld [vmem:[#allocation2 + $0x58] sm:$0xf]
    %v3025 = vpack.c.bf16 %v1826, %v3021
    %v3026 = vpack.c.bf16 %v1827, %v3022
    %v3027 = vpack.c.bf16 %v3023, %v1832
    %v3028 = vpack.c.bf16 %v3024, %v1833
    %s3029 = scalar_lea.vmem [#allocation9], 1024
    %v3030 = vld [vmem:[%s3029] sm:$0xff]
    %v3031 = vld [vmem:[%s3029 + $0x8] sm:$0xff]
    %v3032 = vld [vmem:[%s3029 + $0x10] sm:$0xff]
    %v3033 = vld [vmem:[%s3029 + $0x18] sm:$0xff]
    %v3034 = vld [vmem:[%s3029 + $0x20] sm:$0xff]
    %v3035 = vld [vmem:[%s3029 + $0x28] sm:$0xff]
    %v3036 = vld [vmem:[%s3029 + $0x30] sm:$0xff]
    %v3037 = vld [vmem:[%s3029 + $0x38] sm:$0xff]
    %v3038 = vld [vmem:[%s3029 + $0x40] sm:$0xff]
    %v3039 = vld [vmem:[%s3029 + $0x48] sm:$0xff]
    %v3040 = vld [vmem:[%s3029 + $0x50] sm:$0xff]
    %v3041 = vld [vmem:[%s3029 + $0x58] sm:$0xff]
    %v3042 = vld [vmem:[%s3029 + $0x60] sm:$0xff]
    %v3043 = vld [vmem:[%s3029 + $0x68] sm:$0xff]
    %v3044 = vld [vmem:[%s3029 + $0x70] sm:$0xff]
    %v3045 = vld [vmem:[%s3029 + $0x78] sm:$0xff]
    %v3046 = vld [vmem:[%s3029 + $0x80] sm:$0xff]
    %v3047 = vld [vmem:[%s3029 + $0x88] sm:$0xff]
    %v3048 = vld [vmem:[%s3029 + $0x90] sm:$0xff]
    %v3049 = vld [vmem:[%s3029 + $0x98] sm:$0xff]
    %v3050 = vld [vmem:[%s3029 + $0xa0] sm:$0xff]
    %v3051 = vld [vmem:[%s3029 + $0xa8] sm:$0xff]
    %v3052 = vld [vmem:[%s3029 + $0xb0] sm:$0xff]
    %v3053 = vld [vmem:[%s3029 + $0xb8] sm:$0xff]
    %v3054 = vld [vmem:[%s3029 + $0xc0] sm:$0xff]
    %v3055 = vld [vmem:[%s3029 + $0xc8] sm:$0xff]
    %v3056 = vld [vmem:[%s3029 + $0xd0] sm:$0xff]
    %v3057 = vld [vmem:[%s3029 + $0xd8] sm:$0xff]
    %v3058 = vld [vmem:[%s3029 + $0xe0] sm:$0xff]
    %v3059 = vld [vmem:[%s3029 + $0xe8] sm:$0xff]
    %v3060 = vld [vmem:[%s3029 + $0xf0] sm:$0xff]
    %v3061 = vld [vmem:[%s3029 + $0xf8] sm:$0xff]
    %v3066 = vrot.slane %v3025, 2
    %v3067 = vrot.slane %v1836, 2
    %v3068 = vsel %vm1398, %v3066, %v3067
    %v3069 = vrot.slane %v3026, 2
    %v3070 = vrot.slane %v1837, 2
    %v3071 = vsel %vm1398, %v3069, %v3070
    %v3072 = vrot.slane %v3027, 2
    %v3073 = vsel %vm1398, %v3067, %v3072
    %v3074 = vrot.slane %v3028, 2
    %v3075 = vsel %vm1398, %v3070, %v3074
    %v3114 = vunpack.c.l.b16 %v3030
    %v3115 = vunpack.c.h.b16 %v3030
    %v3116 = vunpack.c.l.b16 %v3031
    %v3117 = vunpack.c.h.b16 %v3031
    %v3118 = vunpack.c.l.b16 %v3032
    %v3119 = vunpack.c.h.b16 %v3032
    %v3120 = vunpack.c.l.b16 %v3033
    %v3121 = vunpack.c.h.b16 %v3033
    %v3122 = vunpack.c.l.b16 %v3034
    %v3123 = vunpack.c.h.b16 %v3034
    %v3124 = vunpack.c.l.b16 %v3035
    %v3125 = vunpack.c.h.b16 %v3035
    %v3126 = vunpack.c.l.b16 %v3036
    %v3127 = vunpack.c.h.b16 %v3036
    %v3128 = vunpack.c.l.b16 %v3037
    %v3129 = vunpack.c.h.b16 %v3037
    %v3130 = vunpack.c.l.b16 %v3038
    %v3131 = vunpack.c.h.b16 %v3038
    %v3132 = vunpack.c.l.b16 %v3039
    %v3133 = vunpack.c.h.b16 %v3039
    %v3134 = vunpack.c.l.b16 %v3040
    %v3135 = vunpack.c.h.b16 %v3040
    %v3136 = vunpack.c.l.b16 %v3041
    %v3137 = vunpack.c.h.b16 %v3041
    %v3138 = vunpack.c.l.b16 %v3042
    %v3139 = vunpack.c.h.b16 %v3042
    %v3140 = vunpack.c.l.b16 %v3043
    %v3141 = vunpack.c.h.b16 %v3043
    %v3142 = vunpack.c.l.b16 %v3044
    %v3143 = vunpack.c.h.b16 %v3044
    %v3144 = vunpack.c.l.b16 %v3045
    %v3145 = vunpack.c.h.b16 %v3045
    %v3146 = vunpack.c.l.b16 %v3046
    %v3147 = vunpack.c.h.b16 %v3046
    %v3148 = vunpack.c.l.b16 %v3047
    %v3149 = vunpack.c.h.b16 %v3047
    %v3150 = vunpack.c.l.b16 %v3048
    %v3151 = vunpack.c.h.b16 %v3048
    %v3152 = vunpack.c.l.b16 %v3049
    %v3153 = vunpack.c.h.b16 %v3049
    %v3154 = vunpack.c.l.b16 %v3050
    %v3155 = vunpack.c.h.b16 %v3050
    %v3156 = vunpack.c.l.b16 %v3051
    %v3157 = vunpack.c.h.b16 %v3051
    %v3158 = vunpack.c.l.b16 %v3052
    %v3159 = vunpack.c.h.b16 %v3052
    %v3160 = vunpack.c.l.b16 %v3053
    %v3161 = vunpack.c.h.b16 %v3053
    %v3162 = vunpack.c.l.b16 %v3054
    %v3163 = vunpack.c.h.b16 %v3054
    %v3164 = vunpack.c.l.b16 %v3055
    %v3165 = vunpack.c.h.b16 %v3055
    %v3166 = vunpack.c.l.b16 %v3056
    %v3167 = vunpack.c.h.b16 %v3056
    %v3168 = vunpack.c.l.b16 %v3057
    %v3169 = vunpack.c.h.b16 %v3057
    %v3170 = vunpack.c.l.b16 %v3058
    %v3171 = vunpack.c.h.b16 %v3058
    %v3172 = vunpack.c.l.b16 %v3059
    %v3173 = vunpack.c.h.b16 %v3059
    %v3174 = vunpack.c.l.b16 %v3060
    %v3175 = vunpack.c.h.b16 %v3060
    %v3176 = vunpack.c.l.b16 %v3061
    %v3177 = vunpack.c.h.b16 %v3061
    %v3178 = vpack.c.b16 %v3116, %v3114
    %v3179 = vpack.c.b16 %v3117, %v3115
    %v3180 = vpack.c.b16 %v3120, %v3118
    %v3181 = vpack.c.b16 %v3121, %v3119
    %v3182 = vpack.c.b16 %v3124, %v3122
    %v3183 = vpack.c.b16 %v3125, %v3123
    %v3184 = vpack.c.b16 %v3128, %v3126
    %v3185 = vpack.c.b16 %v3129, %v3127
    %v3186 = vpack.c.b16 %v3132, %v3130
    %v3187 = vpack.c.b16 %v3133, %v3131
    %v3188 = vpack.c.b16 %v3136, %v3134
    %v3189 = vpack.c.b16 %v3137, %v3135
    %v3190 = vpack.c.b16 %v3140, %v3138
    %v3191 = vpack.c.b16 %v3141, %v3139
    %v3192 = vpack.c.b16 %v3144, %v3142
    %v3193 = vpack.c.b16 %v3145, %v3143
    %v3194 = vpack.c.b16 %v3148, %v3146
    %v3195 = vpack.c.b16 %v3149, %v3147
    %v3196 = vpack.c.b16 %v3152, %v3150
    %v3197 = vpack.c.b16 %v3153, %v3151
    %v3198 = vpack.c.b16 %v3156, %v3154
    %v3199 = vpack.c.b16 %v3157, %v3155
    %v3200 = vpack.c.b16 %v3160, %v3158
    %v3201 = vpack.c.b16 %v3161, %v3159
    %v3202 = vpack.c.b16 %v3164, %v3162
    %v3203 = vpack.c.b16 %v3165, %v3163
    %v3204 = vpack.c.b16 %v3168, %v3166
    %v3205 = vpack.c.b16 %v3169, %v3167
    %v3206 = vpack.c.b16 %v3172, %v3170
    %v3207 = vpack.c.b16 %v3173, %v3171
    %v3208 = vpack.c.b16 %v3176, %v3174
    %v3209 = vpack.c.b16 %v3177, %v3175
    %3242 = vmatprep.subr.bf16.mxu0 %v3179
    %3243 = vmatpush1.bf16.msra.mxu0 %v3178
    %3244 = vmatprep.subr.bf16.mxu0 %v3181
    %3245 = vmatpush1.bf16.msra.mxu0 %v3180
    %3246 = vmatprep.subr.bf16.mxu0 %v3183
    %3247 = vmatpush1.bf16.msra.mxu0 %v3182
    %3248 = vmatprep.subr.bf16.mxu0 %v3185
    %3249 = vmatpush1.bf16.msra.mxu0 %v3184
    %3250 = vmatprep.subr.bf16.mxu0 %v3187
    %3251 = vmatpush1.bf16.msra.mxu0 %v3186
    %3252 = vmatprep.subr.bf16.mxu0 %v3189
    %3253 = vmatpush1.bf16.msra.mxu0 %v3188
    %3254 = vmatprep.subr.bf16.mxu0 %v3191
    %3255 = vmatpush1.bf16.msra.mxu0 %v3190
    %3256 = vmatprep.subr.bf16.mxu0 %v3193
    %3257 = vmatpush1.bf16.msra.mxu0 %v3192
    %3258 = vmatprep.subr.bf16.mxu0 %v3195
    %3259 = vmatpush1.bf16.msra.mxu0 %v3194
    %3260 = vmatprep.subr.bf16.mxu0 %v3197
    %3261 = vmatpush1.bf16.msra.mxu0 %v3196
    %3262 = vmatprep.subr.bf16.mxu0 %v3199
    %3263 = vmatpush1.bf16.msra.mxu0 %v3198
    %3264 = vmatprep.subr.bf16.mxu0 %v3201
    %3265 = vmatpush1.bf16.msra.mxu0 %v3200
    %3266 = vmatprep.subr.bf16.mxu0 %v3203
    %3267 = vmatpush1.bf16.msra.mxu0 %v3202
    %3268 = vmatprep.subr.bf16.mxu0 %v3205
    %3269 = vmatpush1.bf16.msra.mxu0 %v3204
    %3270 = vmatprep.subr.bf16.mxu0 %v3207
    %3271 = vmatpush1.bf16.msra.mxu0 %v3206
    %3272 = vmatprep.subr.bf16.mxu0 %v3209
    %3273 = vmatpush1.bf16.msra.mxu0 %v3208
    %3274 = vmatprep.mubr.bf16.mxu0 %v3071
    %3275 = vmatmul.mubr.bf16.gmra.mrb[0].mxu0 %v3068
    %v3276 = vpop.f32.mrb[0].mxu0
    %v3277 = vadd.f32 0.0, %v3276
    %v3278 = vpop.f32.mrb[0].mxu0
    %v3279 = vadd.f32 0.0, %v3278
    %v3280 = vpop.f32.mrb[0].mxu0
    %v3281 = vadd.f32 0.0, %v3280
    %v3282 = vpop.f32.mrb[0].mxu0
    %v3283 = vadd.f32 0.0, %v3282
    %3284 = vmatprep.mubr.bf16.mxu0 %v3075
    %3285 = vmatmul.mubr.bf16.gmra.mrb[0].mxu0 %v3073
    %v3286 = vpop.f32.mrb[0].mxu0
    %v3287 = vadd.f32 0.0, %v3286
    %v3288 = vpop.f32.mrb[0].mxu0
    %v3289 = vadd.f32 0.0, %v3288
    %v3290 = vpop.f32.mrb[0].mxu0
    %v3291 = vadd.f32 0.0, %v3290
    %v3292 = vpop.f32.mrb[0].mxu0
    %v3293 = vadd.f32 0.0, %v3292
    %3294 = vmatprep.mubr.bf16.mxu0 %v3074
    %3295 = vmatmul.mubr.bf16.gmra.mrb[0].mxu0 %v3072
    %v3296 = vpop.f32.mrb[0].mxu0
    %v3297 = vadd.f32 0.0, %v3296
    %v3298 = vpop.f32.mrb[0].mxu0
    %v3299 = vadd.f32 0.0, %v3298
    %v3300 = vpop.f32.mrb[0].mxu0
    %v3301 = vpop.f32.mrb[0].mxu0
    %3302 = vdwg.mxu0
    %v3303 = vadd.f32 %v3011, %v3277
    %v3304 = vadd.f32 %v3012, %v3279
    %v3305 = vadd.f32 %v3013, %v3281
    %v3306 = vadd.f32 %v3014, %v3283
    %v3307 = vadd.f32 %v3015, %v3287
    %v3308 = vadd.f32 %v3016, %v3289
    %v3309 = vadd.f32 %v3017, %v3291
    %v3310 = vadd.f32 %v3018, %v3293
    %v3311 = vadd.f32 %v3019, %v3297
    %v3312 = vadd.f32 %v3020, %v3299
    %v3313 = vld [vmem:[%s4] sm:$0x3]
    %v3315 = vlaneseq
    %v3316 = vshrl.u32 %v3315, 7
    %v3317 = vsub.s32 0, %v3316
    %v3318 = vrot.slane %v3313, %v3317
    %v3319 = vlaneseq
    %v3320 = vshrl.u32 %v3319, 7
    %v3321 = vsub.s32 1, %v3320
    %v3322 = vrot.slane %v3313, %v3321
    %v3325 = vadd.f32 %v3303, %v3318
    %v3326 = vadd.f32 %v3304, %v3322
    %v3327 = vadd.f32 %v3305, %v3318
    %v3328 = vadd.f32 %v3306, %v3322
    %v3329 = vadd.f32 %v3307, %v3318
    %v3330 = vadd.f32 %v3308, %v3322
    %v3331 = vadd.f32 %v3309, %v3318
    %v3332 = vadd.f32 %v3310, %v3322
    %v3333 = vadd.f32 %v3311, %v3318
    %v3334 = vadd.f32 %v3312, %v3322
    %v3341 = vrot.slane %v3329, 4
    %v3342 = vrot.slane %v3331, 4
    %v3343 = vsel %vm130, %v3341, %v3342
    %v3344 = vrot.slane %v3330, 4
    %v3345 = vrot.slane %v3332, 4
    %v3346 = vsel %vm130, %v3344, %v3345
    %v3347 = vrot.slane %v3333, 4
    %v3348 = vsel %vm130, %v3342, %v3347
    %v3349 = vrot.slane %v3334, 4
    %v3350 = vsel %vm130, %v3345, %v3349
    %v3357 = vmax.f32 %v3325, %v1723
    %v3358 = vmax.f32 %v3326, %v1724
    %v3359 = vmax.f32 %v3327, %v1725
    %v3360 = vmax.f32 %v3328, %v1726
    %v3361 = vmax.f32 %v3329, %v1727
    %v3362 = vmax.f32 %v3330, %v1728
    %v3363 = vmax.f32 %v3343, %v1729
    %v3364 = vmax.f32 %v3346, %v1730
    %v3365 = vmax.f32 %v3348, %v1731
    %v3366 = vmax.f32 %v3350, %v1732
    %v3367 = vmax.f32 %v3347, %v1733
    %v3368 = vmax.f32 %v3349, %v1734
    %vm3369 = vcmp.ge.f32.partialorder %v3357, 0.0
    %vm3370 = vcmp.ge.f32.partialorder %v3358, 0.0
    %vm3371 = vcmp.ge.f32.partialorder %v3359, 0.0
    %vm3372 = vcmp.ge.f32.partialorder %v3360, 0.0
    %vm3373 = vcmp.ge.f32.partialorder %v3361, 0.0
    %vm3374 = vcmp.ge.f32.partialorder %v3362, 0.0
    %vm3375 = vcmp.ge.f32.partialorder %v3363, 0.0
    %vm3376 = vcmp.ge.f32.partialorder %v3364, 0.0
    %vm3377 = vcmp.ge.f32.partialorder %v3365, 0.0
    %vm3378 = vcmp.ge.f32.partialorder %v3366, 0.0
    %vm3379 = vcmp.ge.f32.partialorder %v3367, 0.0
    %vm3380 = vcmp.ge.f32.partialorder %v3368, 0.0
    %v3381 = vmul.f32 %v109, %v3357
    %v3382 = vmul.f32 %v109, %v3358
    %v3383 = vmul.f32 %v109, %v3359
    %v3384 = vmul.f32 %v109, %v3360
    %v3385 = vmul.f32 %v109, %v3361
    %v3386 = vmul.f32 %v109, %v3362
    %v3387 = vmul.f32 %v109, %v3363
    %v3388 = vmul.f32 %v109, %v3364
    %v3389 = vmul.f32 %v109, %v3365
    %v3390 = vmul.f32 %v109, %v3366
    %v3391 = vmul.f32 %v109, %v3367
    %v3392 = vmul.f32 %v109, %v3368
    %v3393 = vsel %vm3369, %v3357, %v3381
    %v3394 = vsel %vm3370, %v3358, %v3382
    %v3395 = vsel %vm3371, %v3359, %v3383
    %v3396 = vsel %vm3372, %v3360, %v3384
    %v3397 = vsel %vm3373, %v3361, %v3385
    %v3398 = vsel %vm3374, %v3362, %v3386
    %v3399 = vsel %vm3375, %v3363, %v3387
    %v3400 = vsel %vm3376, %v3364, %v3388
    %v3401 = vsel %vm3377, %v3365, %v3389
    %v3402 = vsel %vm3378, %v3366, %v3390
    %v3403 = vsel %vm3379, %v3367, %v3391
    %v3404 = vsel %vm3380, %v3368, %v3392
    %v3405 = vpack.c.bf16 %v3395, %v3393
    %v3406 = vpack.c.bf16 %v3396, %v3394
    %v3407 = vpack.c.bf16 %v3397, %v3397
    %v3408 = vpack.c.bf16 %v3398, %v3398
    %v3409 = vpack.c.bf16 %v3401, %v3399
    %v3410 = vpack.c.bf16 %v3402, %v3400
    %v3411 = vpack.c.bf16 %v3403, %v3403
    %v3412 = vpack.c.bf16 %v3404, %v3404
    %v3421 = vrot.slane %v3405, 1
    %v3422 = vrot.slane %v3407, 1
    %v3423 = vsel %vm784, %v3421, %v3422
    %v3424 = vrot.slane %v3406, 1
    %v3425 = vrot.slane %v3408, 1
    %v3426 = vsel %vm784, %v3424, %v3425
    %v3427 = vrot.slane %v3409, 1
    %v3428 = vrot.slane %v3411, 1
    %v3429 = vsel %vm784, %v3427, %v3428
    %v3430 = vrot.slane %v3410, 1
    %v3431 = vrot.slane %v3412, 1
    %v3432 = vsel %vm784, %v3430, %v3431
    %v3437 = vld [vmem:[#allocation10] sm:$0xff]
    %v3438 = vld [vmem:[#allocation10 + $0x8] sm:$0xff]
    %v3439 = vld [vmem:[#allocation10 + $0x10] sm:$0xff]
    %v3440 = vld [vmem:[#allocation10 + $0x18] sm:$0xff]
    %v3441 = vld [vmem:[#allocation10 + $0x20] sm:$0xff]
    %v3442 = vld [vmem:[#allocation10 + $0x28] sm:$0xff]
    %v3443 = vld [vmem:[#allocation10 + $0x30] sm:$0xff]
    %v3444 = vld [vmem:[#allocation10 + $0x38] sm:$0xff]
    %v3445 = vld [vmem:[#allocation10 + $0x40] sm:$0xff]
    %v3446 = vld [vmem:[#allocation10 + $0x48] sm:$0xff]
    %v3447 = vld [vmem:[#allocation10 + $0x50] sm:$0xff]
    %v3448 = vld [vmem:[#allocation10 + $0x58] sm:$0xff]
    %v3449 = vld [vmem:[#allocation10 + $0x60] sm:$0xff]
    %v3450 = vld [vmem:[#allocation10 + $0x68] sm:$0xff]
    %v3451 = vld [vmem:[#allocation10 + $0x70] sm:$0xff]
    %v3452 = vld [vmem:[#allocation10 + $0x78] sm:$0xff]
    %v3453 = vld [vmem:[#allocation10 + $0x80] sm:$0xff]
    %v3454 = vld [vmem:[#allocation10 + $0x88] sm:$0xff]
    %v3455 = vld [vmem:[#allocation10 + $0x90] sm:$0xff]
    %v3456 = vld [vmem:[#allocation10 + $0x98] sm:$0xff]
    %v3457 = vld [vmem:[#allocation10 + $0xa0] sm:$0xff]
    %v3458 = vld [vmem:[#allocation10 + $0xa8] sm:$0xff]
    %v3459 = vld [vmem:[#allocation10 + $0xb0] sm:$0xff]
    %v3460 = vld [vmem:[#allocation10 + $0xb8] sm:$0xff]
    %v3461 = vld [vmem:[#allocation10 + $0xc0] sm:$0xff]
    %v3462 = vld [vmem:[#allocation10 + $0xc8] sm:$0xff]
    %v3463 = vld [vmem:[#allocation10 + $0xd0] sm:$0xff]
    %v3464 = vld [vmem:[#allocation10 + $0xd8] sm:$0xff]
    %v3465 = vld [vmem:[#allocation10 + $0xe0] sm:$0xff]
    %v3466 = vld [vmem:[#allocation10 + $0xe8] sm:$0xff]
    %v3467 = vld [vmem:[#allocation10 + $0xf0] sm:$0xff]
    %v3468 = vld [vmem:[#allocation10 + $0xf8] sm:$0xff]
    %v3469 = vld [vmem:[%s6] sm:$0x3]
    %v3471 = vlaneseq
    %v3472 = vshrl.u32 %v3471, 7
    %v3473 = vsub.s32 0, %v3472
    %v3474 = vrot.slane %v3469, %v3473
    %v3475 = vlaneseq
    %v3476 = vshrl.u32 %v3475, 7
    %v3477 = vsub.s32 1, %v3476
    %v3478 = vrot.slane %v3469, %v3477
    %v3513 = vunpack.c.l.b16 %v3437
    %v3514 = vunpack.c.h.b16 %v3437
    %v3515 = vunpack.c.l.b16 %v3438
    %v3516 = vunpack.c.h.b16 %v3438
    %v3517 = vunpack.c.l.b16 %v3439
    %v3518 = vunpack.c.h.b16 %v3439
    %v3519 = vunpack.c.l.b16 %v3440
    %v3520 = vunpack.c.h.b16 %v3440
    %v3521 = vunpack.c.l.b16 %v3441
    %v3522 = vunpack.c.h.b16 %v3441
    %v3523 = vunpack.c.l.b16 %v3442
    %v3524 = vunpack.c.h.b16 %v3442
    %v3525 = vunpack.c.l.b16 %v3443
    %v3526 = vunpack.c.h.b16 %v3443
    %v3527 = vunpack.c.l.b16 %v3444
    %v3528 = vunpack.c.h.b16 %v3444
    %v3529 = vunpack.c.l.b16 %v3445
    %v3530 = vunpack.c.h.b16 %v3445
    %v3531 = vunpack.c.l.b16 %v3446
    %v3532 = vunpack.c.h.b16 %v3446
    %v3533 = vunpack.c.l.b16 %v3447
    %v3534 = vunpack.c.h.b16 %v3447
    %v3535 = vunpack.c.l.b16 %v3448
    %v3536 = vunpack.c.h.b16 %v3448
    %v3537 = vunpack.c.l.b16 %v3449
    %v3538 = vunpack.c.h.b16 %v3449
    %v3539 = vunpack.c.l.b16 %v3450
    %v3540 = vunpack.c.h.b16 %v3450
    %v3541 = vunpack.c.l.b16 %v3451
    %v3542 = vunpack.c.h.b16 %v3451
    %v3543 = vunpack.c.l.b16 %v3452
    %v3544 = vunpack.c.h.b16 %v3452
    %v3545 = vunpack.c.l.b16 %v3453
    %v3546 = vunpack.c.h.b16 %v3453
    %v3547 = vunpack.c.l.b16 %v3454
    %v3548 = vunpack.c.h.b16 %v3454
    %v3549 = vunpack.c.l.b16 %v3455
    %v3550 = vunpack.c.h.b16 %v3455
    %v3551 = vunpack.c.l.b16 %v3456
    %v3552 = vunpack.c.h.b16 %v3456
    %v3553 = vunpack.c.l.b16 %v3457
    %v3554 = vunpack.c.h.b16 %v3457
    %v3555 = vunpack.c.l.b16 %v3458
    %v3556 = vunpack.c.h.b16 %v3458
    %v3557 = vunpack.c.l.b16 %v3459
    %v3558 = vunpack.c.h.b16 %v3459
    %v3559 = vunpack.c.l.b16 %v3460
    %v3560 = vunpack.c.h.b16 %v3460
    %v3561 = vunpack.c.l.b16 %v3461
    %v3562 = vunpack.c.h.b16 %v3461
    %v3563 = vunpack.c.l.b16 %v3462
    %v3564 = vunpack.c.h.b16 %v3462
    %v3565 = vunpack.c.l.b16 %v3463
    %v3566 = vunpack.c.h.b16 %v3463
    %v3567 = vunpack.c.l.b16 %v3464
    %v3568 = vunpack.c.h.b16 %v3464
    %v3569 = vunpack.c.l.b16 %v3465
    %v3570 = vunpack.c.h.b16 %v3465
    %v3571 = vunpack.c.l.b16 %v3466
    %v3572 = vunpack.c.h.b16 %v3466
    %v3573 = vunpack.c.l.b16 %v3467
    %v3574 = vunpack.c.h.b16 %v3467
    %v3575 = vunpack.c.l.b16 %v3468
    %v3576 = vunpack.c.h.b16 %v3468
    %v3577 = vpack.c.b16 %v3515, %v3513
    %v3578 = vpack.c.b16 %v3516, %v3514
    %v3579 = vpack.c.b16 %v3519, %v3517
    %v3580 = vpack.c.b16 %v3520, %v3518
    %v3581 = vpack.c.b16 %v3523, %v3521
    %v3582 = vpack.c.b16 %v3524, %v3522
    %v3583 = vpack.c.b16 %v3527, %v3525
    %v3584 = vpack.c.b16 %v3528, %v3526
    %v3585 = vpack.c.b16 %v3531, %v3529
    %v3586 = vpack.c.b16 %v3532, %v3530
    %v3587 = vpack.c.b16 %v3535, %v3533
    %v3588 = vpack.c.b16 %v3536, %v3534
    %v3589 = vpack.c.b16 %v3539, %v3537
    %v3590 = vpack.c.b16 %v3540, %v3538
    %v3591 = vpack.c.b16 %v3543, %v3541
    %v3592 = vpack.c.b16 %v3544, %v3542
    %v3593 = vpack.c.b16 %v3547, %v3545
    %v3594 = vpack.c.b16 %v3548, %v3546
    %v3595 = vpack.c.b16 %v3551, %v3549
    %v3596 = vpack.c.b16 %v3552, %v3550
    %v3597 = vpack.c.b16 %v3555, %v3553
    %v3598 = vpack.c.b16 %v3556, %v3554
    %v3599 = vpack.c.b16 %v3559, %v3557
    %v3600 = vpack.c.b16 %v3560, %v3558
    %v3601 = vpack.c.b16 %v3563, %v3561
    %v3602 = vpack.c.b16 %v3564, %v3562
    %v3603 = vpack.c.b16 %v3567, %v3565
    %v3604 = vpack.c.b16 %v3568, %v3566
    %v3605 = vpack.c.b16 %v3571, %v3569
    %v3606 = vpack.c.b16 %v3572, %v3570
    %v3607 = vpack.c.b16 %v3575, %v3573
    %v3608 = vpack.c.b16 %v3576, %v3574
    %3641 = vmatprep.subr.bf16.mxu0 %v3578
    %3642 = vmatpush1.bf16.msra.mxu0 %v3577
    %3643 = vmatprep.subr.bf16.mxu0 %v3580
    %3644 = vmatpush1.bf16.msra.mxu0 %v3579
    %3645 = vmatprep.subr.bf16.mxu0 %v3582
    %3646 = vmatpush1.bf16.msra.mxu0 %v3581
    %3647 = vmatprep.subr.bf16.mxu0 %v3584
    %3648 = vmatpush1.bf16.msra.mxu0 %v3583
    %3649 = vmatprep.subr.bf16.mxu0 %v3586
    %3650 = vmatpush1.bf16.msra.mxu0 %v3585
    %3651 = vmatprep.subr.bf16.mxu0 %v3588
    %3652 = vmatpush1.bf16.msra.mxu0 %v3587
    %3653 = vmatprep.subr.bf16.mxu0 %v3590
    %3654 = vmatpush1.bf16.msra.mxu0 %v3589
    %3655 = vmatprep.subr.bf16.mxu0 %v3592
    %3656 = vmatpush1.bf16.msra.mxu0 %v3591
    %3657 = vmatprep.subr.bf16.mxu0 %v3594
    %3658 = vmatpush1.bf16.msra.mxu0 %v3593
    %3659 = vmatprep.subr.bf16.mxu0 %v3596
    %3660 = vmatpush1.bf16.msra.mxu0 %v3595
    %3661 = vmatprep.subr.bf16.mxu0 %v3598
    %3662 = vmatpush1.bf16.msra.mxu0 %v3597
    %3663 = vmatprep.subr.bf16.mxu0 %v3600
    %3664 = vmatpush1.bf16.msra.mxu0 %v3599
    %3665 = vmatprep.subr.bf16.mxu0 %v3602
    %3666 = vmatpush1.bf16.msra.mxu0 %v3601
    %3667 = vmatprep.subr.bf16.mxu0 %v3604
    %3668 = vmatpush1.bf16.msra.mxu0 %v3603
    %3669 = vmatprep.subr.bf16.mxu0 %v3606
    %3670 = vmatpush1.bf16.msra.mxu0 %v3605
    %3671 = vmatprep.subr.bf16.mxu0 %v3608
    %3672 = vmatpush1.bf16.msra.mxu0 %v3607
    %3673 = vmatprep.mubr.bf16.mxu0 %v3426
    %3674 = vmatmul.mubr.bf16.gmra.mrb[0].mxu0 %v3423
    %v3675 = vpop.f32.mrb[0].mxu0
    %v3676 = vadd.f32 %v3474, %v3675
    %v3677 = vpop.f32.mrb[0].mxu0
    %v3678 = vadd.f32 %v3478, %v3677
    %v3679 = vpop.f32.mrb[0].mxu0
    %v3680 = vadd.f32 %v3474, %v3679
    %v3681 = vpop.f32.mrb[0].mxu0
    %v3682 = vadd.f32 %v3478, %v3681
    %3683 = vmatprep.mubr.bf16.mxu0 %v3432
    %3684 = vmatmul.mubr.bf16.gmra.mrb[0].mxu0 %v3429
    %v3685 = vpop.f32.mrb[0].mxu0
    %v3686 = vadd.f32 %v3474, %v3685
    %v3687 = vpop.f32.mrb[0].mxu0
    %v3688 = vadd.f32 %v3478, %v3687
    %v3689 = vpop.f32.mrb[0].mxu0
    %v3690 = vadd.f32 %v3474, %v3689
    %v3691 = vpop.f32.mrb[0].mxu0
    %v3692 = vadd.f32 %v3478, %v3691
    %3693 = vdwg.mxu0
    %3694 = vst [vmem:[#allocation12] sm:$0xff] %v3676
    %3695 = vst [vmem:[#allocation12 + $0x8] sm:$0xff] %v3678
    %3696 = vst [vmem:[#allocation12 + $0x10] sm:$0xff] %v3680
    %3697 = vst [vmem:[#allocation12 + $0x18] sm:$0xff] %v3682
    %3698 = vst [vmem:[#allocation12 + $0x20] sm:$0xff] %v3686
    %3699 = vst [vmem:[#allocation12 + $0x28] sm:$0xff] %v3688
    %3700 = vst [vmem:[#allocation12 + $0x30] sm:$0xff] %v3690
    %3701 = vst [vmem:[#allocation12 + $0x38] sm:$0xff] %v3692
    // Predicated region
    $region50: #{tpu_custom_call.1} parent=1 // pred_check
      _
    $region51: #{tpu_custom_call.1} parent=1 // pred_check_branch
      %3703 = sbr.rel (0) target = $region53
    $region52: #{tpu_custom_call.1} parent=1 // pred_region
      %s3705 = ssub.s32 1024, 1024
      %3706 = vsyncadd [#allocation6], %s3705
      %s3707 = sshll.u32 [#allocation12], 4
      %s3708 = int_to_ptr.vmem [resolvable:$true] %s3707
      %3713 = dma.vmem_to_hbm [thread:$0]  %s3708, 1024, %s8, [#allocation6], 256, 256, 16
    $region53: #{tpu_custom_call.1} parent=1 // pred_fallthru
      _
    // Predicated region
    $region54: #{tpu_custom_call.1} parent=1 // pred_check
      _
    $region55: #{tpu_custom_call.1} parent=1 // pred_check_branch
      %3715 = sbr.rel (0) target = $region57
    $region56: #{tpu_custom_call.1} parent=1 // pred_region
      %3716 = dma.done [#allocation6], 1024
    $region57: #{tpu_custom_call.1} parent=1 // pred_fallthru
      _
    %3717 = vsyncpa [#allocation5], 1
    %3718 = vsyncpa [#allocation8], 1
    %3719 = vsyncpa [#allocation11], 1
    %3720 = vsyncpa [#allocation6], 1

</llo_original>
